<compile_context>
chip_gen: v7x
topology: tpu7x:2x2x1
jax: 0.10.0
libtpu: 0.0.40
codegen_flags: <defaults>
</compile_context>

<pallas_src>
import math
import jax
import jax.numpy as jnp
from jax.experimental import pallas as pl
from jax.experimental.pallas import tpu as pltpu

# ----------------------------- config (small, deterministic) -----------------
DIM = 128            # embedding dim (lane-dense: multiple of 128)
NUM_ENTITIES = 32
NUM_RELATIONS = 8
BATCH = 8
N_NEG = 8
REGULARIZER = 0.01
REL_MODEL = "distmult"   # normalize_embs stays False for distmult (matches torch behavior)
# TODO(synk): edge_features=True branch loads relation features from a .pt file; not applicable.


# ----------------------------- Pallas kernel ---------------------------------
def link_loss_kernel(pairs_ref, rels_ref, neg_ref,   # int32 index blocks (VMEM)
                     ent_ref, relw_ref,              # embedding tables (VMEM)
                     out_ref):                       # (1, 1) SMEM scalar loss
    """Fused one-hot gather + distmult score + margin loss + L2 regularization.

    pairs_ref : (B, 2)     positive (head, tail) entity ids
    rels_ref  : (B, 1)     relation ids
    neg_ref   : (B*N, 2)   negative (head, tail) entity ids (pre-translated in wrapper)
    ent_ref   : (E, D)     entity embedding table
    relw_ref  : (R, D)     relation embedding table
    """
    B, N, D = BATCH, N_NEG, DIM
    E, R = NUM_ENTITIES, NUM_RELATIONS
    f32 = jnp.float32
    hi = jax.lax.Precision.HIGHEST   # keep the one-hot selection bit-exact in f32

    pairs = pairs_ref[...]            # (B, 2)   int32
    rel_ids = rels_ref[...]           # (B, 1)   int32
    neg = neg_ref[...]                # (B*N, 2) int32
    ent = ent_ref[...]                # (E, D)   f32
    relw = relw_ref[...]              # (R, D)   f32

    # ---- positive gathers: (B,E)/(B,R) one-hots @ tables on the MXU ----
    ent_iota_b = jax.lax.broadcasted_iota(jnp.int32, (B, E), 1)
    heads = jnp.dot((pairs[:, 0:1] == ent_iota_b).astype(f32), ent,
                    preferred_element_type=f32, precision=hi)            # (B, D)
    tails = jnp.dot((pairs[:, 1:2] == ent_iota_b).astype(f32), ent,
                    preferred_element_type=f32, precision=hi)            # (B, D)
    rel_iota = jax.lax.broadcasted_iota(jnp.int32, (B, R), 1)
    rels = jnp.dot((rel_ids == rel_iota).astype(f32), relw,
                   preferred_element_type=f32, precision=hi)             # (B, D)

    # ---- negative gathers: (B*N, E) one-hots @ entity table ----
    ent_iota_bn = jax.lax.broadcasted_iota(jnp.int32, (B * N, E), 1)
    nh = jnp.dot((neg[:, 0:1] == ent_iota_bn).astype(f32), ent,
                 preferred_element_type=f32, precision=hi)               # (B*N, D)
    nt = jnp.dot((neg[:, 1:2] == ent_iota_bn).astype(f32), ent,
                 preferred_element_type=f32, precision=hi)               # (B*N, D)
    nh3 = nh.reshape(B, N, D)   # leading-dim split only -> layout-trivial
    nt3 = nt.reshape(B, N, D)

    # ---- distmult scores (VPU elementwise + XLU reductions) ----
    pos_scores = jnp.sum(heads * rels * tails, axis=-1, keepdims=True)   # (B, 1)
    neg_scores = jnp.sum((nh3 * nt3) * rels[:, None, :], axis=-1)        # (B, N)

    # margin loss: relu(1 - pos + neg).mean()   (mean folded into constant below)
    margin_sum = jnp.sum(jnp.maximum(1.0 - pos_scores + neg_scores, 0.0))

    # l2 regularization: (mean(h^2) + mean(t^2) + mean(r^2)) / 3
    reg_sum = jnp.sum(heads * heads) + jnp.sum(tails * tails) + jnp.sum(rels * rels)

    out_ref[0, 0] = (margin_sum * (1.0 / (B * N))
                     + reg_sum * (REGULARIZER / (3.0 * B * D)))


def link_prediction_loss(pairs_i32, rels_i32, neg_ent_i32, ent_emb, rel_emb):
    vmem = pltpu.MemorySpace.VMEM
    return pl.pallas_call(
        link_loss_kernel,
        out_shape=jax.ShapeDtypeStruct((1, 1), jnp.float32),
        in_specs=[
            pl.BlockSpec(memory_space=vmem),   # pos pairs (B, 2)
            pl.BlockSpec(memory_space=vmem),   # rel ids   (B, 1)
            pl.BlockSpec(memory_space=vmem),   # neg entity ids (B*N, 2)
            pl.BlockSpec(memory_space=vmem),   # ent_emb   (E, D)
            pl.BlockSpec(memory_space=vmem),   # rel_emb   (R, D)
        ],
        out_specs=pl.BlockSpec(memory_space=pltpu.MemorySpace.SMEM),   # (1,1) scalar loss
    )(pairs_i32, rels_i32, neg_ent_i32, ent_emb, rel_emb)


# ----------------------------- model wrapper (thin glue) ---------------------
def xavier_uniform(key, shape):
    fan_in, fan_out = shape[1], shape[0]
    bound = math.sqrt(6.0 / (fan_in + fan_out))
    return jax.random.uniform(key, shape, dtype=jnp.float32, minval=-bound, maxval=bound)


def forward(params, pos_pairs, rels, neg_idx):
    """Mirrors TransductiveLinkPrediction.forward.

    neg_idx addresses the flattened (2B, D) view of the *encoded* positives; for distmult
    encode() is a raw embedding lookup (normalize_embs=False), so translating neg_idx to
    entity ids here is exactly equivalent and lets the kernel gather straight from ent_emb.
    # TODO(synk): guard this shortcut if rel_model changes to one with normalize_embs=True.
    """
    B, N = neg_idx.shape[0], neg_idx.shape[1]
    neg_ent = pos_pairs.reshape(-1)[neg_idx.reshape(-1)].reshape(B * N, 2)
    return link_prediction_loss(pos_pairs.astype(jnp.int32),
                                rels.astype(jnp.int32),
                                neg_ent.astype(jnp.int32),
                                params["ent_emb"], params["rel_emb"])


def forward_reference(params, pos_pairs, rels, neg_idx):
    """Pure-JAX reference of the same forward pass (for correctness check)."""
    ent_emb, rel_emb = params["ent_emb"], params["rel_emb"]
    B = pos_pairs.shape[0]
    embs = ent_emb[pos_pairs]                       # (B, 2, D)
    r = rel_emb[rels[:, 0]]                         # (B, D)
    heads, tails = embs[:, 0, :], embs[:, 1, :]
    pos = jnp.sum(heads * r * tails, axis=-1)
    neg_embs = embs.reshape(B * 2, DIM)[neg_idx]    # (B, N, 2, D)
    nh, nt = neg_embs[:, :, 0, :], neg_embs[:, :, 1, :]
    neg = jnp.sum(nh * r[:, None, :] * nt, axis=-1)
    model_loss = jnp.mean(jnp.maximum(1.0 - pos[:, None] + neg, 0.0))
    reg = (jnp.mean(heads ** 2) + jnp.mean(tails ** 2) + jnp.mean(r ** 2)) / 3.0
    return model_loss + REGULARIZER * reg


# ----------------------------- main -------------------------------------------
if __name__ == "__main__":
    key = jax.random.PRNGKey(0)
    k_ent, k_rel, k_pairs, k_rels, k_neg = jax.random.split(key, 5)

    params = {
        "ent_emb": xavier_uniform(k_ent, (NUM_ENTITIES, DIM)),
        "rel_emb": xavier_uniform(k_rel, (NUM_RELATIONS, DIM)),
    }

    pos_pairs = jax.random.randint(k_pairs, (BATCH, 2), 0, NUM_ENTITIES, dtype=jnp.int32)
    rels = jax.random.randint(k_rels, (BATCH, 1), 0, NUM_RELATIONS, dtype=jnp.int32)
    neg_idx = jax.random.randint(k_neg, (BATCH, N_NEG, 2), 0, 2 * BATCH, dtype=jnp.int32)

    loss = jax.jit(forward)(params, pos_pairs, rels, neg_idx)   # single dispatch
    loss = jax.block_until_ready(loss)

    ref = forward_reference(params, pos_pairs, rels, neg_idx)
    assert jnp.allclose(loss[0, 0], ref, rtol=1e-4, atol=1e-4), (loss, ref)

    print("KERNEL_OK")
</pallas_src>

<mosaic_0001>
module attributes {stable_mosaic.version = 11 : i64} {
  func.func @link_loss_kernel(%arg0: memref<8x2xi32, #tpu.memory_space<vmem>>, %arg1: memref<8x1xi32, #tpu.memory_space<vmem>>, %arg2: memref<64x2xi32, #tpu.memory_space<vmem>>, %arg3: memref<32x128xf32, #tpu.memory_space<vmem>>, %arg4: memref<8x128xf32, #tpu.memory_space<vmem>>, %arg5: memref<1x1xf32, #tpu.memory_space<smem>>) attributes {dimension_semantics = [], scalar_prefetch = 0 : i64, scratch_operands = 0 : i64, tpu.core_type = #tpu.core_type<tc>} {
    %c0 = arith.constant 0 : index
    %c0_0 = arith.constant 0 : index
    %0 = vector.load %arg0[%c0, %c0_0] : memref<8x2xi32, #tpu.memory_space<vmem>>, vector<8x2xi32>
    %c0_1 = arith.constant 0 : index
    %c0_2 = arith.constant 0 : index
    %1 = vector.load %arg1[%c0_1, %c0_2] : memref<8x1xi32, #tpu.memory_space<vmem>>, vector<8x1xi32>
    %c0_3 = arith.constant 0 : index
    %c0_4 = arith.constant 0 : index
    %2 = vector.load %arg2[%c0_3, %c0_4] : memref<64x2xi32, #tpu.memory_space<vmem>>, vector<64x2xi32>
    %c0_5 = arith.constant 0 : index
    %c0_6 = arith.constant 0 : index
    %3 = vector.load %arg3[%c0_5, %c0_6] : memref<32x128xf32, #tpu.memory_space<vmem>>, vector<32x128xf32>
    %c0_7 = arith.constant 0 : index
    %c0_8 = arith.constant 0 : index
    %4 = vector.load %arg4[%c0_7, %c0_8] : memref<8x128xf32, #tpu.memory_space<vmem>>, vector<8x128xf32>
    %5 = tpu.iota {dimensions = array<i32: 1>} : vector<8x32xi32>
    %6 = vector.extract_strided_slice %0 {offsets = [0, 0], sizes = [8, 1], strides = [1, 1]} : vector<8x2xi32> to vector<8x1xi32>
    %7 = vector.broadcast %6 : vector<8x1xi32> to vector<8x32xi32>
    %8 = arith.cmpi eq, %7, %5 : vector<8x32xi32>
    %9 = arith.extui %8 : vector<8x32xi1> to vector<8x32xi32>
    %10 = arith.sitofp %9 : vector<8x32xi32> to vector<8x32xf32>
    %cst = arith.constant dense<0.000000e+00> : vector<8x128xf32>
    %11 = tpu.matmul %10, %3, %cst {dimension_numbers = #tpu.dot_dimension_numbers<[1], [0], [0], [1], [0, 0, 1, 1], [], []>, precision = #tpu.contract_precision<fp32>} : vector<8x32xf32>, vector<32x128xf32>, vector<8x128xf32> -> vector<8x128xf32>
    %12 = vector.extract_strided_slice %0 {offsets = [0, 1], sizes = [8, 1], strides = [1, 1]} : vector<8x2xi32> to vector<8x1xi32>
    %13 = vector.broadcast %12 : vector<8x1xi32> to vector<8x32xi32>
    %14 = arith.cmpi eq, %13, %5 : vector<8x32xi32>
    %15 = arith.extui %14 : vector<8x32xi1> to vector<8x32xi32>
    %16 = arith.sitofp %15 : vector<8x32xi32> to vector<8x32xf32>
    %cst_9 = arith.constant dense<0.000000e+00> : vector<8x128xf32>
    %17 = tpu.matmul %16, %3, %cst_9 {dimension_numbers = #tpu.dot_dimension_numbers<[1], [0], [0], [1], [0, 0, 1, 1], [], []>, precision = #tpu.contract_precision<fp32>} : vector<8x32xf32>, vector<32x128xf32>, vector<8x128xf32> -> vector<8x128xf32>
    %18 = tpu.iota {dimensions = array<i32: 1>} : vector<8x8xi32>
    %19 = vector.broadcast %1 : vector<8x1xi32> to vector<8x8xi32>
    %20 = arith.cmpi eq, %19, %18 : vector<8x8xi32>
    %21 = arith.extui %20 : vector<8x8xi1> to vector<8x8xi32>
    %22 = arith.sitofp %21 : vector<8x8xi32> to vector<8x8xf32>
    %cst_10 = arith.constant dense<0.000000e+00> : vector<8x128xf32>
    %23 = tpu.matmul %22, %4, %cst_10 {dimension_numbers = #tpu.dot_dimension_numbers<[1], [0], [0], [1], [0, 0, 1, 1], [], []>, precision = #tpu.contract_precision<fp32>} : vector<8x8xf32>, vector<8x128xf32>, vector<8x128xf32> -> vector<8x128xf32>
    %24 = tpu.iota {dimensions = array<i32: 1>} : vector<64x32xi32>
    %25 = vector.extract_strided_slice %2 {offsets = [0, 0], sizes = [64, 1], strides = [1, 1]} : vector<64x2xi32> to vector<64x1xi32>
    %26 = vector.broadcast %25 : vector<64x1xi32> to vector<64x32xi32>
    %27 = arith.cmpi eq, %26, %24 : vector<64x32xi32>
    %28 = arith.extui %27 : vector<64x32xi1> to vector<64x32xi32>
    %29 = arith.sitofp %28 : vector<64x32xi32> to vector<64x32xf32>
    %cst_11 = arith.constant dense<0.000000e+00> : vector<64x128xf32>
    %30 = tpu.matmul %29, %3, %cst_11 {dimension_numbers = #tpu.dot_dimension_numbers<[1], [0], [0], [1], [0, 0, 1, 1], [], []>, precision = #tpu.contract_precision<fp32>} : vector<64x32xf32>, vector<32x128xf32>, vector<64x128xf32> -> vector<64x128xf32>
    %31 = vector.extract_strided_slice %2 {offsets = [0, 1], sizes = [64, 1], strides = [1, 1]} : vector<64x2xi32> to vector<64x1xi32>
    %32 = vector.broadcast %31 : vector<64x1xi32> to vector<64x32xi32>
    %33 = arith.cmpi eq, %32, %24 : vector<64x32xi32>
    %34 = arith.extui %33 : vector<64x32xi1> to vector<64x32xi32>
    %35 = arith.sitofp %34 : vector<64x32xi32> to vector<64x32xf32>
    %cst_12 = arith.constant dense<0.000000e+00> : vector<64x128xf32>
    %36 = tpu.matmul %35, %3, %cst_12 {dimension_numbers = #tpu.dot_dimension_numbers<[1], [0], [0], [1], [0, 0, 1, 1], [], []>, precision = #tpu.contract_precision<fp32>} : vector<64x32xf32>, vector<32x128xf32>, vector<64x128xf32> -> vector<64x128xf32>
    %37 = vector.shape_cast %30 : vector<64x128xf32> to vector<8x8x128xf32>
    %38 = vector.shape_cast %36 : vector<64x128xf32> to vector<8x8x128xf32>
    %39 = arith.mulf %11, %23 : vector<8x128xf32>
    %40 = arith.mulf %39, %17 : vector<8x128xf32>
    %cst_13 = arith.constant dense<0.000000e+00> : vector<8xf32>
    %41 = vector.multi_reduction <add>, %40, %cst_13 [1] : vector<8x128xf32> to vector<8xf32>
    %42 = vector.shape_cast %41 : vector<8xf32> to vector<8x1xf32>
    %43 = arith.mulf %37, %38 : vector<8x8x128xf32>
    %44 = vector.shape_cast %23 : vector<8x128xf32> to vector<8x1x128xf32>
    %45 = vector.broadcast %44 : vector<8x1x128xf32> to vector<8x8x128xf32>
    %46 = arith.mulf %43, %45 : vector<8x8x128xf32>
    %cst_14 = arith.constant dense<0.000000e+00> : vector<8x8xf32>
    %47 = vector.multi_reduction <add>, %46, %cst_14 [2] : vector<8x8x128xf32> to vector<8x8xf32>
    %cst_15 = arith.constant 1.000000e+00 : f32
    %48 = vector.broadcast %cst_15 : f32 to vector<8x1xf32>
    %49 = arith.subf %48, %42 : vector<8x1xf32>
    %50 = vector.broadcast %49 : vector<8x1xf32> to vector<8x8xf32>
    %51 = arith.addf %50, %47 : vector<8x8xf32>
    %cst_16 = arith.constant 0.000000e+00 : f32
    %52 = vector.broadcast %cst_16 : f32 to vector<8x8xf32>
    %53 = arith.maximumf %51, %52 : vector<8x8xf32>
    %54 = vector.shape_cast %53 : vector<8x8xf32> to vector<1x8x8xf32>
    %cst_17 = arith.constant dense<0.000000e+00> : vector<1xf32>
    %55 = vector.multi_reduction <add>, %54, %cst_17 [1, 2] : vector<1x8x8xf32> to vector<1xf32>
    %56 = vector.shape_cast %55 : vector<1xf32> to vector<1x1x1xf32>
    %57 = vector.extract %56[0, 0, 0] : f32 from vector<1x1x1xf32>
    %58 = arith.mulf %11, %11 : vector<8x128xf32>
    %59 = vector.shape_cast %58 : vector<8x128xf32> to vector<1x8x128xf32>
    %cst_18 = arith.constant dense<0.000000e+00> : vector<1xf32>
    %60 = vector.multi_reduction <add>, %59, %cst_18 [1, 2] : vector<1x8x128xf32> to vector<1xf32>
    %61 = vector.shape_cast %60 : vector<1xf32> to vector<1x1x1xf32>
    %62 = vector.extract %61[0, 0, 0] : f32 from vector<1x1x1xf32>
    %63 = arith.mulf %17, %17 : vector<8x128xf32>
    %64 = vector.shape_cast %63 : vector<8x128xf32> to vector<1x8x128xf32>
    %cst_19 = arith.constant dense<0.000000e+00> : vector<1xf32>
    %65 = vector.multi_reduction <add>, %64, %cst_19 [1, 2] : vector<1x8x128xf32> to vector<1xf32>
    %66 = vector.shape_cast %65 : vector<1xf32> to vector<1x1x1xf32>
    %67 = vector.extract %66[0, 0, 0] : f32 from vector<1x1x1xf32>
    %68 = arith.addf %62, %67 : f32
    %69 = arith.mulf %23, %23 : vector<8x128xf32>
    %70 = vector.shape_cast %69 : vector<8x128xf32> to vector<1x8x128xf32>
    %cst_20 = arith.constant dense<0.000000e+00> : vector<1xf32>
    %71 = vector.multi_reduction <add>, %70, %cst_20 [1, 2] : vector<1x8x128xf32> to vector<1xf32>
    %72 = vector.shape_cast %71 : vector<1xf32> to vector<1x1x1xf32>
    %73 = vector.extract %72[0, 0, 0] : f32 from vector<1x1x1xf32>
    %74 = arith.addf %68, %73 : f32
    %cst_21 = arith.constant 1.562500e-02 : f32
    %75 = arith.mulf %57, %cst_21 : f32
    %cst_22 = arith.constant 3.25520841E-6 : f32
    %76 = arith.mulf %74, %cst_22 : f32
    %77 = arith.addf %75, %76 : f32
    %c0_23 = arith.constant 0 : index
    %c0_24 = arith.constant 0 : index
    %78 = memref.load %arg5[%c0_23, %c0_24] : memref<1x1xf32, #tpu.memory_space<smem>>
    memref.store %77, %arg5[%c0_23, %c0_24] : memref<1x1xf32, #tpu.memory_space<smem>>
    return
  }
}

</mosaic_0001>

<llo_original>
// kernel: forward.1
$region0: #{forward.1}
  #allocation0 [shape = 'u32[]', space=smem, size = 0x4, offset = 0x4, fixed_abs, tag = 'smem constant byte address 0x4 - core index']
  #allocation1 [shape = 'u32[144,128]{1,0:T(1,128)}', space=vmem, size = 0x12000, scoped, tag = 'internal scratch']
  %s0 = inlined_call_operand.vmem [shape: s32[8,2], index: 0, kind: input, shape index: {}]
  %s1 = inlined_call_operand.vmem [shape: s32[8,1], index: 1, kind: input, shape index: {}]
  %s2 = inlined_call_operand.vmem [shape: s32[64,2], index: 2, kind: input, shape index: {}]
  %s3 = inlined_call_operand.vmem [shape: f32[32,128], index: 3, kind: input, shape index: {}]
  %s4 = inlined_call_operand.vmem [shape: f32[8,128], index: 4, kind: input, shape index: {}]
  %s5 = inlined_call_operand.hbm [shape: f32[1,1], index: 5, kind: output, shape index: {}]
  %s6 = sld [smem:[#allocation0]]
  $region30: #{forward.1} parent=0
    _
  %s8 = ssub.s32 1, %s6
  %s9 = scalar_select 0, %s8, %s6
  $region1: #{forward.1} parent=0
    #allocation2 [shape = 'u8[512]{0}', space=smem, size = 0x200, scoped, tag = 'output window, operand 0, single buffered']
    #allocation3 [shape = 's32[1]{0}', space=sflag, size = 0x4, scoped, tag = 'scoped memory for forward.1']
    %10 = vsyncpa [#allocation3], 0
    // Predicated region
    $region2: #{forward.1} parent=1 // pred_check
      _
    $region3: #{forward.1} parent=1 // pred_check_branch
      %12 = sbr.rel (0) target = $region5
    $region4: #{forward.1} parent=1 // pred_region
      _
    $region5: #{forward.1} parent=1 // pred_fallthru
      _
    // Predicated region
    $region6: #{forward.1} parent=1 // pred_check
      _
    $region7: #{forward.1} parent=1 // pred_check_branch
      %14 = sbr.rel (0) target = $region9
    $region8: #{forward.1} parent=1 // pred_region
      _
    $region9: #{forward.1} parent=1 // pred_fallthru
      _
    // Predicated region
    $region10: #{forward.1} parent=1 // pred_check
      _
    $region11: #{forward.1} parent=1 // pred_check_branch
      %16 = sbr.rel (0) target = $region13
    $region12: #{forward.1} parent=1 // pred_region
      _
    $region13: #{forward.1} parent=1 // pred_fallthru
      _
    // Predicated region
    $region14: #{forward.1} parent=1 // pred_check
      _
    $region15: #{forward.1} parent=1 // pred_check_branch
      %18 = sbr.rel (0) target = $region17
    $region16: #{forward.1} parent=1 // pred_region
      _
    $region17: #{forward.1} parent=1 // pred_fallthru
      _
    // Predicated region
    $region18: #{forward.1} parent=1 // pred_check
      _
    $region19: #{forward.1} parent=1 // pred_check_branch
      %20 = sbr.rel (0) target = $region21
    $region20: #{forward.1} parent=1 // pred_region
      _
    $region21: #{forward.1} parent=1 // pred_fallthru
      _
    %v21 = vld [vmem:[%s0] sm:$0xff]
    %v22 = vld [vmem:[%s1] sm:$0xff]
    %v23 = vld [vmem:[%s2] sm:$0xff]
    %v24 = vld [vmem:[%s2 + $0x8] sm:$0xff]
    %v25 = vld [vmem:[%s2 + $0x10] sm:$0xff]
    %v26 = vld [vmem:[%s2 + $0x18] sm:$0xff]
    %v27 = vld [vmem:[%s2 + $0x20] sm:$0xff]
    %v28 = vld [vmem:[%s2 + $0x28] sm:$0xff]
    %v29 = vld [vmem:[%s2 + $0x30] sm:$0xff]
    %v30 = vld [vmem:[%s2 + $0x38] sm:$0xff]
    %v31 = vld [vmem:[%s3] sm:$0xff]
    %v32 = vld [vmem:[%s3 + $0x8] sm:$0xff]
    %v33 = vld [vmem:[%s3 + $0x10] sm:$0xff]
    %v34 = vld [vmem:[%s3 + $0x18] sm:$0xff]
    %v35 = vld [vmem:[%s4] sm:$0xff]
    %v36 = vlaneseq
    %v37 = vand.u32 %v36, 127
    %38 = vset.pattern.permute.xlu0 0
    %39 = vperm.xlu0 %38, %v21
    %v40 = vpop.permute.xlu0 %39
    %vm41 = vcmp.eq.s32.totalorder %v40, %v37
    %v42 = vsel %vm41, 1, 0
    %v43 = vcvt.s32.f32 %v42
    %vm44 = vcmask 261120
    %v46 = vsel %vm44, %v43, 0
    %48 = vmatprep.subr.mxu0 0.0
    %v49 = vand.u32 %v31, 4294901760
    %50 = vmatpush1.msra.mxu0 %v49
    %51 = vmatprep.subr.mxu0 0.0
    %v52 = vand.u32 %v32, 4294901760
    %53 = vmatpush1.msra.mxu0 %v52
    %54 = vmatprep.subr.mxu0 0.0
    %v55 = vand.u32 %v33, 4294901760
    %56 = vmatpush1.msra.mxu0 %v55
    %57 = vmatprep.subr.mxu0 0.0
    %v58 = vand.u32 %v34, 4294901760
    %59 = vmatpush1.msra.mxu0 %v58
    %60 = vmatprep.subr.mxu0 0.0
    %61 = vmatpush1.msra.mxu0 0.0
    %62 = vmatprep.subr.mxu0 0.0
    %63 = vmatpush1.msra.mxu0 0.0
    %64 = vmatprep.subr.mxu0 0.0
    %65 = vmatpush1.msra.mxu0 0.0
    %66 = vmatprep.subr.mxu0 0.0
    %67 = vmatpush1.msra.mxu0 0.0
    %68 = vmatprep.subr.mxu0 0.0
    %69 = vmatpush1.msra.mxu0 0.0
    %70 = vmatprep.subr.mxu0 0.0
    %71 = vmatpush1.msra.mxu0 0.0
    %72 = vmatprep.subr.mxu0 0.0
    %73 = vmatpush1.msra.mxu0 0.0
    %74 = vmatprep.subr.mxu0 0.0
    %75 = vmatpush1.msra.mxu0 0.0
    %76 = vmatprep.subr.mxu0 0.0
    %77 = vmatpush1.msra.mxu0 0.0
    %78 = vmatprep.subr.mxu0 0.0
    %79 = vmatpush1.msra.mxu0 0.0
    %80 = vmatprep.subr.mxu0 0.0
    %81 = vmatpush1.msra.mxu0 0.0
    %82 = vmatprep.subr.mxu0 0.0
    %83 = vmatpush1.msra.mxu0 0.0
    %84 = vmatprep.subr.mxu0 0.0
    %85 = vmatpush1.msra.mxu0 0.0
    %86 = vmatprep.subr.mxu0 0.0
    %87 = vmatpush1.msra.mxu0 0.0
    %88 = vmatprep.subr.mxu0 0.0
    %89 = vmatpush1.msra.mxu0 0.0
    %90 = vmatprep.subr.mxu0 0.0
    %91 = vmatpush1.msra.mxu0 0.0
    %92 = vmatprep.subr.mxu0 0.0
    %93 = vmatpush1.msra.mxu0 0.0
    %94 = vmatprep.subr.mxu0 0.0
    %95 = vmatpush1.msra.mxu0 0.0
    %96 = vmatprep.subr.mxu0 0.0
    %97 = vmatpush1.msra.mxu0 0.0
    %98 = vmatprep.subr.mxu0 0.0
    %99 = vmatpush1.msra.mxu0 0.0
    %100 = vmatprep.subr.mxu0 0.0
    %101 = vmatpush1.msra.mxu0 0.0
    %102 = vmatprep.subr.mxu0 0.0
    %103 = vmatpush1.msra.mxu0 0.0
    %104 = vmatprep.subr.mxu0 0.0
    %105 = vmatpush1.msra.mxu0 0.0
    %106 = vmatprep.subr.mxu0 0.0
    %107 = vmatpush1.msra.mxu0 0.0
    %108 = vmatprep.subr.mxu0 0.0
    %109 = vmatpush1.msra.mxu0 0.0
    %110 = vmatprep.subr.mxu0 0.0
    %111 = vmatpush1.msra.mxu0 0.0
    %112 = vmatprep.subr.mxu0 0.0
    %113 = vmatpush1.msra.mxu0 0.0
    %114 = vmatprep.subr.mxu0 0.0
    %115 = vmatpush1.msra.mxu0 0.0
    %116 = vmatprep.mubr.f32.mxu0 0.0
    %v117 = vand.u32 %v46, 4294901760
    %v118 = vsub.f32 %v46, %v117
    %v119 = vand.u32 %v118, 4294901760
    %v120 = vsub.f32 %v118, %v119
    %v121 = vand.u32 %v120, 4294901760
    %122 = vmatmul.mubr.f32.gmra.mrb[0].mxu0 %v121
    %v123 = vpop.f32.mrb[0].mxu0
    %v124 = vadd.f32 0.0, %v123
    %v125 = vpop.f32.mrb[0].mxu0
    %126 = vdwg.mxu0
    %127 = vmatprep.subr.mxu0 0.0
    %v128 = vand.u32 %v31, 4294901760
    %v129 = vsub.f32 %v31, %v128
    %v130 = vand.u32 %v129, 4294901760
    %v131 = vsub.f32 %v129, %v130
    %v132 = vand.u32 %v131, 4294901760
    %133 = vmatpush1.msra.mxu0 %v132
    %134 = vmatprep.subr.mxu0 0.0
    %v135 = vand.u32 %v32, 4294901760
    %v136 = vsub.f32 %v32, %v135
    %v137 = vand.u32 %v136, 4294901760
    %v138 = vsub.f32 %v136, %v137
    %v139 = vand.u32 %v138, 4294901760
    %140 = vmatpush1.msra.mxu0 %v139
    %141 = vmatprep.subr.mxu0 0.0
    %v142 = vand.u32 %v33, 4294901760
    %v143 = vsub.f32 %v33, %v142
    %v144 = vand.u32 %v143, 4294901760
    %v145 = vsub.f32 %v143, %v144
    %v146 = vand.u32 %v145, 4294901760
    %147 = vmatpush1.msra.mxu0 %v146
    %148 = vmatprep.subr.mxu0 0.0
    %v149 = vand.u32 %v34, 4294901760
    %v150 = vsub.f32 %v34, %v149
    %v151 = vand.u32 %v150, 4294901760
    %v152 = vsub.f32 %v150, %v151
    %v153 = vand.u32 %v152, 4294901760
    %154 = vmatpush1.msra.mxu0 %v153
    %155 = vmatprep.subr.mxu0 0.0
    %156 = vmatpush1.msra.mxu0 0.0
    %157 = vmatprep.subr.mxu0 0.0
    %158 = vmatpush1.msra.mxu0 0.0
    %159 = vmatprep.subr.mxu0 0.0
    %160 = vmatpush1.msra.mxu0 0.0
    %161 = vmatprep.subr.mxu0 0.0
    %162 = vmatpush1.msra.mxu0 0.0
    %163 = vmatprep.subr.mxu0 0.0
    %164 = vmatpush1.msra.mxu0 0.0
    %165 = vmatprep.subr.mxu0 0.0
    %166 = vmatpush1.msra.mxu0 0.0
    %167 = vmatprep.subr.mxu0 0.0
    %168 = vmatpush1.msra.mxu0 0.0
    %169 = vmatprep.subr.mxu0 0.0
    %170 = vmatpush1.msra.mxu0 0.0
    %171 = vmatprep.subr.mxu0 0.0
    %172 = vmatpush1.msra.mxu0 0.0
    %173 = vmatprep.subr.mxu0 0.0
    %174 = vmatpush1.msra.mxu0 0.0
    %175 = vmatprep.subr.mxu0 0.0
    %176 = vmatpush1.msra.mxu0 0.0
    %177 = vmatprep.subr.mxu0 0.0
    %178 = vmatpush1.msra.mxu0 0.0
    %179 = vmatprep.subr.mxu0 0.0
    %180 = vmatpush1.msra.mxu0 0.0
    %181 = vmatprep.subr.mxu0 0.0
    %182 = vmatpush1.msra.mxu0 0.0
    %183 = vmatprep.subr.mxu0 0.0
    %184 = vmatpush1.msra.mxu0 0.0
    %185 = vmatprep.subr.mxu0 0.0
    %186 = vmatpush1.msra.mxu0 0.0
    %187 = vmatprep.subr.mxu0 0.0
    %188 = vmatpush1.msra.mxu0 0.0
    %189 = vmatprep.subr.mxu0 0.0
    %190 = vmatpush1.msra.mxu0 0.0
    %191 = vmatprep.subr.mxu0 0.0
    %192 = vmatpush1.msra.mxu0 0.0
    %193 = vmatprep.subr.mxu0 0.0
    %194 = vmatpush1.msra.mxu0 0.0
    %195 = vmatprep.subr.mxu0 0.0
    %196 = vmatpush1.msra.mxu0 0.0
    %197 = vmatprep.subr.mxu0 0.0
    %198 = vmatpush1.msra.mxu0 0.0
    %199 = vmatprep.subr.mxu0 0.0
    %200 = vmatpush1.msra.mxu0 0.0
    %201 = vmatprep.subr.mxu0 0.0
    %202 = vmatpush1.msra.mxu0 0.0
    %203 = vmatprep.subr.mxu0 0.0
    %204 = vmatpush1.msra.mxu0 0.0
    %205 = vmatprep.subr.mxu0 0.0
    %206 = vmatpush1.msra.mxu0 0.0
    %207 = vmatprep.subr.mxu0 0.0
    %208 = vmatpush1.msra.mxu0 0.0
    %209 = vmatprep.subr.mxu0 0.0
    %210 = vmatpush1.msra.mxu0 0.0
    %211 = vmatprep.mubr.f32.mxu0 0.0
    %v212 = vand.u32 %v46, 4294901760
    %213 = vmatmul.mubr.f32.gmra.mrb[0].mxu0 %v212
    %v214 = vpop.f32.mrb[0].mxu0
    %v215 = vadd.f32 %v124, %v214
    %v216 = vpop.f32.mrb[0].mxu0
    %217 = vdwg.mxu0
    %218 = vmatprep.subr.mxu0 0.0
    %v219 = vand.u32 %v31, 4294901760
    %v220 = vsub.f32 %v31, %v219
    %221 = vmatpush1.msra.mxu0 %v220
    %222 = vmatprep.subr.mxu0 0.0
    %v223 = vand.u32 %v32, 4294901760
    %v224 = vsub.f32 %v32, %v223
    %225 = vmatpush1.msra.mxu0 %v224
    %226 = vmatprep.subr.mxu0 0.0
    %v227 = vand.u32 %v33, 4294901760
    %v228 = vsub.f32 %v33, %v227
    %229 = vmatpush1.msra.mxu0 %v228
    %230 = vmatprep.subr.mxu0 0.0
    %v231 = vand.u32 %v34, 4294901760
    %v232 = vsub.f32 %v34, %v231
    %233 = vmatpush1.msra.mxu0 %v232
    %234 = vmatprep.subr.mxu0 0.0
    %235 = vmatpush1.msra.mxu0 0.0
    %236 = vmatprep.subr.mxu0 0.0
    %237 = vmatpush1.msra.mxu0 0.0
    %238 = vmatprep.subr.mxu0 0.0
    %239 = vmatpush1.msra.mxu0 0.0
    %240 = vmatprep.subr.mxu0 0.0
    %241 = vmatpush1.msra.mxu0 0.0
    %242 = vmatprep.subr.mxu0 0.0
    %243 = vmatpush1.msra.mxu0 0.0
    %244 = vmatprep.subr.mxu0 0.0
    %245 = vmatpush1.msra.mxu0 0.0
    %246 = vmatprep.subr.mxu0 0.0
    %247 = vmatpush1.msra.mxu0 0.0
    %248 = vmatprep.subr.mxu0 0.0
    %249 = vmatpush1.msra.mxu0 0.0
    %250 = vmatprep.subr.mxu0 0.0
    %251 = vmatpush1.msra.mxu0 0.0
    %252 = vmatprep.subr.mxu0 0.0
    %253 = vmatpush1.msra.mxu0 0.0
    %254 = vmatprep.subr.mxu0 0.0
    %255 = vmatpush1.msra.mxu0 0.0
    %256 = vmatprep.subr.mxu0 0.0
    %257 = vmatpush1.msra.mxu0 0.0
    %258 = vmatprep.subr.mxu0 0.0
    %259 = vmatpush1.msra.mxu0 0.0
    %260 = vmatprep.subr.mxu0 0.0
    %261 = vmatpush1.msra.mxu0 0.0
    %262 = vmatprep.subr.mxu0 0.0
    %263 = vmatpush1.msra.mxu0 0.0
    %264 = vmatprep.subr.mxu0 0.0
    %265 = vmatpush1.msra.mxu0 0.0
    %266 = vmatprep.subr.mxu0 0.0
    %267 = vmatpush1.msra.mxu0 0.0
    %268 = vmatprep.subr.mxu0 0.0
    %269 = vmatpush1.msra.mxu0 0.0
    %270 = vmatprep.subr.mxu0 0.0
    %271 = vmatpush1.msra.mxu0 0.0
    %272 = vmatprep.subr.mxu0 0.0
    %273 = vmatpush1.msra.mxu0 0.0
    %274 = vmatprep.subr.mxu0 0.0
    %275 = vmatpush1.msra.mxu0 0.0
    %276 = vmatprep.subr.mxu0 0.0
    %277 = vmatpush1.msra.mxu0 0.0
    %278 = vmatprep.subr.mxu0 0.0
    %279 = vmatpush1.msra.mxu0 0.0
    %280 = vmatprep.subr.mxu0 0.0
    %281 = vmatpush1.msra.mxu0 0.0
    %282 = vmatprep.subr.mxu0 0.0
    %283 = vmatpush1.msra.mxu0 0.0
    %284 = vmatprep.subr.mxu0 0.0
    %285 = vmatpush1.msra.mxu0 0.0
    %286 = vmatprep.subr.mxu0 0.0
    %287 = vmatpush1.msra.mxu0 0.0
    %288 = vmatprep.subr.mxu0 0.0
    %289 = vmatpush1.msra.mxu0 0.0
    %290 = vmatprep.mubr.f32.mxu0 0.0
    %v291 = vand.u32 %v46, 4294901760
    %v292 = vsub.f32 %v46, %v291
    %293 = vmatmul.mubr.f32.gmra.mrb[0].mxu0 %v292
    %v294 = vpop.f32.mrb[0].mxu0
    %v295 = vadd.f32 %v215, %v294
    %v296 = vpop.f32.mrb[0].mxu0
    %297 = vdwg.mxu0
    %298 = vmatprep.subr.mxu0 0.0
    %v299 = vand.u32 %v31, 4294901760
    %300 = vmatpush1.msra.mxu0 %v299
    %301 = vmatprep.subr.mxu0 0.0
    %v302 = vand.u32 %v32, 4294901760
    %303 = vmatpush1.msra.mxu0 %v302
    %304 = vmatprep.subr.mxu0 0.0
    %v305 = vand.u32 %v33, 4294901760
    %306 = vmatpush1.msra.mxu0 %v305
    %307 = vmatprep.subr.mxu0 0.0
    %v308 = vand.u32 %v34, 4294901760
    %309 = vmatpush1.msra.mxu0 %v308
    %310 = vmatprep.subr.mxu0 0.0
    %311 = vmatpush1.msra.mxu0 0.0
    %312 = vmatprep.subr.mxu0 0.0
    %313 = vmatpush1.msra.mxu0 0.0
    %314 = vmatprep.subr.mxu0 0.0
    %315 = vmatpush1.msra.mxu0 0.0
    %316 = vmatprep.subr.mxu0 0.0
    %317 = vmatpush1.msra.mxu0 0.0
    %318 = vmatprep.subr.mxu0 0.0
    %319 = vmatpush1.msra.mxu0 0.0
    %320 = vmatprep.subr.mxu0 0.0
    %321 = vmatpush1.msra.mxu0 0.0
    %322 = vmatprep.subr.mxu0 0.0
    %323 = vmatpush1.msra.mxu0 0.0
    %324 = vmatprep.subr.mxu0 0.0
    %325 = vmatpush1.msra.mxu0 0.0
    %326 = vmatprep.subr.mxu0 0.0
    %327 = vmatpush1.msra.mxu0 0.0
    %328 = vmatprep.subr.mxu0 0.0
    %329 = vmatpush1.msra.mxu0 0.0
    %330 = vmatprep.subr.mxu0 0.0
    %331 = vmatpush1.msra.mxu0 0.0
    %332 = vmatprep.subr.mxu0 0.0
    %333 = vmatpush1.msra.mxu0 0.0
    %334 = vmatprep.subr.mxu0 0.0
    %335 = vmatpush1.msra.mxu0 0.0
    %336 = vmatprep.subr.mxu0 0.0
    %337 = vmatpush1.msra.mxu0 0.0
    %338 = vmatprep.subr.mxu0 0.0
    %339 = vmatpush1.msra.mxu0 0.0
    %340 = vmatprep.subr.mxu0 0.0
    %341 = vmatpush1.msra.mxu0 0.0
    %342 = vmatprep.subr.mxu0 0.0
    %343 = vmatpush1.msra.mxu0 0.0
    %344 = vmatprep.subr.mxu0 0.0
    %345 = vmatpush1.msra.mxu0 0.0
    %346 = vmatprep.subr.mxu0 0.0
    %347 = vmatpush1.msra.mxu0 0.0
    %348 = vmatprep.subr.mxu0 0.0
    %349 = vmatpush1.msra.mxu0 0.0
    %350 = vmatprep.subr.mxu0 0.0
    %351 = vmatpush1.msra.mxu0 0.0
    %352 = vmatprep.subr.mxu0 0.0
    %353 = vmatpush1.msra.mxu0 0.0
    %354 = vmatprep.subr.mxu0 0.0
    %355 = vmatpush1.msra.mxu0 0.0
    %356 = vmatprep.subr.mxu0 0.0
    %357 = vmatpush1.msra.mxu0 0.0
    %358 = vmatprep.subr.mxu0 0.0
    %359 = vmatpush1.msra.mxu0 0.0
    %360 = vmatprep.subr.mxu0 0.0
    %361 = vmatpush1.msra.mxu0 0.0
    %362 = vmatprep.subr.mxu0 0.0
    %363 = vmatpush1.msra.mxu0 0.0
    %364 = vmatprep.subr.mxu0 0.0
    %365 = vmatpush1.msra.mxu0 0.0
    %366 = vmatprep.mubr.f32.mxu0 0.0
    %v367 = vand.u32 %v46, 4294901760
    %v368 = vsub.f32 %v46, %v367
    %v369 = vand.u32 %v368, 4294901760
    %370 = vmatmul.mubr.f32.gmra.mrb[0].mxu0 %v369
    %v371 = vpop.f32.mrb[0].mxu0
    %v372 = vadd.f32 %v295, %v371
    %v373 = vpop.f32.mrb[0].mxu0
    %374 = vdwg.mxu0
    %375 = vmatprep.subr.mxu0 0.0
    %v376 = vand.u32 %v31, 4294901760
    %v377 = vsub.f32 %v31, %v376
    %v378 = vand.u32 %v377, 4294901760
    %379 = vmatpush1.msra.mxu0 %v378
    %380 = vmatprep.subr.mxu0 0.0
    %v381 = vand.u32 %v32, 4294901760
    %v382 = vsub.f32 %v32, %v381
    %v383 = vand.u32 %v382, 4294901760
    %384 = vmatpush1.msra.mxu0 %v383
    %385 = vmatprep.subr.mxu0 0.0
    %v386 = vand.u32 %v33, 4294901760
    %v387 = vsub.f32 %v33, %v386
    %v388 = vand.u32 %v387, 4294901760
    %389 = vmatpush1.msra.mxu0 %v388
    %390 = vmatprep.subr.mxu0 0.0
    %v391 = vand.u32 %v34, 4294901760
    %v392 = vsub.f32 %v34, %v391
    %v393 = vand.u32 %v392, 4294901760
    %394 = vmatpush1.msra.mxu0 %v393
    %395 = vmatprep.subr.mxu0 0.0
    %396 = vmatpush1.msra.mxu0 0.0
    %397 = vmatprep.subr.mxu0 0.0
    %398 = vmatpush1.msra.mxu0 0.0
    %399 = vmatprep.subr.mxu0 0.0
    %400 = vmatpush1.msra.mxu0 0.0
    %401 = vmatprep.subr.mxu0 0.0
    %402 = vmatpush1.msra.mxu0 0.0
    %403 = vmatprep.subr.mxu0 0.0
    %404 = vmatpush1.msra.mxu0 0.0
    %405 = vmatprep.subr.mxu0 0.0
    %406 = vmatpush1.msra.mxu0 0.0
    %407 = vmatprep.subr.mxu0 0.0
    %408 = vmatpush1.msra.mxu0 0.0
    %409 = vmatprep.subr.mxu0 0.0
    %410 = vmatpush1.msra.mxu0 0.0
    %411 = vmatprep.subr.mxu0 0.0
    %412 = vmatpush1.msra.mxu0 0.0
    %413 = vmatprep.subr.mxu0 0.0
    %414 = vmatpush1.msra.mxu0 0.0
    %415 = vmatprep.subr.mxu0 0.0
    %416 = vmatpush1.msra.mxu0 0.0
    %417 = vmatprep.subr.mxu0 0.0
    %418 = vmatpush1.msra.mxu0 0.0
    %419 = vmatprep.subr.mxu0 0.0
    %420 = vmatpush1.msra.mxu0 0.0
    %421 = vmatprep.subr.mxu0 0.0
    %422 = vmatpush1.msra.mxu0 0.0
    %423 = vmatprep.subr.mxu0 0.0
    %424 = vmatpush1.msra.mxu0 0.0
    %425 = vmatprep.subr.mxu0 0.0
    %426 = vmatpush1.msra.mxu0 0.0
    %427 = vmatprep.subr.mxu0 0.0
    %428 = vmatpush1.msra.mxu0 0.0
    %429 = vmatprep.subr.mxu0 0.0
    %430 = vmatpush1.msra.mxu0 0.0
    %431 = vmatprep.subr.mxu0 0.0
    %432 = vmatpush1.msra.mxu0 0.0
    %433 = vmatprep.subr.mxu0 0.0
    %434 = vmatpush1.msra.mxu0 0.0
    %435 = vmatprep.subr.mxu0 0.0
    %436 = vmatpush1.msra.mxu0 0.0
    %437 = vmatprep.subr.mxu0 0.0
    %438 = vmatpush1.msra.mxu0 0.0
    %439 = vmatprep.subr.mxu0 0.0
    %440 = vmatpush1.msra.mxu0 0.0
    %441 = vmatprep.subr.mxu0 0.0
    %442 = vmatpush1.msra.mxu0 0.0
    %443 = vmatprep.subr.mxu0 0.0
    %444 = vmatpush1.msra.mxu0 0.0
    %445 = vmatprep.subr.mxu0 0.0
    %446 = vmatpush1.msra.mxu0 0.0
    %447 = vmatprep.subr.mxu0 0.0
    %448 = vmatpush1.msra.mxu0 0.0
    %449 = vmatprep.subr.mxu0 0.0
    %450 = vmatpush1.msra.mxu0 0.0
    %451 = vmatprep.mubr.f32.mxu0 0.0
    %v452 = vand.u32 %v46, 4294901760
    %453 = vmatmul.mubr.f32.gmra.mrb[0].mxu0 %v452
    %v454 = vpop.f32.mrb[0].mxu0
    %v455 = vadd.f32 %v372, %v454
    %v456 = vpop.f32.mrb[0].mxu0
    %457 = vdwg.mxu0
    %458 = vmatprep.subr.mxu0 0.0
    %v459 = vand.u32 %v31, 4294901760
    %460 = vmatpush1.msra.mxu0 %v459
    %461 = vmatprep.subr.mxu0 0.0
    %v462 = vand.u32 %v32, 4294901760
    %463 = vmatpush1.msra.mxu0 %v462
    %464 = vmatprep.subr.mxu0 0.0
    %v465 = vand.u32 %v33, 4294901760
    %466 = vmatpush1.msra.mxu0 %v465
    %467 = vmatprep.subr.mxu0 0.0
    %v468 = vand.u32 %v34, 4294901760
    %469 = vmatpush1.msra.mxu0 %v468
    %470 = vmatprep.subr.mxu0 0.0
    %471 = vmatpush1.msra.mxu0 0.0
    %472 = vmatprep.subr.mxu0 0.0
    %473 = vmatpush1.msra.mxu0 0.0
    %474 = vmatprep.subr.mxu0 0.0
    %475 = vmatpush1.msra.mxu0 0.0
    %476 = vmatprep.subr.mxu0 0.0
    %477 = vmatpush1.msra.mxu0 0.0
    %478 = vmatprep.subr.mxu0 0.0
    %479 = vmatpush1.msra.mxu0 0.0
    %480 = vmatprep.subr.mxu0 0.0
    %481 = vmatpush1.msra.mxu0 0.0
    %482 = vmatprep.subr.mxu0 0.0
    %483 = vmatpush1.msra.mxu0 0.0
    %484 = vmatprep.subr.mxu0 0.0
    %485 = vmatpush1.msra.mxu0 0.0
    %486 = vmatprep.subr.mxu0 0.0
    %487 = vmatpush1.msra.mxu0 0.0
    %488 = vmatprep.subr.mxu0 0.0
    %489 = vmatpush1.msra.mxu0 0.0
    %490 = vmatprep.subr.mxu0 0.0
    %491 = vmatpush1.msra.mxu0 0.0
    %492 = vmatprep.subr.mxu0 0.0
    %493 = vmatpush1.msra.mxu0 0.0
    %494 = vmatprep.subr.mxu0 0.0
    %495 = vmatpush1.msra.mxu0 0.0
    %496 = vmatprep.subr.mxu0 0.0
    %497 = vmatpush1.msra.mxu0 0.0
    %498 = vmatprep.subr.mxu0 0.0
    %499 = vmatpush1.msra.mxu0 0.0
    %500 = vmatprep.subr.mxu0 0.0
    %501 = vmatpush1.msra.mxu0 0.0
    %502 = vmatprep.subr.mxu0 0.0
    %503 = vmatpush1.msra.mxu0 0.0
    %504 = vmatprep.subr.mxu0 0.0
    %505 = vmatpush1.msra.mxu0 0.0
    %506 = vmatprep.subr.mxu0 0.0
    %507 = vmatpush1.msra.mxu0 0.0
    %508 = vmatprep.subr.mxu0 0.0
    %509 = vmatpush1.msra.mxu0 0.0
    %510 = vmatprep.subr.mxu0 0.0
    %511 = vmatpush1.msra.mxu0 0.0
    %512 = vmatprep.subr.mxu0 0.0
    %513 = vmatpush1.msra.mxu0 0.0
    %514 = vmatprep.subr.mxu0 0.0
    %515 = vmatpush1.msra.mxu0 0.0
    %516 = vmatprep.subr.mxu0 0.0
    %517 = vmatpush1.msra.mxu0 0.0
    %518 = vmatprep.subr.mxu0 0.0
    %519 = vmatpush1.msra.mxu0 0.0
    %520 = vmatprep.subr.mxu0 0.0
    %521 = vmatpush1.msra.mxu0 0.0
    %522 = vmatprep.subr.mxu0 0.0
    %523 = vmatpush1.msra.mxu0 0.0
    %524 = vmatprep.subr.mxu0 0.0
    %525 = vmatpush1.msra.mxu0 0.0
    %526 = vmatprep.mubr.f32.mxu0 0.0
    %v527 = vand.u32 %v46, 4294901760
    %528 = vmatmul.mubr.f32.gmra.mrb[0].mxu0 %v527
    %v529 = vpop.f32.mrb[0].mxu0
    %v530 = vadd.f32 %v455, %v529
    %v531 = vpop.f32.mrb[0].mxu0
    %532 = vdwg.mxu0
    %533 = vset.pattern.permute.xlu0 1
    %534 = vperm.xlu0 %533, %v21
    %v535 = vpop.permute.xlu0 %534
    %vm536 = vcmp.eq.s32.totalorder %v535, %v37
    %v537 = vsel %vm536, 1, 0
    %v538 = vcvt.s32.f32 %v537
    %v540 = vsel %vm44, %v538, 0
    %542 = vmatprep.subr.mxu0 0.0
    %v543 = vand.u32 %v31, 4294901760
    %544 = vmatpush1.msra.mxu0 %v543
    %545 = vmatprep.subr.mxu0 0.0
    %v546 = vand.u32 %v32, 4294901760
    %547 = vmatpush1.msra.mxu0 %v546
    %548 = vmatprep.subr.mxu0 0.0
    %v549 = vand.u32 %v33, 4294901760
    %550 = vmatpush1.msra.mxu0 %v549
    %551 = vmatprep.subr.mxu0 0.0
    %v552 = vand.u32 %v34, 4294901760
    %553 = vmatpush1.msra.mxu0 %v552
    %554 = vmatprep.subr.mxu0 0.0
    %555 = vmatpush1.msra.mxu0 0.0
    %556 = vmatprep.subr.mxu0 0.0
    %557 = vmatpush1.msra.mxu0 0.0
    %558 = vmatprep.subr.mxu0 0.0
    %559 = vmatpush1.msra.mxu0 0.0
    %560 = vmatprep.subr.mxu0 0.0
    %561 = vmatpush1.msra.mxu0 0.0
    %562 = vmatprep.subr.mxu0 0.0
    %563 = vmatpush1.msra.mxu0 0.0
    %564 = vmatprep.subr.mxu0 0.0
    %565 = vmatpush1.msra.mxu0 0.0
    %566 = vmatprep.subr.mxu0 0.0
    %567 = vmatpush1.msra.mxu0 0.0
    %568 = vmatprep.subr.mxu0 0.0
    %569 = vmatpush1.msra.mxu0 0.0
    %570 = vmatprep.subr.mxu0 0.0
    %571 = vmatpush1.msra.mxu0 0.0
    %572 = vmatprep.subr.mxu0 0.0
    %573 = vmatpush1.msra.mxu0 0.0
    %574 = vmatprep.subr.mxu0 0.0
    %575 = vmatpush1.msra.mxu0 0.0
    %576 = vmatprep.subr.mxu0 0.0
    %577 = vmatpush1.msra.mxu0 0.0
    %578 = vmatprep.subr.mxu0 0.0
    %579 = vmatpush1.msra.mxu0 0.0
    %580 = vmatprep.subr.mxu0 0.0
    %581 = vmatpush1.msra.mxu0 0.0
    %582 = vmatprep.subr.mxu0 0.0
    %583 = vmatpush1.msra.mxu0 0.0
    %584 = vmatprep.subr.mxu0 0.0
    %585 = vmatpush1.msra.mxu0 0.0
    %586 = vmatprep.subr.mxu0 0.0
    %587 = vmatpush1.msra.mxu0 0.0
    %588 = vmatprep.subr.mxu0 0.0
    %589 = vmatpush1.msra.mxu0 0.0
    %590 = vmatprep.subr.mxu0 0.0
    %591 = vmatpush1.msra.mxu0 0.0
    %592 = vmatprep.subr.mxu0 0.0
    %593 = vmatpush1.msra.mxu0 0.0
    %594 = vmatprep.subr.mxu0 0.0
    %595 = vmatpush1.msra.mxu0 0.0
    %596 = vmatprep.subr.mxu0 0.0
    %597 = vmatpush1.msra.mxu0 0.0
    %598 = vmatprep.subr.mxu0 0.0
    %599 = vmatpush1.msra.mxu0 0.0
    %600 = vmatprep.subr.mxu0 0.0
    %601 = vmatpush1.msra.mxu0 0.0
    %602 = vmatprep.subr.mxu0 0.0
    %603 = vmatpush1.msra.mxu0 0.0
    %604 = vmatprep.subr.mxu0 0.0
    %605 = vmatpush1.msra.mxu0 0.0
    %606 = vmatprep.subr.mxu0 0.0
    %607 = vmatpush1.msra.mxu0 0.0
    %608 = vmatprep.subr.mxu0 0.0
    %609 = vmatpush1.msra.mxu0 0.0
    %610 = vmatprep.mubr.f32.mxu0 0.0
    %v611 = vand.u32 %v540, 4294901760
    %v612 = vsub.f32 %v540, %v611
    %v613 = vand.u32 %v612, 4294901760
    %v614 = vsub.f32 %v612, %v613
    %v615 = vand.u32 %v614, 4294901760
    %616 = vmatmul.mubr.f32.gmra.mrb[0].mxu0 %v615
    %v617 = vpop.f32.mrb[0].mxu0
    %v618 = vadd.f32 0.0, %v617
    %v619 = vpop.f32.mrb[0].mxu0
    %620 = vdwg.mxu0
    %621 = vmatprep.subr.mxu0 0.0
    %v622 = vand.u32 %v31, 4294901760
    %v623 = vsub.f32 %v31, %v622
    %v624 = vand.u32 %v623, 4294901760
    %v625 = vsub.f32 %v623, %v624
    %v626 = vand.u32 %v625, 4294901760
    %627 = vmatpush1.msra.mxu0 %v626
    %628 = vmatprep.subr.mxu0 0.0
    %v629 = vand.u32 %v32, 4294901760
    %v630 = vsub.f32 %v32, %v629
    %v631 = vand.u32 %v630, 4294901760
    %v632 = vsub.f32 %v630, %v631
    %v633 = vand.u32 %v632, 4294901760
    %634 = vmatpush1.msra.mxu0 %v633
    %635 = vmatprep.subr.mxu0 0.0
    %v636 = vand.u32 %v33, 4294901760
    %v637 = vsub.f32 %v33, %v636
    %v638 = vand.u32 %v637, 4294901760
    %v639 = vsub.f32 %v637, %v638
    %v640 = vand.u32 %v639, 4294901760
    %641 = vmatpush1.msra.mxu0 %v640
    %642 = vmatprep.subr.mxu0 0.0
    %v643 = vand.u32 %v34, 4294901760
    %v644 = vsub.f32 %v34, %v643
    %v645 = vand.u32 %v644, 4294901760
    %v646 = vsub.f32 %v644, %v645
    %v647 = vand.u32 %v646, 4294901760
    %648 = vmatpush1.msra.mxu0 %v647
    %649 = vmatprep.subr.mxu0 0.0
    %650 = vmatpush1.msra.mxu0 0.0
    %651 = vmatprep.subr.mxu0 0.0
    %652 = vmatpush1.msra.mxu0 0.0
    %653 = vmatprep.subr.mxu0 0.0
    %654 = vmatpush1.msra.mxu0 0.0
    %655 = vmatprep.subr.mxu0 0.0
    %656 = vmatpush1.msra.mxu0 0.0
    %657 = vmatprep.subr.mxu0 0.0
    %658 = vmatpush1.msra.mxu0 0.0
    %659 = vmatprep.subr.mxu0 0.0
    %660 = vmatpush1.msra.mxu0 0.0
    %661 = vmatprep.subr.mxu0 0.0
    %662 = vmatpush1.msra.mxu0 0.0
    %663 = vmatprep.subr.mxu0 0.0
    %664 = vmatpush1.msra.mxu0 0.0
    %665 = vmatprep.subr.mxu0 0.0
    %666 = vmatpush1.msra.mxu0 0.0
    %667 = vmatprep.subr.mxu0 0.0
    %668 = vmatpush1.msra.mxu0 0.0
    %669 = vmatprep.subr.mxu0 0.0
    %670 = vmatpush1.msra.mxu0 0.0
    %671 = vmatprep.subr.mxu0 0.0
    %672 = vmatpush1.msra.mxu0 0.0
    %673 = vmatprep.subr.mxu0 0.0
    %674 = vmatpush1.msra.mxu0 0.0
    %675 = vmatprep.subr.mxu0 0.0
    %676 = vmatpush1.msra.mxu0 0.0
    %677 = vmatprep.subr.mxu0 0.0
    %678 = vmatpush1.msra.mxu0 0.0
    %679 = vmatprep.subr.mxu0 0.0
    %680 = vmatpush1.msra.mxu0 0.0
    %681 = vmatprep.subr.mxu0 0.0
    %682 = vmatpush1.msra.mxu0 0.0
    %683 = vmatprep.subr.mxu0 0.0
    %684 = vmatpush1.msra.mxu0 0.0
    %685 = vmatprep.subr.mxu0 0.0
    %686 = vmatpush1.msra.mxu0 0.0
    %687 = vmatprep.subr.mxu0 0.0
    %688 = vmatpush1.msra.mxu0 0.0
    %689 = vmatprep.subr.mxu0 0.0
    %690 = vmatpush1.msra.mxu0 0.0
    %691 = vmatprep.subr.mxu0 0.0
    %692 = vmatpush1.msra.mxu0 0.0
    %693 = vmatprep.subr.mxu0 0.0
    %694 = vmatpush1.msra.mxu0 0.0
    %695 = vmatprep.subr.mxu0 0.0
    %696 = vmatpush1.msra.mxu0 0.0
    %697 = vmatprep.subr.mxu0 0.0
    %698 = vmatpush1.msra.mxu0 0.0
    %699 = vmatprep.subr.mxu0 0.0
    %700 = vmatpush1.msra.mxu0 0.0
    %701 = vmatprep.subr.mxu0 0.0
    %702 = vmatpush1.msra.mxu0 0.0
    %703 = vmatprep.subr.mxu0 0.0
    %704 = vmatpush1.msra.mxu0 0.0
    %705 = vmatprep.mubr.f32.mxu0 0.0
    %v706 = vand.u32 %v540, 4294901760
    %707 = vmatmul.mubr.f32.gmra.mrb[0].mxu0 %v706
    %v708 = vpop.f32.mrb[0].mxu0
    %v709 = vadd.f32 %v618, %v708
    %v710 = vpop.f32.mrb[0].mxu0
    %711 = vdwg.mxu0
    %712 = vmatprep.subr.mxu0 0.0
    %v713 = vand.u32 %v31, 4294901760
    %v714 = vsub.f32 %v31, %v713
    %715 = vmatpush1.msra.mxu0 %v714
    %716 = vmatprep.subr.mxu0 0.0
    %v717 = vand.u32 %v32, 4294901760
    %v718 = vsub.f32 %v32, %v717
    %719 = vmatpush1.msra.mxu0 %v718
    %720 = vmatprep.subr.mxu0 0.0
    %v721 = vand.u32 %v33, 4294901760
    %v722 = vsub.f32 %v33, %v721
    %723 = vmatpush1.msra.mxu0 %v722
    %724 = vmatprep.subr.mxu0 0.0
    %v725 = vand.u32 %v34, 4294901760
    %v726 = vsub.f32 %v34, %v725
    %727 = vmatpush1.msra.mxu0 %v726
    %728 = vmatprep.subr.mxu0 0.0
    %729 = vmatpush1.msra.mxu0 0.0
    %730 = vmatprep.subr.mxu0 0.0
    %731 = vmatpush1.msra.mxu0 0.0
    %732 = vmatprep.subr.mxu0 0.0
    %733 = vmatpush1.msra.mxu0 0.0
    %734 = vmatprep.subr.mxu0 0.0
    %735 = vmatpush1.msra.mxu0 0.0
    %736 = vmatprep.subr.mxu0 0.0
    %737 = vmatpush1.msra.mxu0 0.0
    %738 = vmatprep.subr.mxu0 0.0
    %739 = vmatpush1.msra.mxu0 0.0
    %740 = vmatprep.subr.mxu0 0.0
    %741 = vmatpush1.msra.mxu0 0.0
    %742 = vmatprep.subr.mxu0 0.0
    %743 = vmatpush1.msra.mxu0 0.0
    %744 = vmatprep.subr.mxu0 0.0
    %745 = vmatpush1.msra.mxu0 0.0
    %746 = vmatprep.subr.mxu0 0.0
    %747 = vmatpush1.msra.mxu0 0.0
    %748 = vmatprep.subr.mxu0 0.0
    %749 = vmatpush1.msra.mxu0 0.0
    %750 = vmatprep.subr.mxu0 0.0
    %751 = vmatpush1.msra.mxu0 0.0
    %752 = vmatprep.subr.mxu0 0.0
    %753 = vmatpush1.msra.mxu0 0.0
    %754 = vmatprep.subr.mxu0 0.0
    %755 = vmatpush1.msra.mxu0 0.0
    %756 = vmatprep.subr.mxu0 0.0
    %757 = vmatpush1.msra.mxu0 0.0
    %758 = vmatprep.subr.mxu0 0.0
    %759 = vmatpush1.msra.mxu0 0.0
    %760 = vmatprep.subr.mxu0 0.0
    %761 = vmatpush1.msra.mxu0 0.0
    %762 = vmatprep.subr.mxu0 0.0
    %763 = vmatpush1.msra.mxu0 0.0
    %764 = vmatprep.subr.mxu0 0.0
    %765 = vmatpush1.msra.mxu0 0.0
    %766 = vmatprep.subr.mxu0 0.0
    %767 = vmatpush1.msra.mxu0 0.0
    %768 = vmatprep.subr.mxu0 0.0
    %769 = vmatpush1.msra.mxu0 0.0
    %770 = vmatprep.subr.mxu0 0.0
    %771 = vmatpush1.msra.mxu0 0.0
    %772 = vmatprep.subr.mxu0 0.0
    %773 = vmatpush1.msra.mxu0 0.0
    %774 = vmatprep.subr.mxu0 0.0
    %775 = vmatpush1.msra.mxu0 0.0
    %776 = vmatprep.subr.mxu0 0.0
    %777 = vmatpush1.msra.mxu0 0.0
    %778 = vmatprep.subr.mxu0 0.0
    %779 = vmatpush1.msra.mxu0 0.0
    %780 = vmatprep.subr.mxu0 0.0
    %781 = vmatpush1.msra.mxu0 0.0
    %782 = vmatprep.subr.mxu0 0.0
    %783 = vmatpush1.msra.mxu0 0.0
    %784 = vmatprep.mubr.f32.mxu0 0.0
    %v785 = vand.u32 %v540, 4294901760
    %v786 = vsub.f32 %v540, %v785
    %787 = vmatmul.mubr.f32.gmra.mrb[0].mxu0 %v786
    %v788 = vpop.f32.mrb[0].mxu0
    %v789 = vadd.f32 %v709, %v788
    %v790 = vpop.f32.mrb[0].mxu0
    %791 = vdwg.mxu0
    %792 = vmatprep.subr.mxu0 0.0
    %v793 = vand.u32 %v31, 4294901760
    %794 = vmatpush1.msra.mxu0 %v793
    %795 = vmatprep.subr.mxu0 0.0
    %v796 = vand.u32 %v32, 4294901760
    %797 = vmatpush1.msra.mxu0 %v796
    %798 = vmatprep.subr.mxu0 0.0
    %v799 = vand.u32 %v33, 4294901760
    %800 = vmatpush1.msra.mxu0 %v799
    %801 = vmatprep.subr.mxu0 0.0
    %v802 = vand.u32 %v34, 4294901760
    %803 = vmatpush1.msra.mxu0 %v802
    %804 = vmatprep.subr.mxu0 0.0
    %805 = vmatpush1.msra.mxu0 0.0
    %806 = vmatprep.subr.mxu0 0.0
    %807 = vmatpush1.msra.mxu0 0.0
    %808 = vmatprep.subr.mxu0 0.0
    %809 = vmatpush1.msra.mxu0 0.0
    %810 = vmatprep.subr.mxu0 0.0
    %811 = vmatpush1.msra.mxu0 0.0
    %812 = vmatprep.subr.mxu0 0.0
    %813 = vmatpush1.msra.mxu0 0.0
    %814 = vmatprep.subr.mxu0 0.0
    %815 = vmatpush1.msra.mxu0 0.0
    %816 = vmatprep.subr.mxu0 0.0
    %817 = vmatpush1.msra.mxu0 0.0
    %818 = vmatprep.subr.mxu0 0.0
    %819 = vmatpush1.msra.mxu0 0.0
    %820 = vmatprep.subr.mxu0 0.0
    %821 = vmatpush1.msra.mxu0 0.0
    %822 = vmatprep.subr.mxu0 0.0
    %823 = vmatpush1.msra.mxu0 0.0
    %824 = vmatprep.subr.mxu0 0.0
    %825 = vmatpush1.msra.mxu0 0.0
    %826 = vmatprep.subr.mxu0 0.0
    %827 = vmatpush1.msra.mxu0 0.0
    %828 = vmatprep.subr.mxu0 0.0
    %829 = vmatpush1.msra.mxu0 0.0
    %830 = vmatprep.subr.mxu0 0.0
    %831 = vmatpush1.msra.mxu0 0.0
    %832 = vmatprep.subr.mxu0 0.0
    %833 = vmatpush1.msra.mxu0 0.0
    %834 = vmatprep.subr.mxu0 0.0
    %835 = vmatpush1.msra.mxu0 0.0
    %836 = vmatprep.subr.mxu0 0.0
    %837 = vmatpush1.msra.mxu0 0.0
    %838 = vmatprep.subr.mxu0 0.0
    %839 = vmatpush1.msra.mxu0 0.0
    %840 = vmatprep.subr.mxu0 0.0
    %841 = vmatpush1.msra.mxu0 0.0
    %842 = vmatprep.subr.mxu0 0.0
    %843 = vmatpush1.msra.mxu0 0.0
    %844 = vmatprep.subr.mxu0 0.0
    %845 = vmatpush1.msra.mxu0 0.0
    %846 = vmatprep.subr.mxu0 0.0
    %847 = vmatpush1.msra.mxu0 0.0
    %848 = vmatprep.subr.mxu0 0.0
    %849 = vmatpush1.msra.mxu0 0.0
    %850 = vmatprep.subr.mxu0 0.0
    %851 = vmatpush1.msra.mxu0 0.0
    %852 = vmatprep.subr.mxu0 0.0
    %853 = vmatpush1.msra.mxu0 0.0
    %854 = vmatprep.subr.mxu0 0.0
    %855 = vmatpush1.msra.mxu0 0.0
    %856 = vmatprep.subr.mxu0 0.0
    %857 = vmatpush1.msra.mxu0 0.0
    %858 = vmatprep.subr.mxu0 0.0
    %859 = vmatpush1.msra.mxu0 0.0
    %860 = vmatprep.mubr.f32.mxu0 0.0
    %v861 = vand.u32 %v540, 4294901760
    %v862 = vsub.f32 %v540, %v861
    %v863 = vand.u32 %v862, 4294901760
    %864 = vmatmul.mubr.f32.gmra.mrb[0].mxu0 %v863
    %v865 = vpop.f32.mrb[0].mxu0
    %v866 = vadd.f32 %v789, %v865
    %v867 = vpop.f32.mrb[0].mxu0
    %868 = vdwg.mxu0
    %869 = vmatprep.subr.mxu0 0.0
    %v870 = vand.u32 %v31, 4294901760
    %v871 = vsub.f32 %v31, %v870
    %v872 = vand.u32 %v871, 4294901760
    %873 = vmatpush1.msra.mxu0 %v872
    %874 = vmatprep.subr.mxu0 0.0
    %v875 = vand.u32 %v32, 4294901760
    %v876 = vsub.f32 %v32, %v875
    %v877 = vand.u32 %v876, 4294901760
    %878 = vmatpush1.msra.mxu0 %v877
    %879 = vmatprep.subr.mxu0 0.0
    %v880 = vand.u32 %v33, 4294901760
    %v881 = vsub.f32 %v33, %v880
    %v882 = vand.u32 %v881, 4294901760
    %883 = vmatpush1.msra.mxu0 %v882
    %884 = vmatprep.subr.mxu0 0.0
    %v885 = vand.u32 %v34, 4294901760
    %v886 = vsub.f32 %v34, %v885
    %v887 = vand.u32 %v886, 4294901760
    %888 = vmatpush1.msra.mxu0 %v887
    %889 = vmatprep.subr.mxu0 0.0
    %890 = vmatpush1.msra.mxu0 0.0
    %891 = vmatprep.subr.mxu0 0.0
    %892 = vmatpush1.msra.mxu0 0.0
    %893 = vmatprep.subr.mxu0 0.0
    %894 = vmatpush1.msra.mxu0 0.0
    %895 = vmatprep.subr.mxu0 0.0
    %896 = vmatpush1.msra.mxu0 0.0
    %897 = vmatprep.subr.mxu0 0.0
    %898 = vmatpush1.msra.mxu0 0.0
    %899 = vmatprep.subr.mxu0 0.0
    %900 = vmatpush1.msra.mxu0 0.0
    %901 = vmatprep.subr.mxu0 0.0
    %902 = vmatpush1.msra.mxu0 0.0
    %903 = vmatprep.subr.mxu0 0.0
    %904 = vmatpush1.msra.mxu0 0.0
    %905 = vmatprep.subr.mxu0 0.0
    %906 = vmatpush1.msra.mxu0 0.0
    %907 = vmatprep.subr.mxu0 0.0
    %908 = vmatpush1.msra.mxu0 0.0
    %909 = vmatprep.subr.mxu0 0.0
    %910 = vmatpush1.msra.mxu0 0.0
    %911 = vmatprep.subr.mxu0 0.0
    %912 = vmatpush1.msra.mxu0 0.0
    %913 = vmatprep.subr.mxu0 0.0
    %914 = vmatpush1.msra.mxu0 0.0
    %915 = vmatprep.subr.mxu0 0.0
    %916 = vmatpush1.msra.mxu0 0.0
    %917 = vmatprep.subr.mxu0 0.0
    %918 = vmatpush1.msra.mxu0 0.0
    %919 = vmatprep.subr.mxu0 0.0
    %920 = vmatpush1.msra.mxu0 0.0
    %921 = vmatprep.subr.mxu0 0.0
    %922 = vmatpush1.msra.mxu0 0.0
    %923 = vmatprep.subr.mxu0 0.0
    %924 = vmatpush1.msra.mxu0 0.0
    %925 = vmatprep.subr.mxu0 0.0
    %926 = vmatpush1.msra.mxu0 0.0
    %927 = vmatprep.subr.mxu0 0.0
    %928 = vmatpush1.msra.mxu0 0.0
    %929 = vmatprep.subr.mxu0 0.0
    %930 = vmatpush1.msra.mxu0 0.0
    %931 = vmatprep.subr.mxu0 0.0
    %932 = vmatpush1.msra.mxu0 0.0
    %933 = vmatprep.subr.mxu0 0.0
    %934 = vmatpush1.msra.mxu0 0.0
    %935 = vmatprep.subr.mxu0 0.0
    %936 = vmatpush1.msra.mxu0 0.0
    %937 = vmatprep.subr.mxu0 0.0
    %938 = vmatpush1.msra.mxu0 0.0
    %939 = vmatprep.subr.mxu0 0.0
    %940 = vmatpush1.msra.mxu0 0.0
    %941 = vmatprep.subr.mxu0 0.0
    %942 = vmatpush1.msra.mxu0 0.0
    %943 = vmatprep.subr.mxu0 0.0
    %944 = vmatpush1.msra.mxu0 0.0
    %945 = vmatprep.mubr.f32.mxu0 0.0
    %v946 = vand.u32 %v540, 4294901760
    %947 = vmatmul.mubr.f32.gmra.mrb[0].mxu0 %v946
    %v948 = vpop.f32.mrb[0].mxu0
    %v949 = vadd.f32 %v866, %v948
    %v950 = vpop.f32.mrb[0].mxu0
    %951 = vdwg.mxu0
    %952 = vmatprep.subr.mxu0 0.0
    %v953 = vand.u32 %v31, 4294901760
    %954 = vmatpush1.msra.mxu0 %v953
    %955 = vmatprep.subr.mxu0 0.0
    %v956 = vand.u32 %v32, 4294901760
    %957 = vmatpush1.msra.mxu0 %v956
    %958 = vmatprep.subr.mxu0 0.0
    %v959 = vand.u32 %v33, 4294901760
    %960 = vmatpush1.msra.mxu0 %v959
    %961 = vmatprep.subr.mxu0 0.0
    %v962 = vand.u32 %v34, 4294901760
    %963 = vmatpush1.msra.mxu0 %v962
    %964 = vmatprep.subr.mxu0 0.0
    %965 = vmatpush1.msra.mxu0 0.0
    %966 = vmatprep.subr.mxu0 0.0
    %967 = vmatpush1.msra.mxu0 0.0
    %968 = vmatprep.subr.mxu0 0.0
    %969 = vmatpush1.msra.mxu0 0.0
    %970 = vmatprep.subr.mxu0 0.0
    %971 = vmatpush1.msra.mxu0 0.0
    %972 = vmatprep.subr.mxu0 0.0
    %973 = vmatpush1.msra.mxu0 0.0
    %974 = vmatprep.subr.mxu0 0.0
    %975 = vmatpush1.msra.mxu0 0.0
    %976 = vmatprep.subr.mxu0 0.0
    %977 = vmatpush1.msra.mxu0 0.0
    %978 = vmatprep.subr.mxu0 0.0
    %979 = vmatpush1.msra.mxu0 0.0
    %980 = vmatprep.subr.mxu0 0.0
    %981 = vmatpush1.msra.mxu0 0.0
    %982 = vmatprep.subr.mxu0 0.0
    %983 = vmatpush1.msra.mxu0 0.0
    %984 = vmatprep.subr.mxu0 0.0
    %985 = vmatpush1.msra.mxu0 0.0
    %986 = vmatprep.subr.mxu0 0.0
    %987 = vmatpush1.msra.mxu0 0.0
    %988 = vmatprep.subr.mxu0 0.0
    %989 = vmatpush1.msra.mxu0 0.0
    %990 = vmatprep.subr.mxu0 0.0
    %991 = vmatpush1.msra.mxu0 0.0
    %992 = vmatprep.subr.mxu0 0.0
    %993 = vmatpush1.msra.mxu0 0.0
    %994 = vmatprep.subr.mxu0 0.0
    %995 = vmatpush1.msra.mxu0 0.0
    %996 = vmatprep.subr.mxu0 0.0
    %997 = vmatpush1.msra.mxu0 0.0
    %998 = vmatprep.subr.mxu0 0.0
    %999 = vmatpush1.msra.mxu0 0.0
    %1000 = vmatprep.subr.mxu0 0.0
    %1001 = vmatpush1.msra.mxu0 0.0
    %1002 = vmatprep.subr.mxu0 0.0
    %1003 = vmatpush1.msra.mxu0 0.0
    %1004 = vmatprep.subr.mxu0 0.0
    %1005 = vmatpush1.msra.mxu0 0.0
    %1006 = vmatprep.subr.mxu0 0.0
    %1007 = vmatpush1.msra.mxu0 0.0
    %1008 = vmatprep.subr.mxu0 0.0
    %1009 = vmatpush1.msra.mxu0 0.0
    %1010 = vmatprep.subr.mxu0 0.0
    %1011 = vmatpush1.msra.mxu0 0.0
    %1012 = vmatprep.subr.mxu0 0.0
    %1013 = vmatpush1.msra.mxu0 0.0
    %1014 = vmatprep.subr.mxu0 0.0
    %1015 = vmatpush1.msra.mxu0 0.0
    %1016 = vmatprep.subr.mxu0 0.0
    %1017 = vmatpush1.msra.mxu0 0.0
    %1018 = vmatprep.subr.mxu0 0.0
    %1019 = vmatpush1.msra.mxu0 0.0
    %1020 = vmatprep.mubr.f32.mxu0 0.0
    %v1021 = vand.u32 %v540, 4294901760
    %1022 = vmatmul.mubr.f32.gmra.mrb[0].mxu0 %v1021
    %v1023 = vpop.f32.mrb[0].mxu0
    %v1024 = vadd.f32 %v949, %v1023
    %v1025 = vpop.f32.mrb[0].mxu0
    %1026 = vdwg.mxu0
    %1027 = vset.pattern.permute.xlu0 0
    %1028 = vperm.xlu0 %1027, %v22
    %v1029 = vpop.permute.xlu0 %1028
    %vm1030 = vcmp.eq.s32.totalorder %v1029, %v37
    %v1031 = vsel %vm1030, 1, 0
    %v1032 = vcvt.s32.f32 %v1031
    %vm1033 = vcmask 64512
    %v1035 = vsel %vm1033, %v1032, 0
    %1037 = vmatprep.subr.mxu0 0.0
    %v1038 = vand.u32 %v35, 4294901760
    %1039 = vmatpush1.msra.mxu0 %v1038
    %1040 = vmatprep.subr.mxu0 0.0
    %1041 = vmatpush1.msra.mxu0 0.0
    %1042 = vmatprep.subr.mxu0 0.0
    %1043 = vmatpush1.msra.mxu0 0.0
    %1044 = vmatprep.subr.mxu0 0.0
    %1045 = vmatpush1.msra.mxu0 0.0
    %1046 = vmatprep.subr.mxu0 0.0
    %1047 = vmatpush1.msra.mxu0 0.0
    %1048 = vmatprep.subr.mxu0 0.0
    %1049 = vmatpush1.msra.mxu0 0.0
    %1050 = vmatprep.subr.mxu0 0.0
    %1051 = vmatpush1.msra.mxu0 0.0
    %1052 = vmatprep.subr.mxu0 0.0
    %1053 = vmatpush1.msra.mxu0 0.0
    %1054 = vmatprep.subr.mxu0 0.0
    %1055 = vmatpush1.msra.mxu0 0.0
    %1056 = vmatprep.subr.mxu0 0.0
    %1057 = vmatpush1.msra.mxu0 0.0
    %1058 = vmatprep.subr.mxu0 0.0
    %1059 = vmatpush1.msra.mxu0 0.0
    %1060 = vmatprep.subr.mxu0 0.0
    %1061 = vmatpush1.msra.mxu0 0.0
    %1062 = vmatprep.subr.mxu0 0.0
    %1063 = vmatpush1.msra.mxu0 0.0
    %1064 = vmatprep.subr.mxu0 0.0
    %1065 = vmatpush1.msra.mxu0 0.0
    %1066 = vmatprep.subr.mxu0 0.0
    %1067 = vmatpush1.msra.mxu0 0.0
    %1068 = vmatprep.subr.mxu0 0.0
    %1069 = vmatpush1.msra.mxu0 0.0
    %1070 = vmatprep.subr.mxu0 0.0
    %1071 = vmatpush1.msra.mxu0 0.0
    %1072 = vmatprep.subr.mxu0 0.0
    %1073 = vmatpush1.msra.mxu0 0.0
    %1074 = vmatprep.subr.mxu0 0.0
    %1075 = vmatpush1.msra.mxu0 0.0
    %1076 = vmatprep.subr.mxu0 0.0
    %1077 = vmatpush1.msra.mxu0 0.0
    %1078 = vmatprep.subr.mxu0 0.0
    %1079 = vmatpush1.msra.mxu0 0.0
    %1080 = vmatprep.subr.mxu0 0.0
    %1081 = vmatpush1.msra.mxu0 0.0
    %1082 = vmatprep.subr.mxu0 0.0
    %1083 = vmatpush1.msra.mxu0 0.0
    %1084 = vmatprep.subr.mxu0 0.0
    %1085 = vmatpush1.msra.mxu0 0.0
    %1086 = vmatprep.subr.mxu0 0.0
    %1087 = vmatpush1.msra.mxu0 0.0
    %1088 = vmatprep.subr.mxu0 0.0
    %1089 = vmatpush1.msra.mxu0 0.0
    %1090 = vmatprep.subr.mxu0 0.0
    %1091 = vmatpush1.msra.mxu0 0.0
    %1092 = vmatprep.subr.mxu0 0.0
    %1093 = vmatpush1.msra.mxu0 0.0
    %1094 = vmatprep.subr.mxu0 0.0
    %1095 = vmatpush1.msra.mxu0 0.0
    %1096 = vmatprep.subr.mxu0 0.0
    %1097 = vmatpush1.msra.mxu0 0.0
    %1098 = vmatprep.subr.mxu0 0.0
    %1099 = vmatpush1.msra.mxu0 0.0
    %1100 = vmatprep.subr.mxu0 0.0
    %1101 = vmatpush1.msra.mxu0 0.0
    %1102 = vmatprep.mubr.f32.mxu0 0.0
    %v1103 = vand.u32 %v1035, 4294901760
    %v1104 = vsub.f32 %v1035, %v1103
    %v1105 = vand.u32 %v1104, 4294901760
    %v1106 = vsub.f32 %v1104, %v1105
    %v1107 = vand.u32 %v1106, 4294901760
    %1108 = vmatmul.mubr.f32.gmra.mrb[0].mxu0 %v1107
    %v1109 = vpop.f32.mrb[0].mxu0
    %v1110 = vadd.f32 0.0, %v1109
    %v1111 = vpop.f32.mrb[0].mxu0
    %1112 = vdwg.mxu0
    %1113 = vmatprep.subr.mxu0 0.0
    %v1114 = vand.u32 %v35, 4294901760
    %v1115 = vsub.f32 %v35, %v1114
    %v1116 = vand.u32 %v1115, 4294901760
    %v1117 = vsub.f32 %v1115, %v1116
    %v1118 = vand.u32 %v1117, 4294901760
    %1119 = vmatpush1.msra.mxu0 %v1118
    %1120 = vmatprep.subr.mxu0 0.0
    %1121 = vmatpush1.msra.mxu0 0.0
    %1122 = vmatprep.subr.mxu0 0.0
    %1123 = vmatpush1.msra.mxu0 0.0
    %1124 = vmatprep.subr.mxu0 0.0
    %1125 = vmatpush1.msra.mxu0 0.0
    %1126 = vmatprep.subr.mxu0 0.0
    %1127 = vmatpush1.msra.mxu0 0.0
    %1128 = vmatprep.subr.mxu0 0.0
    %1129 = vmatpush1.msra.mxu0 0.0
    %1130 = vmatprep.subr.mxu0 0.0
    %1131 = vmatpush1.msra.mxu0 0.0
    %1132 = vmatprep.subr.mxu0 0.0
    %1133 = vmatpush1.msra.mxu0 0.0
    %1134 = vmatprep.subr.mxu0 0.0
    %1135 = vmatpush1.msra.mxu0 0.0
    %1136 = vmatprep.subr.mxu0 0.0
    %1137 = vmatpush1.msra.mxu0 0.0
    %1138 = vmatprep.subr.mxu0 0.0
    %1139 = vmatpush1.msra.mxu0 0.0
    %1140 = vmatprep.subr.mxu0 0.0
    %1141 = vmatpush1.msra.mxu0 0.0
    %1142 = vmatprep.subr.mxu0 0.0
    %1143 = vmatpush1.msra.mxu0 0.0
    %1144 = vmatprep.subr.mxu0 0.0
    %1145 = vmatpush1.msra.mxu0 0.0
    %1146 = vmatprep.subr.mxu0 0.0
    %1147 = vmatpush1.msra.mxu0 0.0
    %1148 = vmatprep.subr.mxu0 0.0
    %1149 = vmatpush1.msra.mxu0 0.0
    %1150 = vmatprep.subr.mxu0 0.0
    %1151 = vmatpush1.msra.mxu0 0.0
    %1152 = vmatprep.subr.mxu0 0.0
    %1153 = vmatpush1.msra.mxu0 0.0
    %1154 = vmatprep.subr.mxu0 0.0
    %1155 = vmatpush1.msra.mxu0 0.0
    %1156 = vmatprep.subr.mxu0 0.0
    %1157 = vmatpush1.msra.mxu0 0.0
    %1158 = vmatprep.subr.mxu0 0.0
    %1159 = vmatpush1.msra.mxu0 0.0
    %1160 = vmatprep.subr.mxu0 0.0
    %1161 = vmatpush1.msra.mxu0 0.0
    %1162 = vmatprep.subr.mxu0 0.0
    %1163 = vmatpush1.msra.mxu0 0.0
    %1164 = vmatprep.subr.mxu0 0.0
    %1165 = vmatpush1.msra.mxu0 0.0
    %1166 = vmatprep.subr.mxu0 0.0
    %1167 = vmatpush1.msra.mxu0 0.0
    %1168 = vmatprep.subr.mxu0 0.0
    %1169 = vmatpush1.msra.mxu0 0.0
    %1170 = vmatprep.subr.mxu0 0.0
    %1171 = vmatpush1.msra.mxu0 0.0
    %1172 = vmatprep.subr.mxu0 0.0
    %1173 = vmatpush1.msra.mxu0 0.0
    %1174 = vmatprep.subr.mxu0 0.0
    %1175 = vmatpush1.msra.mxu0 0.0
    %1176 = vmatprep.subr.mxu0 0.0
    %1177 = vmatpush1.msra.mxu0 0.0
    %1178 = vmatprep.subr.mxu0 0.0
    %1179 = vmatpush1.msra.mxu0 0.0
    %1180 = vmatprep.subr.mxu0 0.0
    %1181 = vmatpush1.msra.mxu0 0.0
    %1182 = vmatprep.mubr.f32.mxu0 0.0
    %v1183 = vand.u32 %v1035, 4294901760
    %1184 = vmatmul.mubr.f32.gmra.mrb[0].mxu0 %v1183
    %v1185 = vpop.f32.mrb[0].mxu0
    %v1186 = vadd.f32 %v1110, %v1185
    %v1187 = vpop.f32.mrb[0].mxu0
    %1188 = vdwg.mxu0
    %1189 = vmatprep.subr.mxu0 0.0
    %v1190 = vand.u32 %v35, 4294901760
    %v1191 = vsub.f32 %v35, %v1190
    %1192 = vmatpush1.msra.mxu0 %v1191
    %1193 = vmatprep.subr.mxu0 0.0
    %1194 = vmatpush1.msra.mxu0 0.0
    %1195 = vmatprep.subr.mxu0 0.0
    %1196 = vmatpush1.msra.mxu0 0.0
    %1197 = vmatprep.subr.mxu0 0.0
    %1198 = vmatpush1.msra.mxu0 0.0
    %1199 = vmatprep.subr.mxu0 0.0
    %1200 = vmatpush1.msra.mxu0 0.0
    %1201 = vmatprep.subr.mxu0 0.0
    %1202 = vmatpush1.msra.mxu0 0.0
    %1203 = vmatprep.subr.mxu0 0.0
    %1204 = vmatpush1.msra.mxu0 0.0
    %1205 = vmatprep.subr.mxu0 0.0
    %1206 = vmatpush1.msra.mxu0 0.0
    %1207 = vmatprep.subr.mxu0 0.0
    %1208 = vmatpush1.msra.mxu0 0.0
    %1209 = vmatprep.subr.mxu0 0.0
    %1210 = vmatpush1.msra.mxu0 0.0
    %1211 = vmatprep.subr.mxu0 0.0
    %1212 = vmatpush1.msra.mxu0 0.0
    %1213 = vmatprep.subr.mxu0 0.0
    %1214 = vmatpush1.msra.mxu0 0.0
    %1215 = vmatprep.subr.mxu0 0.0
    %1216 = vmatpush1.msra.mxu0 0.0
    %1217 = vmatprep.subr.mxu0 0.0
    %1218 = vmatpush1.msra.mxu0 0.0
    %1219 = vmatprep.subr.mxu0 0.0
    %1220 = vmatpush1.msra.mxu0 0.0
    %1221 = vmatprep.subr.mxu0 0.0
    %1222 = vmatpush1.msra.mxu0 0.0
    %1223 = vmatprep.subr.mxu0 0.0
    %1224 = vmatpush1.msra.mxu0 0.0
    %1225 = vmatprep.subr.mxu0 0.0
    %1226 = vmatpush1.msra.mxu0 0.0
    %1227 = vmatprep.subr.mxu0 0.0
    %1228 = vmatpush1.msra.mxu0 0.0
    %1229 = vmatprep.subr.mxu0 0.0
    %1230 = vmatpush1.msra.mxu0 0.0
    %1231 = vmatprep.subr.mxu0 0.0
    %1232 = vmatpush1.msra.mxu0 0.0
    %1233 = vmatprep.subr.mxu0 0.0
    %1234 = vmatpush1.msra.mxu0 0.0
    %1235 = vmatprep.subr.mxu0 0.0
    %1236 = vmatpush1.msra.mxu0 0.0
    %1237 = vmatprep.subr.mxu0 0.0
    %1238 = vmatpush1.msra.mxu0 0.0
    %1239 = vmatprep.subr.mxu0 0.0
    %1240 = vmatpush1.msra.mxu0 0.0
    %1241 = vmatprep.subr.mxu0 0.0
    %1242 = vmatpush1.msra.mxu0 0.0
    %1243 = vmatprep.subr.mxu0 0.0
    %1244 = vmatpush1.msra.mxu0 0.0
    %1245 = vmatprep.subr.mxu0 0.0
    %1246 = vmatpush1.msra.mxu0 0.0
    %1247 = vmatprep.subr.mxu0 0.0
    %1248 = vmatpush1.msra.mxu0 0.0
    %1249 = vmatprep.subr.mxu0 0.0
    %1250 = vmatpush1.msra.mxu0 0.0
    %1251 = vmatprep.subr.mxu0 0.0
    %1252 = vmatpush1.msra.mxu0 0.0
    %1253 = vmatprep.subr.mxu0 0.0
    %1254 = vmatpush1.msra.mxu0 0.0
    %1255 = vmatprep.mubr.f32.mxu0 0.0
    %v1256 = vand.u32 %v1035, 4294901760
    %v1257 = vsub.f32 %v1035, %v1256
    %1258 = vmatmul.mubr.f32.gmra.mrb[0].mxu0 %v1257
    %v1259 = vpop.f32.mrb[0].mxu0
    %v1260 = vadd.f32 %v1186, %v1259
    %v1261 = vpop.f32.mrb[0].mxu0
    %1262 = vdwg.mxu0
    %1263 = vmatprep.subr.mxu0 0.0
    %v1264 = vand.u32 %v35, 4294901760
    %1265 = vmatpush1.msra.mxu0 %v1264
    %1266 = vmatprep.subr.mxu0 0.0
    %1267 = vmatpush1.msra.mxu0 0.0
    %1268 = vmatprep.subr.mxu0 0.0
    %1269 = vmatpush1.msra.mxu0 0.0
    %1270 = vmatprep.subr.mxu0 0.0
    %1271 = vmatpush1.msra.mxu0 0.0
    %1272 = vmatprep.subr.mxu0 0.0
    %1273 = vmatpush1.msra.mxu0 0.0
    %1274 = vmatprep.subr.mxu0 0.0
    %1275 = vmatpush1.msra.mxu0 0.0
    %1276 = vmatprep.subr.mxu0 0.0
    %1277 = vmatpush1.msra.mxu0 0.0
    %1278 = vmatprep.subr.mxu0 0.0
    %1279 = vmatpush1.msra.mxu0 0.0
    %1280 = vmatprep.subr.mxu0 0.0
    %1281 = vmatpush1.msra.mxu0 0.0
    %1282 = vmatprep.subr.mxu0 0.0
    %1283 = vmatpush1.msra.mxu0 0.0
    %1284 = vmatprep.subr.mxu0 0.0
    %1285 = vmatpush1.msra.mxu0 0.0
    %1286 = vmatprep.subr.mxu0 0.0
    %1287 = vmatpush1.msra.mxu0 0.0
    %1288 = vmatprep.subr.mxu0 0.0
    %1289 = vmatpush1.msra.mxu0 0.0
    %1290 = vmatprep.subr.mxu0 0.0
    %1291 = vmatpush1.msra.mxu0 0.0
    %1292 = vmatprep.subr.mxu0 0.0
    %1293 = vmatpush1.msra.mxu0 0.0
    %1294 = vmatprep.subr.mxu0 0.0
    %1295 = vmatpush1.msra.mxu0 0.0
    %1296 = vmatprep.subr.mxu0 0.0
    %1297 = vmatpush1.msra.mxu0 0.0
    %1298 = vmatprep.subr.mxu0 0.0
    %1299 = vmatpush1.msra.mxu0 0.0
    %1300 = vmatprep.subr.mxu0 0.0
    %1301 = vmatpush1.msra.mxu0 0.0
    %1302 = vmatprep.subr.mxu0 0.0
    %1303 = vmatpush1.msra.mxu0 0.0
    %1304 = vmatprep.subr.mxu0 0.0
    %1305 = vmatpush1.msra.mxu0 0.0
    %1306 = vmatprep.subr.mxu0 0.0
    %1307 = vmatpush1.msra.mxu0 0.0
    %1308 = vmatprep.subr.mxu0 0.0
    %1309 = vmatpush1.msra.mxu0 0.0
    %1310 = vmatprep.subr.mxu0 0.0
    %1311 = vmatpush1.msra.mxu0 0.0
    %1312 = vmatprep.subr.mxu0 0.0
    %1313 = vmatpush1.msra.mxu0 0.0
    %1314 = vmatprep.subr.mxu0 0.0
    %1315 = vmatpush1.msra.mxu0 0.0
    %1316 = vmatprep.subr.mxu0 0.0
    %1317 = vmatpush1.msra.mxu0 0.0
    %1318 = vmatprep.subr.mxu0 0.0
    %1319 = vmatpush1.msra.mxu0 0.0
    %1320 = vmatprep.subr.mxu0 0.0
    %1321 = vmatpush1.msra.mxu0 0.0
    %1322 = vmatprep.subr.mxu0 0.0
    %1323 = vmatpush1.msra.mxu0 0.0
    %1324 = vmatprep.subr.mxu0 0.0
    %1325 = vmatpush1.msra.mxu0 0.0
    %1326 = vmatprep.subr.mxu0 0.0
    %1327 = vmatpush1.msra.mxu0 0.0
    %1328 = vmatprep.mubr.f32.mxu0 0.0
    %v1329 = vand.u32 %v1035, 4294901760
    %v1330 = vsub.f32 %v1035, %v1329
    %v1331 = vand.u32 %v1330, 4294901760
    %1332 = vmatmul.mubr.f32.gmra.mrb[0].mxu0 %v1331
    %v1333 = vpop.f32.mrb[0].mxu0
    %v1334 = vadd.f32 %v1260, %v1333
    %v1335 = vpop.f32.mrb[0].mxu0
    %1336 = vdwg.mxu0
    %1337 = vmatprep.subr.mxu0 0.0
    %v1338 = vand.u32 %v35, 4294901760
    %v1339 = vsub.f32 %v35, %v1338
    %v1340 = vand.u32 %v1339, 4294901760
    %1341 = vmatpush1.msra.mxu0 %v1340
    %1342 = vmatprep.subr.mxu0 0.0
    %1343 = vmatpush1.msra.mxu0 0.0
    %1344 = vmatprep.subr.mxu0 0.0
    %1345 = vmatpush1.msra.mxu0 0.0
    %1346 = vmatprep.subr.mxu0 0.0
    %1347 = vmatpush1.msra.mxu0 0.0
    %1348 = vmatprep.subr.mxu0 0.0
    %1349 = vmatpush1.msra.mxu0 0.0
    %1350 = vmatprep.subr.mxu0 0.0
    %1351 = vmatpush1.msra.mxu0 0.0
    %1352 = vmatprep.subr.mxu0 0.0
    %1353 = vmatpush1.msra.mxu0 0.0
    %1354 = vmatprep.subr.mxu0 0.0
    %1355 = vmatpush1.msra.mxu0 0.0
    %1356 = vmatprep.subr.mxu0 0.0
    %1357 = vmatpush1.msra.mxu0 0.0
    %1358 = vmatprep.subr.mxu0 0.0
    %1359 = vmatpush1.msra.mxu0 0.0
    %1360 = vmatprep.subr.mxu0 0.0
    %1361 = vmatpush1.msra.mxu0 0.0
    %1362 = vmatprep.subr.mxu0 0.0
    %1363 = vmatpush1.msra.mxu0 0.0
    %1364 = vmatprep.subr.mxu0 0.0
    %1365 = vmatpush1.msra.mxu0 0.0
    %1366 = vmatprep.subr.mxu0 0.0
    %1367 = vmatpush1.msra.mxu0 0.0
    %1368 = vmatprep.subr.mxu0 0.0
    %1369 = vmatpush1.msra.mxu0 0.0
    %1370 = vmatprep.subr.mxu0 0.0
    %1371 = vmatpush1.msra.mxu0 0.0
    %1372 = vmatprep.subr.mxu0 0.0
    %1373 = vmatpush1.msra.mxu0 0.0
    %1374 = vmatprep.subr.mxu0 0.0
    %1375 = vmatpush1.msra.mxu0 0.0
    %1376 = vmatprep.subr.mxu0 0.0
    %1377 = vmatpush1.msra.mxu0 0.0
    %1378 = vmatprep.subr.mxu0 0.0
    %1379 = vmatpush1.msra.mxu0 0.0
    %1380 = vmatprep.subr.mxu0 0.0
    %1381 = vmatpush1.msra.mxu0 0.0
    %1382 = vmatprep.subr.mxu0 0.0
    %1383 = vmatpush1.msra.mxu0 0.0
    %1384 = vmatprep.subr.mxu0 0.0
    %1385 = vmatpush1.msra.mxu0 0.0
    %1386 = vmatprep.subr.mxu0 0.0
    %1387 = vmatpush1.msra.mxu0 0.0
    %1388 = vmatprep.subr.mxu0 0.0
    %1389 = vmatpush1.msra.mxu0 0.0
    %1390 = vmatprep.subr.mxu0 0.0
    %1391 = vmatpush1.msra.mxu0 0.0
    %1392 = vmatprep.subr.mxu0 0.0
    %1393 = vmatpush1.msra.mxu0 0.0
    %1394 = vmatprep.subr.mxu0 0.0
    %1395 = vmatpush1.msra.mxu0 0.0
    %1396 = vmatprep.subr.mxu0 0.0
    %1397 = vmatpush1.msra.mxu0 0.0
    %1398 = vmatprep.subr.mxu0 0.0
    %1399 = vmatpush1.msra.mxu0 0.0
    %1400 = vmatprep.subr.mxu0 0.0
    %1401 = vmatpush1.msra.mxu0 0.0
    %1402 = vmatprep.subr.mxu0 0.0
    %1403 = vmatpush1.msra.mxu0 0.0
    %1404 = vmatprep.mubr.f32.mxu0 0.0
    %v1405 = vand.u32 %v1035, 4294901760
    %1406 = vmatmul.mubr.f32.gmra.mrb[0].mxu0 %v1405
    %v1407 = vpop.f32.mrb[0].mxu0
    %v1408 = vadd.f32 %v1334, %v1407
    %v1409 = vpop.f32.mrb[0].mxu0
    %1410 = vdwg.mxu0
    %1411 = vmatprep.subr.mxu0 0.0
    %v1412 = vand.u32 %v35, 4294901760
    %1413 = vmatpush1.msra.mxu0 %v1412
    %1414 = vmatprep.subr.mxu0 0.0
    %1415 = vmatpush1.msra.mxu0 0.0
    %1416 = vmatprep.subr.mxu0 0.0
    %1417 = vmatpush1.msra.mxu0 0.0
    %1418 = vmatprep.subr.mxu0 0.0
    %1419 = vmatpush1.msra.mxu0 0.0
    %1420 = vmatprep.subr.mxu0 0.0
    %1421 = vmatpush1.msra.mxu0 0.0
    %1422 = vmatprep.subr.mxu0 0.0
    %1423 = vmatpush1.msra.mxu0 0.0
    %1424 = vmatprep.subr.mxu0 0.0
    %1425 = vmatpush1.msra.mxu0 0.0
    %1426 = vmatprep.subr.mxu0 0.0
    %1427 = vmatpush1.msra.mxu0 0.0
    %1428 = vmatprep.subr.mxu0 0.0
    %1429 = vmatpush1.msra.mxu0 0.0
    %1430 = vmatprep.subr.mxu0 0.0
    %1431 = vmatpush1.msra.mxu0 0.0
    %1432 = vmatprep.subr.mxu0 0.0
    %1433 = vmatpush1.msra.mxu0 0.0
    %1434 = vmatprep.subr.mxu0 0.0
    %1435 = vmatpush1.msra.mxu0 0.0
    %1436 = vmatprep.subr.mxu0 0.0
    %1437 = vmatpush1.msra.mxu0 0.0
    %1438 = vmatprep.subr.mxu0 0.0
    %1439 = vmatpush1.msra.mxu0 0.0
    %1440 = vmatprep.subr.mxu0 0.0
    %1441 = vmatpush1.msra.mxu0 0.0
    %1442 = vmatprep.subr.mxu0 0.0
    %1443 = vmatpush1.msra.mxu0 0.0
    %1444 = vmatprep.subr.mxu0 0.0
    %1445 = vmatpush1.msra.mxu0 0.0
    %1446 = vmatprep.subr.mxu0 0.0
    %1447 = vmatpush1.msra.mxu0 0.0
    %1448 = vmatprep.subr.mxu0 0.0
    %1449 = vmatpush1.msra.mxu0 0.0
    %1450 = vmatprep.subr.mxu0 0.0
    %1451 = vmatpush1.msra.mxu0 0.0
    %1452 = vmatprep.subr.mxu0 0.0
    %1453 = vmatpush1.msra.mxu0 0.0
    %1454 = vmatprep.subr.mxu0 0.0
    %1455 = vmatpush1.msra.mxu0 0.0
    %1456 = vmatprep.subr.mxu0 0.0
    %1457 = vmatpush1.msra.mxu0 0.0
    %1458 = vmatprep.subr.mxu0 0.0
    %1459 = vmatpush1.msra.mxu0 0.0
    %1460 = vmatprep.subr.mxu0 0.0
    %1461 = vmatpush1.msra.mxu0 0.0
    %1462 = vmatprep.subr.mxu0 0.0
    %1463 = vmatpush1.msra.mxu0 0.0
    %1464 = vmatprep.subr.mxu0 0.0
    %1465 = vmatpush1.msra.mxu0 0.0
    %1466 = vmatprep.subr.mxu0 0.0
    %1467 = vmatpush1.msra.mxu0 0.0
    %1468 = vmatprep.subr.mxu0 0.0
    %1469 = vmatpush1.msra.mxu0 0.0
    %1470 = vmatprep.subr.mxu0 0.0
    %1471 = vmatpush1.msra.mxu0 0.0
    %1472 = vmatprep.subr.mxu0 0.0
    %1473 = vmatpush1.msra.mxu0 0.0
    %1474 = vmatprep.subr.mxu0 0.0
    %1475 = vmatpush1.msra.mxu0 0.0
    %1476 = vmatprep.mubr.f32.mxu0 0.0
    %v1477 = vand.u32 %v1035, 4294901760
    %1478 = vmatmul.mubr.f32.gmra.mrb[0].mxu0 %v1477
    %v1479 = vpop.f32.mrb[0].mxu0
    %v1480 = vadd.f32 %v1408, %v1479
    %v1481 = vpop.f32.mrb[0].mxu0
    %1482 = vdwg.mxu0
    %1483 = vset.pattern.permute.xlu0 0
    %1484 = vperm.xlu0 %1483, %v23
    %v1485 = vpop.permute.xlu0 %1484
    %1486 = vset.pattern.permute.xlu0 0
    %1487 = vperm.xlu0 %1486, %v24
    %v1488 = vpop.permute.xlu0 %1487
    %1489 = vset.pattern.permute.xlu0 0
    %1490 = vperm.xlu0 %1489, %v25
    %v1491 = vpop.permute.xlu0 %1490
    %1492 = vset.pattern.permute.xlu0 0
    %1493 = vperm.xlu0 %1492, %v26
    %v1494 = vpop.permute.xlu0 %1493
    %1495 = vset.pattern.permute.xlu0 0
    %1496 = vperm.xlu0 %1495, %v27
    %v1497 = vpop.permute.xlu0 %1496
    %1498 = vset.pattern.permute.xlu0 0
    %1499 = vperm.xlu0 %1498, %v28
    %v1500 = vpop.permute.xlu0 %1499
    %1501 = vset.pattern.permute.xlu0 0
    %1502 = vperm.xlu0 %1501, %v29
    %v1503 = vpop.permute.xlu0 %1502
    %1504 = vset.pattern.permute.xlu0 0
    %1505 = vperm.xlu0 %1504, %v30
    %v1506 = vpop.permute.xlu0 %1505
    %vm1507 = vcmp.eq.s32.totalorder %v1485, %v37
    %vm1508 = vcmp.eq.s32.totalorder %v1488, %v37
    %vm1509 = vcmp.eq.s32.totalorder %v1491, %v37
    %vm1510 = vcmp.eq.s32.totalorder %v1494, %v37
    %vm1511 = vcmp.eq.s32.totalorder %v1497, %v37
    %vm1512 = vcmp.eq.s32.totalorder %v1500, %v37
    %vm1513 = vcmp.eq.s32.totalorder %v1503, %v37
    %vm1514 = vcmp.eq.s32.totalorder %v1506, %v37
    %v1515 = vsel %vm1507, 1, 0
    %v1516 = vsel %vm1508, 1, 0
    %v1517 = vsel %vm1509, 1, 0
    %v1518 = vsel %vm1510, 1, 0
    %v1519 = vsel %vm1511, 1, 0
    %v1520 = vsel %vm1512, 1, 0
    %v1521 = vsel %vm1513, 1, 0
    %v1522 = vsel %vm1514, 1, 0
    %v1523 = vcvt.s32.f32 %v1515
    %v1524 = vcvt.s32.f32 %v1516
    %v1525 = vcvt.s32.f32 %v1517
    %v1526 = vcvt.s32.f32 %v1518
    %v1527 = vcvt.s32.f32 %v1519
    %v1528 = vcvt.s32.f32 %v1520
    %v1529 = vcvt.s32.f32 %v1521
    %v1530 = vcvt.s32.f32 %v1522
    %v1532 = vsel %vm44, %v1523, 0
    %v1535 = vsel %vm44, %v1524, 0
    %v1538 = vsel %vm44, %v1525, 0
    %v1541 = vsel %vm44, %v1526, 0
    %v1544 = vsel %vm44, %v1527, 0
    %v1547 = vsel %vm44, %v1528, 0
    %v1550 = vsel %vm44, %v1529, 0
    %v1553 = vsel %vm44, %v1530, 0
    %1555 = vmatprep.subr.mxu0 0.0
    %v1556 = vand.u32 %v31, 4294901760
    %1557 = vmatpush1.msra.mxu0 %v1556
    %1558 = vmatprep.subr.mxu0 0.0
    %v1559 = vand.u32 %v32, 4294901760
    %1560 = vmatpush1.msra.mxu0 %v1559
    %1561 = vmatprep.subr.mxu0 0.0
    %v1562 = vand.u32 %v33, 4294901760
    %1563 = vmatpush1.msra.mxu0 %v1562
    %1564 = vmatprep.subr.mxu0 0.0
    %v1565 = vand.u32 %v34, 4294901760
    %1566 = vmatpush1.msra.mxu0 %v1565
    %1567 = vmatprep.subr.mxu0 0.0
    %1568 = vmatpush1.msra.mxu0 0.0
    %1569 = vmatprep.subr.mxu0 0.0
    %1570 = vmatpush1.msra.mxu0 0.0
    %1571 = vmatprep.subr.mxu0 0.0
    %1572 = vmatpush1.msra.mxu0 0.0
    %1573 = vmatprep.subr.mxu0 0.0
    %1574 = vmatpush1.msra.mxu0 0.0
    %1575 = vmatprep.subr.mxu0 0.0
    %1576 = vmatpush1.msra.mxu0 0.0
    %1577 = vmatprep.subr.mxu0 0.0
    %1578 = vmatpush1.msra.mxu0 0.0
    %1579 = vmatprep.subr.mxu0 0.0
    %1580 = vmatpush1.msra.mxu0 0.0
    %1581 = vmatprep.subr.mxu0 0.0
    %1582 = vmatpush1.msra.mxu0 0.0
    %1583 = vmatprep.subr.mxu0 0.0
    %1584 = vmatpush1.msra.mxu0 0.0
    %1585 = vmatprep.subr.mxu0 0.0
    %1586 = vmatpush1.msra.mxu0 0.0
    %1587 = vmatprep.subr.mxu0 0.0
    %1588 = vmatpush1.msra.mxu0 0.0
    %1589 = vmatprep.subr.mxu0 0.0
    %1590 = vmatpush1.msra.mxu0 0.0
    %1591 = vmatprep.subr.mxu0 0.0
    %1592 = vmatpush1.msra.mxu0 0.0
    %1593 = vmatprep.subr.mxu0 0.0
    %1594 = vmatpush1.msra.mxu0 0.0
    %1595 = vmatprep.subr.mxu0 0.0
    %1596 = vmatpush1.msra.mxu0 0.0
    %1597 = vmatprep.subr.mxu0 0.0
    %1598 = vmatpush1.msra.mxu0 0.0
    %1599 = vmatprep.subr.mxu0 0.0
    %1600 = vmatpush1.msra.mxu0 0.0
    %1601 = vmatprep.subr.mxu0 0.0
    %1602 = vmatpush1.msra.mxu0 0.0
    %1603 = vmatprep.subr.mxu0 0.0
    %1604 = vmatpush1.msra.mxu0 0.0
    %1605 = vmatprep.subr.mxu0 0.0
    %1606 = vmatpush1.msra.mxu0 0.0
    %1607 = vmatprep.subr.mxu0 0.0
    %1608 = vmatpush1.msra.mxu0 0.0
    %1609 = vmatprep.subr.mxu0 0.0
    %1610 = vmatpush1.msra.mxu0 0.0
    %1611 = vmatprep.subr.mxu0 0.0
    %1612 = vmatpush1.msra.mxu0 0.0
    %1613 = vmatprep.subr.mxu0 0.0
    %1614 = vmatpush1.msra.mxu0 0.0
    %1615 = vmatprep.subr.mxu0 0.0
    %1616 = vmatpush1.msra.mxu0 0.0
    %1617 = vmatprep.subr.mxu0 0.0
    %1618 = vmatpush1.msra.mxu0 0.0
    %1619 = vmatprep.subr.mxu0 0.0
    %1620 = vmatpush1.msra.mxu0 0.0
    %1621 = vmatprep.subr.mxu0 0.0
    %1622 = vmatpush1.msra.mxu0 0.0
    %1623 = vmatprep.mubr.f32.mxu0 0.0
    %v1624 = vand.u32 %v1532, 4294901760
    %v1625 = vsub.f32 %v1532, %v1624
    %v1626 = vand.u32 %v1625, 4294901760
    %v1627 = vsub.f32 %v1625, %v1626
    %v1628 = vand.u32 %v1627, 4294901760
    %1629 = vmatmul.mubr.f32.gmra.mrb[0].mxu0 %v1628
    %v1630 = vpop.f32.mrb[0].mxu0
    %v1631 = vadd.f32 0.0, %v1630
    %v1632 = vpop.f32.mrb[0].mxu0
    %1633 = vmatprep.mubr.f32.mxu0 0.0
    %v1634 = vand.u32 %v1535, 4294901760
    %v1635 = vsub.f32 %v1535, %v1634
    %v1636 = vand.u32 %v1635, 4294901760
    %v1637 = vsub.f32 %v1635, %v1636
    %v1638 = vand.u32 %v1637, 4294901760
    %1639 = vmatmul.mubr.f32.gmra.mrb[0].mxu0 %v1638
    %v1640 = vpop.f32.mrb[0].mxu0
    %v1641 = vadd.f32 0.0, %v1640
    %v1642 = vpop.f32.mrb[0].mxu0
    %1643 = vmatprep.mubr.f32.mxu0 0.0
    %v1644 = vand.u32 %v1538, 4294901760
    %v1645 = vsub.f32 %v1538, %v1644
    %v1646 = vand.u32 %v1645, 4294901760
    %v1647 = vsub.f32 %v1645, %v1646
    %v1648 = vand.u32 %v1647, 4294901760
    %1649 = vmatmul.mubr.f32.gmra.mrb[0].mxu0 %v1648
    %v1650 = vpop.f32.mrb[0].mxu0
    %v1651 = vadd.f32 0.0, %v1650
    %v1652 = vpop.f32.mrb[0].mxu0
    %1653 = vmatprep.mubr.f32.mxu0 0.0
    %v1654 = vand.u32 %v1541, 4294901760
    %v1655 = vsub.f32 %v1541, %v1654
    %v1656 = vand.u32 %v1655, 4294901760
    %v1657 = vsub.f32 %v1655, %v1656
    %v1658 = vand.u32 %v1657, 4294901760
    %1659 = vmatmul.mubr.f32.gmra.mrb[0].mxu0 %v1658
    %v1660 = vpop.f32.mrb[0].mxu0
    %v1661 = vadd.f32 0.0, %v1660
    %v1662 = vpop.f32.mrb[0].mxu0
    %1663 = vmatprep.mubr.f32.mxu0 0.0
    %v1664 = vand.u32 %v1544, 4294901760
    %v1665 = vsub.f32 %v1544, %v1664
    %v1666 = vand.u32 %v1665, 4294901760
    %v1667 = vsub.f32 %v1665, %v1666
    %v1668 = vand.u32 %v1667, 4294901760
    %1669 = vmatmul.mubr.f32.gmra.mrb[0].mxu0 %v1668
    %v1670 = vpop.f32.mrb[0].mxu0
    %v1671 = vadd.f32 0.0, %v1670
    %v1672 = vpop.f32.mrb[0].mxu0
    %1673 = vmatprep.mubr.f32.mxu0 0.0
    %v1674 = vand.u32 %v1547, 4294901760
    %v1675 = vsub.f32 %v1547, %v1674
    %v1676 = vand.u32 %v1675, 4294901760
    %v1677 = vsub.f32 %v1675, %v1676
    %v1678 = vand.u32 %v1677, 4294901760
    %1679 = vmatmul.mubr.f32.gmra.mrb[0].mxu0 %v1678
    %v1680 = vpop.f32.mrb[0].mxu0
    %v1681 = vadd.f32 0.0, %v1680
    %v1682 = vpop.f32.mrb[0].mxu0
    %1683 = vmatprep.mubr.f32.mxu0 0.0
    %v1684 = vand.u32 %v1550, 4294901760
    %v1685 = vsub.f32 %v1550, %v1684
    %v1686 = vand.u32 %v1685, 4294901760
    %v1687 = vsub.f32 %v1685, %v1686
    %v1688 = vand.u32 %v1687, 4294901760
    %1689 = vmatmul.mubr.f32.gmra.mrb[0].mxu0 %v1688
    %v1690 = vpop.f32.mrb[0].mxu0
    %v1691 = vadd.f32 0.0, %v1690
    %v1692 = vpop.f32.mrb[0].mxu0
    %1693 = vmatprep.mubr.f32.mxu0 0.0
    %v1694 = vand.u32 %v1553, 4294901760
    %v1695 = vsub.f32 %v1553, %v1694
    %v1696 = vand.u32 %v1695, 4294901760
    %v1697 = vsub.f32 %v1695, %v1696
    %v1698 = vand.u32 %v1697, 4294901760
    %1699 = vmatmul.mubr.f32.gmra.mrb[0].mxu0 %v1698
    %v1700 = vpop.f32.mrb[0].mxu0
    %v1701 = vadd.f32 0.0, %v1700
    %v1702 = vpop.f32.mrb[0].mxu0
    %1703 = vdwg.mxu0
    %1704 = vmatprep.subr.mxu0 0.0
    %v1705 = vand.u32 %v31, 4294901760
    %v1706 = vsub.f32 %v31, %v1705
    %v1707 = vand.u32 %v1706, 4294901760
    %v1708 = vsub.f32 %v1706, %v1707
    %v1709 = vand.u32 %v1708, 4294901760
    %1710 = vmatpush1.msra.mxu0 %v1709
    %1711 = vmatprep.subr.mxu0 0.0
    %v1712 = vand.u32 %v32, 4294901760
    %v1713 = vsub.f32 %v32, %v1712
    %v1714 = vand.u32 %v1713, 4294901760
    %v1715 = vsub.f32 %v1713, %v1714
    %v1716 = vand.u32 %v1715, 4294901760
    %1717 = vmatpush1.msra.mxu0 %v1716
    %1718 = vmatprep.subr.mxu0 0.0
    %v1719 = vand.u32 %v33, 4294901760
    %v1720 = vsub.f32 %v33, %v1719
    %v1721 = vand.u32 %v1720, 4294901760
    %v1722 = vsub.f32 %v1720, %v1721
    %v1723 = vand.u32 %v1722, 4294901760
    %1724 = vmatpush1.msra.mxu0 %v1723
    %1725 = vmatprep.subr.mxu0 0.0
    %v1726 = vand.u32 %v34, 4294901760
    %v1727 = vsub.f32 %v34, %v1726
    %v1728 = vand.u32 %v1727, 4294901760
    %v1729 = vsub.f32 %v1727, %v1728
    %v1730 = vand.u32 %v1729, 4294901760
    %1731 = vmatpush1.msra.mxu0 %v1730
    %1732 = vmatprep.subr.mxu0 0.0
    %1733 = vmatpush1.msra.mxu0 0.0
    %1734 = vmatprep.subr.mxu0 0.0
    %1735 = vmatpush1.msra.mxu0 0.0
    %1736 = vmatprep.subr.mxu0 0.0
    %1737 = vmatpush1.msra.mxu0 0.0
    %1738 = vmatprep.subr.mxu0 0.0
    %1739 = vmatpush1.msra.mxu0 0.0
    %1740 = vmatprep.subr.mxu0 0.0
    %1741 = vmatpush1.msra.mxu0 0.0
    %1742 = vmatprep.subr.mxu0 0.0
    %1743 = vmatpush1.msra.mxu0 0.0
    %1744 = vmatprep.subr.mxu0 0.0
    %1745 = vmatpush1.msra.mxu0 0.0
    %1746 = vmatprep.subr.mxu0 0.0
    %1747 = vmatpush1.msra.mxu0 0.0
    %1748 = vmatprep.subr.mxu0 0.0
    %1749 = vmatpush1.msra.mxu0 0.0
    %1750 = vmatprep.subr.mxu0 0.0
    %1751 = vmatpush1.msra.mxu0 0.0
    %1752 = vmatprep.subr.mxu0 0.0
    %1753 = vmatpush1.msra.mxu0 0.0
    %1754 = vmatprep.subr.mxu0 0.0
    %1755 = vmatpush1.msra.mxu0 0.0
    %1756 = vmatprep.subr.mxu0 0.0
    %1757 = vmatpush1.msra.mxu0 0.0
    %1758 = vmatprep.subr.mxu0 0.0
    %1759 = vmatpush1.msra.mxu0 0.0
    %1760 = vmatprep.subr.mxu0 0.0
    %1761 = vmatpush1.msra.mxu0 0.0
    %1762 = vmatprep.subr.mxu0 0.0
    %1763 = vmatpush1.msra.mxu0 0.0
    %1764 = vmatprep.subr.mxu0 0.0
    %1765 = vmatpush1.msra.mxu0 0.0
    %1766 = vmatprep.subr.mxu0 0.0
    %1767 = vmatpush1.msra.mxu0 0.0
    %1768 = vmatprep.subr.mxu0 0.0
    %1769 = vmatpush1.msra.mxu0 0.0
    %1770 = vmatprep.subr.mxu0 0.0
    %1771 = vmatpush1.msra.mxu0 0.0
    %1772 = vmatprep.subr.mxu0 0.0
    %1773 = vmatpush1.msra.mxu0 0.0
    %1774 = vmatprep.subr.mxu0 0.0
    %1775 = vmatpush1.msra.mxu0 0.0
    %1776 = vmatprep.subr.mxu0 0.0
    %1777 = vmatpush1.msra.mxu0 0.0
    %1778 = vmatprep.subr.mxu0 0.0
    %1779 = vmatpush1.msra.mxu0 0.0
    %1780 = vmatprep.subr.mxu0 0.0
    %1781 = vmatpush1.msra.mxu0 0.0
    %1782 = vmatprep.subr.mxu0 0.0
    %1783 = vmatpush1.msra.mxu0 0.0
    %1784 = vmatprep.subr.mxu0 0.0
    %1785 = vmatpush1.msra.mxu0 0.0
    %1786 = vmatprep.subr.mxu0 0.0
    %1787 = vmatpush1.msra.mxu0 0.0
    %1788 = vmatprep.mubr.f32.mxu0 0.0
    %v1789 = vand.u32 %v1532, 4294901760
    %1790 = vmatmul.mubr.f32.gmra.mrb[0].mxu0 %v1789
    %v1791 = vpop.f32.mrb[0].mxu0
    %v1792 = vadd.f32 %v1631, %v1791
    %v1793 = vpop.f32.mrb[0].mxu0
    %1794 = vmatprep.mubr.f32.mxu0 0.0
    %v1795 = vand.u32 %v1535, 4294901760
    %1796 = vmatmul.mubr.f32.gmra.mrb[0].mxu0 %v1795
    %v1797 = vpop.f32.mrb[0].mxu0
    %v1798 = vadd.f32 %v1641, %v1797
    %v1799 = vpop.f32.mrb[0].mxu0
    %1800 = vmatprep.mubr.f32.mxu0 0.0
    %v1801 = vand.u32 %v1538, 4294901760
    %1802 = vmatmul.mubr.f32.gmra.mrb[0].mxu0 %v1801
    %v1803 = vpop.f32.mrb[0].mxu0
    %v1804 = vadd.f32 %v1651, %v1803
    %v1805 = vpop.f32.mrb[0].mxu0
    %1806 = vmatprep.mubr.f32.mxu0 0.0
    %v1807 = vand.u32 %v1541, 4294901760
    %1808 = vmatmul.mubr.f32.gmra.mrb[0].mxu0 %v1807
    %v1809 = vpop.f32.mrb[0].mxu0
    %v1810 = vadd.f32 %v1661, %v1809
    %v1811 = vpop.f32.mrb[0].mxu0
    %1812 = vmatprep.mubr.f32.mxu0 0.0
    %v1813 = vand.u32 %v1544, 4294901760
    %1814 = vmatmul.mubr.f32.gmra.mrb[0].mxu0 %v1813
    %v1815 = vpop.f32.mrb[0].mxu0
    %v1816 = vadd.f32 %v1671, %v1815
    %v1817 = vpop.f32.mrb[0].mxu0
    %1818 = vmatprep.mubr.f32.mxu0 0.0
    %v1819 = vand.u32 %v1547, 4294901760
    %1820 = vmatmul.mubr.f32.gmra.mrb[0].mxu0 %v1819
    %v1821 = vpop.f32.mrb[0].mxu0
    %v1822 = vadd.f32 %v1681, %v1821
    %v1823 = vpop.f32.mrb[0].mxu0
    %1824 = vmatprep.mubr.f32.mxu0 0.0
    %v1825 = vand.u32 %v1550, 4294901760
    %1826 = vmatmul.mubr.f32.gmra.mrb[0].mxu0 %v1825
    %v1827 = vpop.f32.mrb[0].mxu0
    %v1828 = vadd.f32 %v1691, %v1827
    %v1829 = vpop.f32.mrb[0].mxu0
    %1830 = vmatprep.mubr.f32.mxu0 0.0
    %v1831 = vand.u32 %v1553, 4294901760
    %1832 = vmatmul.mubr.f32.gmra.mrb[0].mxu0 %v1831
    %v1833 = vpop.f32.mrb[0].mxu0
    %v1834 = vadd.f32 %v1701, %v1833
    %v1835 = vpop.f32.mrb[0].mxu0
    %1836 = vdwg.mxu0
    %1837 = vmatprep.subr.mxu0 0.0
    %v1838 = vand.u32 %v31, 4294901760
    %v1839 = vsub.f32 %v31, %v1838
    %1840 = vmatpush1.msra.mxu0 %v1839
    %1841 = vmatprep.subr.mxu0 0.0
    %v1842 = vand.u32 %v32, 4294901760
    %v1843 = vsub.f32 %v32, %v1842
    %1844 = vmatpush1.msra.mxu0 %v1843
    %1845 = vmatprep.subr.mxu0 0.0
    %v1846 = vand.u32 %v33, 4294901760
    %v1847 = vsub.f32 %v33, %v1846
    %1848 = vmatpush1.msra.mxu0 %v1847
    %1849 = vmatprep.subr.mxu0 0.0
    %v1850 = vand.u32 %v34, 4294901760
    %v1851 = vsub.f32 %v34, %v1850
    %1852 = vmatpush1.msra.mxu0 %v1851
    %1853 = vmatprep.subr.mxu0 0.0
    %1854 = vmatpush1.msra.mxu0 0.0
    %1855 = vmatprep.subr.mxu0 0.0
    %1856 = vmatpush1.msra.mxu0 0.0
    %1857 = vmatprep.subr.mxu0 0.0
    %1858 = vmatpush1.msra.mxu0 0.0
    %1859 = vmatprep.subr.mxu0 0.0
    %1860 = vmatpush1.msra.mxu0 0.0
    %1861 = vmatprep.subr.mxu0 0.0
    %1862 = vmatpush1.msra.mxu0 0.0
    %1863 = vmatprep.subr.mxu0 0.0
    %1864 = vmatpush1.msra.mxu0 0.0
    %1865 = vmatprep.subr.mxu0 0.0
    %1866 = vmatpush1.msra.mxu0 0.0
    %1867 = vmatprep.subr.mxu0 0.0
    %1868 = vmatpush1.msra.mxu0 0.0
    %1869 = vmatprep.subr.mxu0 0.0
    %1870 = vmatpush1.msra.mxu0 0.0
    %1871 = vmatprep.subr.mxu0 0.0
    %1872 = vmatpush1.msra.mxu0 0.0
    %1873 = vmatprep.subr.mxu0 0.0
    %1874 = vmatpush1.msra.mxu0 0.0
    %1875 = vmatprep.subr.mxu0 0.0
    %1876 = vmatpush1.msra.mxu0 0.0
    %1877 = vmatprep.subr.mxu0 0.0
    %1878 = vmatpush1.msra.mxu0 0.0
    %1879 = vmatprep.subr.mxu0 0.0
    %1880 = vmatpush1.msra.mxu0 0.0
    %1881 = vmatprep.subr.mxu0 0.0
    %1882 = vmatpush1.msra.mxu0 0.0
    %1883 = vmatprep.subr.mxu0 0.0
    %1884 = vmatpush1.msra.mxu0 0.0
    %1885 = vmatprep.subr.mxu0 0.0
    %1886 = vmatpush1.msra.mxu0 0.0
    %1887 = vmatprep.subr.mxu0 0.0
    %1888 = vmatpush1.msra.mxu0 0.0
    %1889 = vmatprep.subr.mxu0 0.0
    %1890 = vmatpush1.msra.mxu0 0.0
    %1891 = vmatprep.subr.mxu0 0.0
    %1892 = vmatpush1.msra.mxu0 0.0
    %1893 = vmatprep.subr.mxu0 0.0
    %1894 = vmatpush1.msra.mxu0 0.0
    %1895 = vmatprep.subr.mxu0 0.0
    %1896 = vmatpush1.msra.mxu0 0.0
    %1897 = vmatprep.subr.mxu0 0.0
    %1898 = vmatpush1.msra.mxu0 0.0
    %1899 = vmatprep.subr.mxu0 0.0
    %1900 = vmatpush1.msra.mxu0 0.0
    %1901 = vmatprep.subr.mxu0 0.0
    %1902 = vmatpush1.msra.mxu0 0.0
    %1903 = vmatprep.subr.mxu0 0.0
    %1904 = vmatpush1.msra.mxu0 0.0
    %1905 = vmatprep.subr.mxu0 0.0
    %1906 = vmatpush1.msra.mxu0 0.0
    %1907 = vmatprep.subr.mxu0 0.0
    %1908 = vmatpush1.msra.mxu0 0.0
    %1909 = vmatprep.mubr.f32.mxu0 0.0
    %v1910 = vand.u32 %v1532, 4294901760
    %v1911 = vsub.f32 %v1532, %v1910
    %1912 = vmatmul.mubr.f32.gmra.mrb[0].mxu0 %v1911
    %v1913 = vpop.f32.mrb[0].mxu0
    %v1914 = vadd.f32 %v1792, %v1913
    %v1915 = vpop.f32.mrb[0].mxu0
    %1916 = vmatprep.mubr.f32.mxu0 0.0
    %v1917 = vand.u32 %v1535, 4294901760
    %v1918 = vsub.f32 %v1535, %v1917
    %1919 = vmatmul.mubr.f32.gmra.mrb[0].mxu0 %v1918
    %v1920 = vpop.f32.mrb[0].mxu0
    %v1921 = vadd.f32 %v1798, %v1920
    %v1922 = vpop.f32.mrb[0].mxu0
    %1923 = vmatprep.mubr.f32.mxu0 0.0
    %v1924 = vand.u32 %v1538, 4294901760
    %v1925 = vsub.f32 %v1538, %v1924
    %1926 = vmatmul.mubr.f32.gmra.mrb[0].mxu0 %v1925
    %v1927 = vpop.f32.mrb[0].mxu0
    %v1928 = vadd.f32 %v1804, %v1927
    %v1929 = vpop.f32.mrb[0].mxu0
    %1930 = vmatprep.mubr.f32.mxu0 0.0
    %v1931 = vand.u32 %v1541, 4294901760
    %v1932 = vsub.f32 %v1541, %v1931
    %1933 = vmatmul.mubr.f32.gmra.mrb[0].mxu0 %v1932
    %v1934 = vpop.f32.mrb[0].mxu0
    %v1935 = vadd.f32 %v1810, %v1934
    %v1936 = vpop.f32.mrb[0].mxu0
    %1937 = vmatprep.mubr.f32.mxu0 0.0
    %v1938 = vand.u32 %v1544, 4294901760
    %v1939 = vsub.f32 %v1544, %v1938
    %1940 = vmatmul.mubr.f32.gmra.mrb[0].mxu0 %v1939
    %v1941 = vpop.f32.mrb[0].mxu0
    %v1942 = vadd.f32 %v1816, %v1941
    %v1943 = vpop.f32.mrb[0].mxu0
    %1944 = vmatprep.mubr.f32.mxu0 0.0
    %v1945 = vand.u32 %v1547, 4294901760
    %v1946 = vsub.f32 %v1547, %v1945
    %1947 = vmatmul.mubr.f32.gmra.mrb[0].mxu0 %v1946
    %v1948 = vpop.f32.mrb[0].mxu0
    %v1949 = vadd.f32 %v1822, %v1948
    %v1950 = vpop.f32.mrb[0].mxu0
    %1951 = vmatprep.mubr.f32.mxu0 0.0
    %v1952 = vand.u32 %v1550, 4294901760
    %v1953 = vsub.f32 %v1550, %v1952
    %1954 = vmatmul.mubr.f32.gmra.mrb[0].mxu0 %v1953
    %v1955 = vpop.f32.mrb[0].mxu0
    %v1956 = vadd.f32 %v1828, %v1955
    %v1957 = vpop.f32.mrb[0].mxu0
    %1958 = vmatprep.mubr.f32.mxu0 0.0
    %v1959 = vand.u32 %v1553, 4294901760
    %v1960 = vsub.f32 %v1553, %v1959
    %1961 = vmatmul.mubr.f32.gmra.mrb[0].mxu0 %v1960
    %v1962 = vpop.f32.mrb[0].mxu0
    %v1963 = vadd.f32 %v1834, %v1962
    %v1964 = vpop.f32.mrb[0].mxu0
    %1965 = vdwg.mxu0
    %1966 = vmatprep.subr.mxu0 0.0
    %v1967 = vand.u32 %v31, 4294901760
    %1968 = vmatpush1.msra.mxu0 %v1967
    %1969 = vmatprep.subr.mxu0 0.0
    %v1970 = vand.u32 %v32, 4294901760
    %1971 = vmatpush1.msra.mxu0 %v1970
    %1972 = vmatprep.subr.mxu0 0.0
    %v1973 = vand.u32 %v33, 4294901760
    %1974 = vmatpush1.msra.mxu0 %v1973
    %1975 = vmatprep.subr.mxu0 0.0
    %v1976 = vand.u32 %v34, 4294901760
    %1977 = vmatpush1.msra.mxu0 %v1976
    %1978 = vmatprep.subr.mxu0 0.0
    %1979 = vmatpush1.msra.mxu0 0.0
    %1980 = vmatprep.subr.mxu0 0.0
    %1981 = vmatpush1.msra.mxu0 0.0
    %1982 = vmatprep.subr.mxu0 0.0
    %1983 = vmatpush1.msra.mxu0 0.0
    %1984 = vmatprep.subr.mxu0 0.0
    %1985 = vmatpush1.msra.mxu0 0.0
    %1986 = vmatprep.subr.mxu0 0.0
    %1987 = vmatpush1.msra.mxu0 0.0
    %1988 = vmatprep.subr.mxu0 0.0
    %1989 = vmatpush1.msra.mxu0 0.0
    %1990 = vmatprep.subr.mxu0 0.0
    %1991 = vmatpush1.msra.mxu0 0.0
    %1992 = vmatprep.subr.mxu0 0.0
    %1993 = vmatpush1.msra.mxu0 0.0
    %1994 = vmatprep.subr.mxu0 0.0
    %1995 = vmatpush1.msra.mxu0 0.0
    %1996 = vmatprep.subr.mxu0 0.0
    %1997 = vmatpush1.msra.mxu0 0.0
    %1998 = vmatprep.subr.mxu0 0.0
    %1999 = vmatpush1.msra.mxu0 0.0
    %2000 = vmatprep.subr.mxu0 0.0
    %2001 = vmatpush1.msra.mxu0 0.0
    %2002 = vmatprep.subr.mxu0 0.0
    %2003 = vmatpush1.msra.mxu0 0.0
    %2004 = vmatprep.subr.mxu0 0.0
    %2005 = vmatpush1.msra.mxu0 0.0
    %2006 = vmatprep.subr.mxu0 0.0
    %2007 = vmatpush1.msra.mxu0 0.0
    %2008 = vmatprep.subr.mxu0 0.0
    %2009 = vmatpush1.msra.mxu0 0.0
    %2010 = vmatprep.subr.mxu0 0.0
    %2011 = vmatpush1.msra.mxu0 0.0
    %2012 = vmatprep.subr.mxu0 0.0
    %2013 = vmatpush1.msra.mxu0 0.0
    %2014 = vmatprep.subr.mxu0 0.0
    %2015 = vmatpush1.msra.mxu0 0.0
    %2016 = vmatprep.subr.mxu0 0.0
    %2017 = vmatpush1.msra.mxu0 0.0
    %2018 = vmatprep.subr.mxu0 0.0
    %2019 = vmatpush1.msra.mxu0 0.0
    %2020 = vmatprep.subr.mxu0 0.0
    %2021 = vmatpush1.msra.mxu0 0.0
    %2022 = vmatprep.subr.mxu0 0.0
    %2023 = vmatpush1.msra.mxu0 0.0
    %2024 = vmatprep.subr.mxu0 0.0
    %2025 = vmatpush1.msra.mxu0 0.0
    %2026 = vmatprep.subr.mxu0 0.0
    %2027 = vmatpush1.msra.mxu0 0.0
    %2028 = vmatprep.subr.mxu0 0.0
    %2029 = vmatpush1.msra.mxu0 0.0
    %2030 = vmatprep.subr.mxu0 0.0
    %2031 = vmatpush1.msra.mxu0 0.0
    %2032 = vmatprep.subr.mxu0 0.0
    %2033 = vmatpush1.msra.mxu0 0.0
    %2034 = vmatprep.mubr.f32.mxu0 0.0
    %v2035 = vand.u32 %v1532, 4294901760
    %v2036 = vsub.f32 %v1532, %v2035
    %v2037 = vand.u32 %v2036, 4294901760
    %2038 = vmatmul.mubr.f32.gmra.mrb[0].mxu0 %v2037
    %v2039 = vpop.f32.mrb[0].mxu0
    %v2040 = vadd.f32 %v1914, %v2039
    %v2041 = vpop.f32.mrb[0].mxu0
    %2042 = vmatprep.mubr.f32.mxu0 0.0
    %v2043 = vand.u32 %v1535, 4294901760
    %v2044 = vsub.f32 %v1535, %v2043
    %v2045 = vand.u32 %v2044, 4294901760
    %2046 = vmatmul.mubr.f32.gmra.mrb[0].mxu0 %v2045
    %v2047 = vpop.f32.mrb[0].mxu0
    %v2048 = vadd.f32 %v1921, %v2047
    %v2049 = vpop.f32.mrb[0].mxu0
    %2050 = vmatprep.mubr.f32.mxu0 0.0
    %v2051 = vand.u32 %v1538, 4294901760
    %v2052 = vsub.f32 %v1538, %v2051
    %v2053 = vand.u32 %v2052, 4294901760
    %2054 = vmatmul.mubr.f32.gmra.mrb[0].mxu0 %v2053
    %v2055 = vpop.f32.mrb[0].mxu0
    %v2056 = vadd.f32 %v1928, %v2055
    %v2057 = vpop.f32.mrb[0].mxu0
    %2058 = vmatprep.mubr.f32.mxu0 0.0
    %v2059 = vand.u32 %v1541, 4294901760
    %v2060 = vsub.f32 %v1541, %v2059
    %v2061 = vand.u32 %v2060, 4294901760
    %2062 = vmatmul.mubr.f32.gmra.mrb[0].mxu0 %v2061
    %v2063 = vpop.f32.mrb[0].mxu0
    %v2064 = vadd.f32 %v1935, %v2063
    %v2065 = vpop.f32.mrb[0].mxu0
    %2066 = vmatprep.mubr.f32.mxu0 0.0
    %v2067 = vand.u32 %v1544, 4294901760
    %v2068 = vsub.f32 %v1544, %v2067
    %v2069 = vand.u32 %v2068, 4294901760
    %2070 = vmatmul.mubr.f32.gmra.mrb[0].mxu0 %v2069
    %v2071 = vpop.f32.mrb[0].mxu0
    %v2072 = vadd.f32 %v1942, %v2071
    %v2073 = vpop.f32.mrb[0].mxu0
    %2074 = vmatprep.mubr.f32.mxu0 0.0
    %v2075 = vand.u32 %v1547, 4294901760
    %v2076 = vsub.f32 %v1547, %v2075
    %v2077 = vand.u32 %v2076, 4294901760
    %2078 = vmatmul.mubr.f32.gmra.mrb[0].mxu0 %v2077
    %v2079 = vpop.f32.mrb[0].mxu0
    %v2080 = vadd.f32 %v1949, %v2079
    %v2081 = vpop.f32.mrb[0].mxu0
    %2082 = vmatprep.mubr.f32.mxu0 0.0
    %v2083 = vand.u32 %v1550, 4294901760
    %v2084 = vsub.f32 %v1550, %v2083
    %v2085 = vand.u32 %v2084, 4294901760
    %2086 = vmatmul.mubr.f32.gmra.mrb[0].mxu0 %v2085
    %v2087 = vpop.f32.mrb[0].mxu0
    %v2088 = vadd.f32 %v1956, %v2087
    %v2089 = vpop.f32.mrb[0].mxu0
    %2090 = vmatprep.mubr.f32.mxu0 0.0
    %v2091 = vand.u32 %v1553, 4294901760
    %v2092 = vsub.f32 %v1553, %v2091
    %v2093 = vand.u32 %v2092, 4294901760
    %2094 = vmatmul.mubr.f32.gmra.mrb[0].mxu0 %v2093
    %v2095 = vpop.f32.mrb[0].mxu0
    %v2096 = vadd.f32 %v1963, %v2095
    %v2097 = vpop.f32.mrb[0].mxu0
    %2098 = vdwg.mxu0
    %2099 = vmatprep.subr.mxu0 0.0
    %v2100 = vand.u32 %v31, 4294901760
    %v2101 = vsub.f32 %v31, %v2100
    %v2102 = vand.u32 %v2101, 4294901760
    %2103 = vmatpush1.msra.mxu0 %v2102
    %2104 = vmatprep.subr.mxu0 0.0
    %v2105 = vand.u32 %v32, 4294901760
    %v2106 = vsub.f32 %v32, %v2105
    %v2107 = vand.u32 %v2106, 4294901760
    %2108 = vmatpush1.msra.mxu0 %v2107
    %2109 = vmatprep.subr.mxu0 0.0
    %v2110 = vand.u32 %v33, 4294901760
    %v2111 = vsub.f32 %v33, %v2110
    %v2112 = vand.u32 %v2111, 4294901760
    %2113 = vmatpush1.msra.mxu0 %v2112
    %2114 = vmatprep.subr.mxu0 0.0
    %v2115 = vand.u32 %v34, 4294901760
    %v2116 = vsub.f32 %v34, %v2115
    %v2117 = vand.u32 %v2116, 4294901760
    %2118 = vmatpush1.msra.mxu0 %v2117
    %2119 = vmatprep.subr.mxu0 0.0
    %2120 = vmatpush1.msra.mxu0 0.0
    %2121 = vmatprep.subr.mxu0 0.0
    %2122 = vmatpush1.msra.mxu0 0.0
    %2123 = vmatprep.subr.mxu0 0.0
    %2124 = vmatpush1.msra.mxu0 0.0
    %2125 = vmatprep.subr.mxu0 0.0
    %2126 = vmatpush1.msra.mxu0 0.0
    %2127 = vmatprep.subr.mxu0 0.0
    %2128 = vmatpush1.msra.mxu0 0.0
    %2129 = vmatprep.subr.mxu0 0.0
    %2130 = vmatpush1.msra.mxu0 0.0
    %2131 = vmatprep.subr.mxu0 0.0
    %2132 = vmatpush1.msra.mxu0 0.0
    %2133 = vmatprep.subr.mxu0 0.0
    %2134 = vmatpush1.msra.mxu0 0.0
    %2135 = vmatprep.subr.mxu0 0.0
    %2136 = vmatpush1.msra.mxu0 0.0
    %2137 = vmatprep.subr.mxu0 0.0
    %2138 = vmatpush1.msra.mxu0 0.0
    %2139 = vmatprep.subr.mxu0 0.0
    %2140 = vmatpush1.msra.mxu0 0.0
    %2141 = vmatprep.subr.mxu0 0.0
    %2142 = vmatpush1.msra.mxu0 0.0
    %2143 = vmatprep.subr.mxu0 0.0
    %2144 = vmatpush1.msra.mxu0 0.0
    %2145 = vmatprep.subr.mxu0 0.0
    %2146 = vmatpush1.msra.mxu0 0.0
    %2147 = vmatprep.subr.mxu0 0.0
    %2148 = vmatpush1.msra.mxu0 0.0
    %2149 = vmatprep.subr.mxu0 0.0
    %2150 = vmatpush1.msra.mxu0 0.0
    %2151 = vmatprep.subr.mxu0 0.0
    %2152 = vmatpush1.msra.mxu0 0.0
    %2153 = vmatprep.subr.mxu0 0.0
    %2154 = vmatpush1.msra.mxu0 0.0
    %2155 = vmatprep.subr.mxu0 0.0
    %2156 = vmatpush1.msra.mxu0 0.0
    %2157 = vmatprep.subr.mxu0 0.0
    %2158 = vmatpush1.msra.mxu0 0.0
    %2159 = vmatprep.subr.mxu0 0.0
    %2160 = vmatpush1.msra.mxu0 0.0
    %2161 = vmatprep.subr.mxu0 0.0
    %2162 = vmatpush1.msra.mxu0 0.0
    %2163 = vmatprep.subr.mxu0 0.0
    %2164 = vmatpush1.msra.mxu0 0.0
    %2165 = vmatprep.subr.mxu0 0.0
    %2166 = vmatpush1.msra.mxu0 0.0
    %2167 = vmatprep.subr.mxu0 0.0
    %2168 = vmatpush1.msra.mxu0 0.0
    %2169 = vmatprep.subr.mxu0 0.0
    %2170 = vmatpush1.msra.mxu0 0.0
    %2171 = vmatprep.subr.mxu0 0.0
    %2172 = vmatpush1.msra.mxu0 0.0
    %2173 = vmatprep.subr.mxu0 0.0
    %2174 = vmatpush1.msra.mxu0 0.0
    %2175 = vmatprep.mubr.f32.mxu0 0.0
    %v2176 = vand.u32 %v1532, 4294901760
    %2177 = vmatmul.mubr.f32.gmra.mrb[0].mxu0 %v2176
    %v2178 = vpop.f32.mrb[0].mxu0
    %v2179 = vadd.f32 %v2040, %v2178
    %v2180 = vpop.f32.mrb[0].mxu0
    %2181 = vmatprep.mubr.f32.mxu0 0.0
    %v2182 = vand.u32 %v1535, 4294901760
    %2183 = vmatmul.mubr.f32.gmra.mrb[0].mxu0 %v2182
    %v2184 = vpop.f32.mrb[0].mxu0
    %v2185 = vadd.f32 %v2048, %v2184
    %v2186 = vpop.f32.mrb[0].mxu0
    %2187 = vmatprep.mubr.f32.mxu0 0.0
    %v2188 = vand.u32 %v1538, 4294901760
    %2189 = vmatmul.mubr.f32.gmra.mrb[0].mxu0 %v2188
    %v2190 = vpop.f32.mrb[0].mxu0
    %v2191 = vadd.f32 %v2056, %v2190
    %v2192 = vpop.f32.mrb[0].mxu0
    %2193 = vmatprep.mubr.f32.mxu0 0.0
    %v2194 = vand.u32 %v1541, 4294901760
    %2195 = vmatmul.mubr.f32.gmra.mrb[0].mxu0 %v2194
    %v2196 = vpop.f32.mrb[0].mxu0
    %v2197 = vadd.f32 %v2064, %v2196
    %v2198 = vpop.f32.mrb[0].mxu0
    %2199 = vmatprep.mubr.f32.mxu0 0.0
    %v2200 = vand.u32 %v1544, 4294901760
    %2201 = vmatmul.mubr.f32.gmra.mrb[0].mxu0 %v2200
    %v2202 = vpop.f32.mrb[0].mxu0
    %v2203 = vadd.f32 %v2072, %v2202
    %v2204 = vpop.f32.mrb[0].mxu0
    %2205 = vmatprep.mubr.f32.mxu0 0.0
    %v2206 = vand.u32 %v1547, 4294901760
    %2207 = vmatmul.mubr.f32.gmra.mrb[0].mxu0 %v2206
    %v2208 = vpop.f32.mrb[0].mxu0
    %v2209 = vadd.f32 %v2080, %v2208
    %v2210 = vpop.f32.mrb[0].mxu0
    %2211 = vmatprep.mubr.f32.mxu0 0.0
    %v2212 = vand.u32 %v1550, 4294901760
    %2213 = vmatmul.mubr.f32.gmra.mrb[0].mxu0 %v2212
    %v2214 = vpop.f32.mrb[0].mxu0
    %v2215 = vadd.f32 %v2088, %v2214
    %v2216 = vpop.f32.mrb[0].mxu0
    %2217 = vmatprep.mubr.f32.mxu0 0.0
    %v2218 = vand.u32 %v1553, 4294901760
    %2219 = vmatmul.mubr.f32.gmra.mrb[0].mxu0 %v2218
    %v2220 = vpop.f32.mrb[0].mxu0
    %v2221 = vadd.f32 %v2096, %v2220
    %v2222 = vpop.f32.mrb[0].mxu0
    %2223 = vdwg.mxu0
    %2224 = vmatprep.subr.mxu0 0.0
    %v2225 = vand.u32 %v31, 4294901760
    %2226 = vmatpush1.msra.mxu0 %v2225
    %2227 = vmatprep.subr.mxu0 0.0
    %v2228 = vand.u32 %v32, 4294901760
    %2229 = vmatpush1.msra.mxu0 %v2228
    %2230 = vmatprep.subr.mxu0 0.0
    %v2231 = vand.u32 %v33, 4294901760
    %2232 = vmatpush1.msra.mxu0 %v2231
    %2233 = vmatprep.subr.mxu0 0.0
    %v2234 = vand.u32 %v34, 4294901760
    %2235 = vmatpush1.msra.mxu0 %v2234
    %2236 = vmatprep.subr.mxu0 0.0
    %2237 = vmatpush1.msra.mxu0 0.0
    %2238 = vmatprep.subr.mxu0 0.0
    %2239 = vmatpush1.msra.mxu0 0.0
    %2240 = vmatprep.subr.mxu0 0.0
    %2241 = vmatpush1.msra.mxu0 0.0
    %2242 = vmatprep.subr.mxu0 0.0
    %2243 = vmatpush1.msra.mxu0 0.0
    %2244 = vmatprep.subr.mxu0 0.0
    %2245 = vmatpush1.msra.mxu0 0.0
    %2246 = vmatprep.subr.mxu0 0.0
    %2247 = vmatpush1.msra.mxu0 0.0
    %2248 = vmatprep.subr.mxu0 0.0
    %2249 = vmatpush1.msra.mxu0 0.0
    %2250 = vmatprep.subr.mxu0 0.0
    %2251 = vmatpush1.msra.mxu0 0.0
    %2252 = vmatprep.subr.mxu0 0.0
    %2253 = vmatpush1.msra.mxu0 0.0
    %2254 = vmatprep.subr.mxu0 0.0
    %2255 = vmatpush1.msra.mxu0 0.0
    %2256 = vmatprep.subr.mxu0 0.0
    %2257 = vmatpush1.msra.mxu0 0.0
    %2258 = vmatprep.subr.mxu0 0.0
    %2259 = vmatpush1.msra.mxu0 0.0
    %2260 = vmatprep.subr.mxu0 0.0
    %2261 = vmatpush1.msra.mxu0 0.0
    %2262 = vmatprep.subr.mxu0 0.0
    %2263 = vmatpush1.msra.mxu0 0.0
    %2264 = vmatprep.subr.mxu0 0.0
    %2265 = vmatpush1.msra.mxu0 0.0
    %2266 = vmatprep.subr.mxu0 0.0
    %2267 = vmatpush1.msra.mxu0 0.0
    %2268 = vmatprep.subr.mxu0 0.0
    %2269 = vmatpush1.msra.mxu0 0.0
    %2270 = vmatprep.subr.mxu0 0.0
    %2271 = vmatpush1.msra.mxu0 0.0
    %2272 = vmatprep.subr.mxu0 0.0
    %2273 = vmatpush1.msra.mxu0 0.0
    %2274 = vmatprep.subr.mxu0 0.0
    %2275 = vmatpush1.msra.mxu0 0.0
    %2276 = vmatprep.subr.mxu0 0.0
    %2277 = vmatpush1.msra.mxu0 0.0
    %2278 = vmatprep.subr.mxu0 0.0
    %2279 = vmatpush1.msra.mxu0 0.0
    %2280 = vmatprep.subr.mxu0 0.0
    %2281 = vmatpush1.msra.mxu0 0.0
    %2282 = vmatprep.subr.mxu0 0.0
    %2283 = vmatpush1.msra.mxu0 0.0
    %2284 = vmatprep.subr.mxu0 0.0
    %2285 = vmatpush1.msra.mxu0 0.0
    %2286 = vmatprep.subr.mxu0 0.0
    %2287 = vmatpush1.msra.mxu0 0.0
    %2288 = vmatprep.subr.mxu0 0.0
    %2289 = vmatpush1.msra.mxu0 0.0
    %2290 = vmatprep.subr.mxu0 0.0
    %2291 = vmatpush1.msra.mxu0 0.0
    %2292 = vmatprep.mubr.f32.mxu0 0.0
    %v2293 = vand.u32 %v1532, 4294901760
    %2294 = vmatmul.mubr.f32.gmra.mrb[0].mxu0 %v2293
    %v2295 = vpop.f32.mrb[0].mxu0
    %v2296 = vadd.f32 %v2179, %v2295
    %v2297 = vpop.f32.mrb[0].mxu0
    %2298 = vmatprep.mubr.f32.mxu0 0.0
    %v2299 = vand.u32 %v1535, 4294901760
    %2300 = vmatmul.mubr.f32.gmra.mrb[0].mxu0 %v2299
    %v2301 = vpop.f32.mrb[0].mxu0
    %v2302 = vadd.f32 %v2185, %v2301
    %v2303 = vpop.f32.mrb[0].mxu0
    %2304 = vmatprep.mubr.f32.mxu0 0.0
    %v2305 = vand.u32 %v1538, 4294901760
    %2306 = vmatmul.mubr.f32.gmra.mrb[0].mxu0 %v2305
    %v2307 = vpop.f32.mrb[0].mxu0
    %v2308 = vadd.f32 %v2191, %v2307
    %v2309 = vpop.f32.mrb[0].mxu0
    %2310 = vmatprep.mubr.f32.mxu0 0.0
    %v2311 = vand.u32 %v1541, 4294901760
    %2312 = vmatmul.mubr.f32.gmra.mrb[0].mxu0 %v2311
    %v2313 = vpop.f32.mrb[0].mxu0
    %v2314 = vadd.f32 %v2197, %v2313
    %v2315 = vpop.f32.mrb[0].mxu0
    %2316 = vmatprep.mubr.f32.mxu0 0.0
    %v2317 = vand.u32 %v1544, 4294901760
    %2318 = vmatmul.mubr.f32.gmra.mrb[0].mxu0 %v2317
    %v2319 = vpop.f32.mrb[0].mxu0
    %v2320 = vadd.f32 %v2203, %v2319
    %v2321 = vpop.f32.mrb[0].mxu0
    %2322 = vmatprep.mubr.f32.mxu0 0.0
    %v2323 = vand.u32 %v1547, 4294901760
    %2324 = vmatmul.mubr.f32.gmra.mrb[0].mxu0 %v2323
    %v2325 = vpop.f32.mrb[0].mxu0
    %v2326 = vadd.f32 %v2209, %v2325
    %v2327 = vpop.f32.mrb[0].mxu0
    %2328 = vmatprep.mubr.f32.mxu0 0.0
    %v2329 = vand.u32 %v1550, 4294901760
    %2330 = vmatmul.mubr.f32.gmra.mrb[0].mxu0 %v2329
    %v2331 = vpop.f32.mrb[0].mxu0
    %v2332 = vadd.f32 %v2215, %v2331
    %v2333 = vpop.f32.mrb[0].mxu0
    %2334 = vmatprep.mubr.f32.mxu0 0.0
    %v2335 = vand.u32 %v1553, 4294901760
    %2336 = vmatmul.mubr.f32.gmra.mrb[0].mxu0 %v2335
    %v2337 = vpop.f32.mrb[0].mxu0
    %v2338 = vadd.f32 %v2221, %v2337
    %v2339 = vpop.f32.mrb[0].mxu0
    %2340 = vdwg.mxu0
    %2341 = vset.pattern.permute.xlu0 1
    %2342 = vperm.xlu0 %2341, %v23
    %v2343 = vpop.permute.xlu0 %2342
    %2344 = vset.pattern.permute.xlu0 1
    %2345 = vperm.xlu0 %2344, %v24
    %v2346 = vpop.permute.xlu0 %2345
    %2347 = vset.pattern.permute.xlu0 1
    %2348 = vperm.xlu0 %2347, %v25
    %v2349 = vpop.permute.xlu0 %2348
    %2350 = vset.pattern.permute.xlu0 1
    %2351 = vperm.xlu0 %2350, %v26
    %v2352 = vpop.permute.xlu0 %2351
    %2353 = vset.pattern.permute.xlu0 1
    %2354 = vperm.xlu0 %2353, %v27
    %v2355 = vpop.permute.xlu0 %2354
    %2356 = vset.pattern.permute.xlu0 1
    %2357 = vperm.xlu0 %2356, %v28
    %v2358 = vpop.permute.xlu0 %2357
    %2359 = vset.pattern.permute.xlu0 1
    %2360 = vperm.xlu0 %2359, %v29
    %v2361 = vpop.permute.xlu0 %2360
    %2362 = vset.pattern.permute.xlu0 1
    %2363 = vperm.xlu0 %2362, %v30
    %v2364 = vpop.permute.xlu0 %2363
    %vm2365 = vcmp.eq.s32.totalorder %v2343, %v37
    %vm2366 = vcmp.eq.s32.totalorder %v2346, %v37
    %vm2367 = vcmp.eq.s32.totalorder %v2349, %v37
    %vm2368 = vcmp.eq.s32.totalorder %v2352, %v37
    %vm2369 = vcmp.eq.s32.totalorder %v2355, %v37
    %vm2370 = vcmp.eq.s32.totalorder %v2358, %v37
    %vm2371 = vcmp.eq.s32.totalorder %v2361, %v37
    %vm2372 = vcmp.eq.s32.totalorder %v2364, %v37
    %v2373 = vsel %vm2365, 1, 0
    %v2374 = vsel %vm2366, 1, 0
    %v2375 = vsel %vm2367, 1, 0
    %v2376 = vsel %vm2368, 1, 0
    %v2377 = vsel %vm2369, 1, 0
    %v2378 = vsel %vm2370, 1, 0
    %v2379 = vsel %vm2371, 1, 0
    %v2380 = vsel %vm2372, 1, 0
    %v2381 = vcvt.s32.f32 %v2373
    %v2382 = vcvt.s32.f32 %v2374
    %v2383 = vcvt.s32.f32 %v2375
    %v2384 = vcvt.s32.f32 %v2376
    %v2385 = vcvt.s32.f32 %v2377
    %v2386 = vcvt.s32.f32 %v2378
    %v2387 = vcvt.s32.f32 %v2379
    %v2388 = vcvt.s32.f32 %v2380
    %v2390 = vsel %vm44, %v2381, 0
    %v2393 = vsel %vm44, %v2382, 0
    %v2396 = vsel %vm44, %v2383, 0
    %v2399 = vsel %vm44, %v2384, 0
    %v2402 = vsel %vm44, %v2385, 0
    %v2405 = vsel %vm44, %v2386, 0
    %v2408 = vsel %vm44, %v2387, 0
    %v2411 = vsel %vm44, %v2388, 0
    %2413 = vmatprep.subr.mxu0 0.0
    %v2414 = vand.u32 %v31, 4294901760
    %2415 = vmatpush1.msra.mxu0 %v2414
    %2416 = vmatprep.subr.mxu0 0.0
    %v2417 = vand.u32 %v32, 4294901760
    %2418 = vmatpush1.msra.mxu0 %v2417
    %2419 = vmatprep.subr.mxu0 0.0
    %v2420 = vand.u32 %v33, 4294901760
    %2421 = vmatpush1.msra.mxu0 %v2420
    %2422 = vmatprep.subr.mxu0 0.0
    %v2423 = vand.u32 %v34, 4294901760
    %2424 = vmatpush1.msra.mxu0 %v2423
    %2425 = vmatprep.subr.mxu0 0.0
    %2426 = vmatpush1.msra.mxu0 0.0
    %2427 = vmatprep.subr.mxu0 0.0
    %2428 = vmatpush1.msra.mxu0 0.0
    %2429 = vmatprep.subr.mxu0 0.0
    %2430 = vmatpush1.msra.mxu0 0.0
    %2431 = vmatprep.subr.mxu0 0.0
    %2432 = vmatpush1.msra.mxu0 0.0
    %2433 = vmatprep.subr.mxu0 0.0
    %2434 = vmatpush1.msra.mxu0 0.0
    %2435 = vmatprep.subr.mxu0 0.0
    %2436 = vmatpush1.msra.mxu0 0.0
    %2437 = vmatprep.subr.mxu0 0.0
    %2438 = vmatpush1.msra.mxu0 0.0
    %2439 = vmatprep.subr.mxu0 0.0
    %2440 = vmatpush1.msra.mxu0 0.0
    %2441 = vmatprep.subr.mxu0 0.0
    %2442 = vmatpush1.msra.mxu0 0.0
    %2443 = vmatprep.subr.mxu0 0.0
    %2444 = vmatpush1.msra.mxu0 0.0
    %2445 = vmatprep.subr.mxu0 0.0
    %2446 = vmatpush1.msra.mxu0 0.0
    %2447 = vmatprep.subr.mxu0 0.0
    %2448 = vmatpush1.msra.mxu0 0.0
    %2449 = vmatprep.subr.mxu0 0.0
    %2450 = vmatpush1.msra.mxu0 0.0
    %2451 = vmatprep.subr.mxu0 0.0
    %2452 = vmatpush1.msra.mxu0 0.0
    %2453 = vmatprep.subr.mxu0 0.0
    %2454 = vmatpush1.msra.mxu0 0.0
    %2455 = vmatprep.subr.mxu0 0.0
    %2456 = vmatpush1.msra.mxu0 0.0
    %2457 = vmatprep.subr.mxu0 0.0
    %2458 = vmatpush1.msra.mxu0 0.0
    %2459 = vmatprep.subr.mxu0 0.0
    %2460 = vmatpush1.msra.mxu0 0.0
    %2461 = vmatprep.subr.mxu0 0.0
    %2462 = vmatpush1.msra.mxu0 0.0
    %2463 = vmatprep.subr.mxu0 0.0
    %2464 = vmatpush1.msra.mxu0 0.0
    %2465 = vmatprep.subr.mxu0 0.0
    %2466 = vmatpush1.msra.mxu0 0.0
    %2467 = vmatprep.subr.mxu0 0.0
    %2468 = vmatpush1.msra.mxu0 0.0
    %2469 = vmatprep.subr.mxu0 0.0
    %2470 = vmatpush1.msra.mxu0 0.0
    %2471 = vmatprep.subr.mxu0 0.0
    %2472 = vmatpush1.msra.mxu0 0.0
    %2473 = vmatprep.subr.mxu0 0.0
    %2474 = vmatpush1.msra.mxu0 0.0
    %2475 = vmatprep.subr.mxu0 0.0
    %2476 = vmatpush1.msra.mxu0 0.0
    %2477 = vmatprep.subr.mxu0 0.0
    %2478 = vmatpush1.msra.mxu0 0.0
    %2479 = vmatprep.subr.mxu0 0.0
    %2480 = vmatpush1.msra.mxu0 0.0
    %2481 = vmatprep.mubr.f32.mxu0 0.0
    %v2482 = vand.u32 %v2390, 4294901760
    %v2483 = vsub.f32 %v2390, %v2482
    %v2484 = vand.u32 %v2483, 4294901760
    %v2485 = vsub.f32 %v2483, %v2484
    %v2486 = vand.u32 %v2485, 4294901760
    %2487 = vmatmul.mubr.f32.gmra.mrb[0].mxu0 %v2486
    %v2488 = vpop.f32.mrb[0].mxu0
    %v2489 = vadd.f32 0.0, %v2488
    %v2490 = vpop.f32.mrb[0].mxu0
    %2491 = vmatprep.mubr.f32.mxu0 0.0
    %v2492 = vand.u32 %v2393, 4294901760
    %v2493 = vsub.f32 %v2393, %v2492
    %v2494 = vand.u32 %v2493, 4294901760
    %v2495 = vsub.f32 %v2493, %v2494
    %v2496 = vand.u32 %v2495, 4294901760
    %2497 = vmatmul.mubr.f32.gmra.mrb[0].mxu0 %v2496
    %v2498 = vpop.f32.mrb[0].mxu0
    %v2499 = vadd.f32 0.0, %v2498
    %v2500 = vpop.f32.mrb[0].mxu0
    %2501 = vmatprep.mubr.f32.mxu0 0.0
    %v2502 = vand.u32 %v2396, 4294901760
    %v2503 = vsub.f32 %v2396, %v2502
    %v2504 = vand.u32 %v2503, 4294901760
    %v2505 = vsub.f32 %v2503, %v2504
    %v2506 = vand.u32 %v2505, 4294901760
    %2507 = vmatmul.mubr.f32.gmra.mrb[0].mxu0 %v2506
    %v2508 = vpop.f32.mrb[0].mxu0
    %v2509 = vadd.f32 0.0, %v2508
    %v2510 = vpop.f32.mrb[0].mxu0
    %2511 = vmatprep.mubr.f32.mxu0 0.0
    %v2512 = vand.u32 %v2399, 4294901760
    %v2513 = vsub.f32 %v2399, %v2512
    %v2514 = vand.u32 %v2513, 4294901760
    %v2515 = vsub.f32 %v2513, %v2514
    %v2516 = vand.u32 %v2515, 4294901760
    %2517 = vmatmul.mubr.f32.gmra.mrb[0].mxu0 %v2516
    %v2518 = vpop.f32.mrb[0].mxu0
    %v2519 = vadd.f32 0.0, %v2518
    %v2520 = vpop.f32.mrb[0].mxu0
    %2521 = vmatprep.mubr.f32.mxu0 0.0
    %v2522 = vand.u32 %v2402, 4294901760
    %v2523 = vsub.f32 %v2402, %v2522
    %v2524 = vand.u32 %v2523, 4294901760
    %v2525 = vsub.f32 %v2523, %v2524
    %v2526 = vand.u32 %v2525, 4294901760
    %2527 = vmatmul.mubr.f32.gmra.mrb[0].mxu0 %v2526
    %v2528 = vpop.f32.mrb[0].mxu0
    %v2529 = vadd.f32 0.0, %v2528
    %v2530 = vpop.f32.mrb[0].mxu0
    %2531 = vmatprep.mubr.f32.mxu0 0.0
    %v2532 = vand.u32 %v2405, 4294901760
    %v2533 = vsub.f32 %v2405, %v2532
    %v2534 = vand.u32 %v2533, 4294901760
    %v2535 = vsub.f32 %v2533, %v2534
    %v2536 = vand.u32 %v2535, 4294901760
    %2537 = vmatmul.mubr.f32.gmra.mrb[0].mxu0 %v2536
    %v2538 = vpop.f32.mrb[0].mxu0
    %v2539 = vadd.f32 0.0, %v2538
    %v2540 = vpop.f32.mrb[0].mxu0
    %2541 = vmatprep.mubr.f32.mxu0 0.0
    %v2542 = vand.u32 %v2408, 4294901760
    %v2543 = vsub.f32 %v2408, %v2542
    %v2544 = vand.u32 %v2543, 4294901760
    %v2545 = vsub.f32 %v2543, %v2544
    %v2546 = vand.u32 %v2545, 4294901760
    %2547 = vmatmul.mubr.f32.gmra.mrb[0].mxu0 %v2546
    %v2548 = vpop.f32.mrb[0].mxu0
    %v2549 = vadd.f32 0.0, %v2548
    %v2550 = vpop.f32.mrb[0].mxu0
    %2551 = vmatprep.mubr.f32.mxu0 0.0
    %v2552 = vand.u32 %v2411, 4294901760
    %v2553 = vsub.f32 %v2411, %v2552
    %v2554 = vand.u32 %v2553, 4294901760
    %v2555 = vsub.f32 %v2553, %v2554
    %v2556 = vand.u32 %v2555, 4294901760
    %2557 = vmatmul.mubr.f32.gmra.mrb[0].mxu0 %v2556
    %v2558 = vpop.f32.mrb[0].mxu0
    %v2559 = vadd.f32 0.0, %v2558
    %v2560 = vpop.f32.mrb[0].mxu0
    %2561 = vdwg.mxu0
    %2562 = vmatprep.subr.mxu0 0.0
    %v2563 = vand.u32 %v31, 4294901760
    %v2564 = vsub.f32 %v31, %v2563
    %v2565 = vand.u32 %v2564, 4294901760
    %v2566 = vsub.f32 %v2564, %v2565
    %v2567 = vand.u32 %v2566, 4294901760
    %2568 = vmatpush1.msra.mxu0 %v2567
    %2569 = vmatprep.subr.mxu0 0.0
    %v2570 = vand.u32 %v32, 4294901760
    %v2571 = vsub.f32 %v32, %v2570
    %v2572 = vand.u32 %v2571, 4294901760
    %v2573 = vsub.f32 %v2571, %v2572
    %v2574 = vand.u32 %v2573, 4294901760
    %2575 = vmatpush1.msra.mxu0 %v2574
    %2576 = vmatprep.subr.mxu0 0.0
    %v2577 = vand.u32 %v33, 4294901760
    %v2578 = vsub.f32 %v33, %v2577
    %v2579 = vand.u32 %v2578, 4294901760
    %v2580 = vsub.f32 %v2578, %v2579
    %v2581 = vand.u32 %v2580, 4294901760
    %2582 = vmatpush1.msra.mxu0 %v2581
    %2583 = vmatprep.subr.mxu0 0.0
    %v2584 = vand.u32 %v34, 4294901760
    %v2585 = vsub.f32 %v34, %v2584
    %v2586 = vand.u32 %v2585, 4294901760
    %v2587 = vsub.f32 %v2585, %v2586
    %v2588 = vand.u32 %v2587, 4294901760
    %2589 = vmatpush1.msra.mxu0 %v2588
    %2590 = vmatprep.subr.mxu0 0.0
    %2591 = vmatpush1.msra.mxu0 0.0
    %2592 = vmatprep.subr.mxu0 0.0
    %2593 = vmatpush1.msra.mxu0 0.0
    %2594 = vmatprep.subr.mxu0 0.0
    %2595 = vmatpush1.msra.mxu0 0.0
    %2596 = vmatprep.subr.mxu0 0.0
    %2597 = vmatpush1.msra.mxu0 0.0
    %2598 = vmatprep.subr.mxu0 0.0
    %2599 = vmatpush1.msra.mxu0 0.0
    %2600 = vmatprep.subr.mxu0 0.0
    %2601 = vmatpush1.msra.mxu0 0.0
    %2602 = vmatprep.subr.mxu0 0.0
    %2603 = vmatpush1.msra.mxu0 0.0
    %2604 = vmatprep.subr.mxu0 0.0
    %2605 = vmatpush1.msra.mxu0 0.0
    %2606 = vmatprep.subr.mxu0 0.0
    %2607 = vmatpush1.msra.mxu0 0.0
    %2608 = vmatprep.subr.mxu0 0.0
    %2609 = vmatpush1.msra.mxu0 0.0
    %2610 = vmatprep.subr.mxu0 0.0
    %2611 = vmatpush1.msra.mxu0 0.0
    %2612 = vmatprep.subr.mxu0 0.0
    %2613 = vmatpush1.msra.mxu0 0.0
    %2614 = vmatprep.subr.mxu0 0.0
    %2615 = vmatpush1.msra.mxu0 0.0
    %2616 = vmatprep.subr.mxu0 0.0
    %2617 = vmatpush1.msra.mxu0 0.0
    %2618 = vmatprep.subr.mxu0 0.0
    %2619 = vmatpush1.msra.mxu0 0.0
    %2620 = vmatprep.subr.mxu0 0.0
    %2621 = vmatpush1.msra.mxu0 0.0
    %2622 = vmatprep.subr.mxu0 0.0
    %2623 = vmatpush1.msra.mxu0 0.0
    %2624 = vmatprep.subr.mxu0 0.0
    %2625 = vmatpush1.msra.mxu0 0.0
    %2626 = vmatprep.subr.mxu0 0.0
    %2627 = vmatpush1.msra.mxu0 0.0
    %2628 = vmatprep.subr.mxu0 0.0
    %2629 = vmatpush1.msra.mxu0 0.0
    %2630 = vmatprep.subr.mxu0 0.0
    %2631 = vmatpush1.msra.mxu0 0.0
    %2632 = vmatprep.subr.mxu0 0.0
    %2633 = vmatpush1.msra.mxu0 0.0
    %2634 = vmatprep.subr.mxu0 0.0
    %2635 = vmatpush1.msra.mxu0 0.0
    %2636 = vmatprep.subr.mxu0 0.0
    %2637 = vmatpush1.msra.mxu0 0.0
    %2638 = vmatprep.subr.mxu0 0.0
    %2639 = vmatpush1.msra.mxu0 0.0
    %2640 = vmatprep.subr.mxu0 0.0
    %2641 = vmatpush1.msra.mxu0 0.0
    %2642 = vmatprep.subr.mxu0 0.0
    %2643 = vmatpush1.msra.mxu0 0.0
    %2644 = vmatprep.subr.mxu0 0.0
    %2645 = vmatpush1.msra.mxu0 0.0
    %2646 = vmatprep.mubr.f32.mxu0 0.0
    %v2647 = vand.u32 %v2390, 4294901760
    %2648 = vmatmul.mubr.f32.gmra.mrb[0].mxu0 %v2647
    %v2649 = vpop.f32.mrb[0].mxu0
    %v2650 = vadd.f32 %v2489, %v2649
    %v2651 = vpop.f32.mrb[0].mxu0
    %2652 = vmatprep.mubr.f32.mxu0 0.0
    %v2653 = vand.u32 %v2393, 4294901760
    %2654 = vmatmul.mubr.f32.gmra.mrb[0].mxu0 %v2653
    %v2655 = vpop.f32.mrb[0].mxu0
    %v2656 = vadd.f32 %v2499, %v2655
    %v2657 = vpop.f32.mrb[0].mxu0
    %2658 = vmatprep.mubr.f32.mxu0 0.0
    %v2659 = vand.u32 %v2396, 4294901760
    %2660 = vmatmul.mubr.f32.gmra.mrb[0].mxu0 %v2659
    %v2661 = vpop.f32.mrb[0].mxu0
    %v2662 = vadd.f32 %v2509, %v2661
    %v2663 = vpop.f32.mrb[0].mxu0
    %2664 = vmatprep.mubr.f32.mxu0 0.0
    %v2665 = vand.u32 %v2399, 4294901760
    %2666 = vmatmul.mubr.f32.gmra.mrb[0].mxu0 %v2665
    %v2667 = vpop.f32.mrb[0].mxu0
    %v2668 = vadd.f32 %v2519, %v2667
    %v2669 = vpop.f32.mrb[0].mxu0
    %2670 = vmatprep.mubr.f32.mxu0 0.0
    %v2671 = vand.u32 %v2402, 4294901760
    %2672 = vmatmul.mubr.f32.gmra.mrb[0].mxu0 %v2671
    %v2673 = vpop.f32.mrb[0].mxu0
    %v2674 = vadd.f32 %v2529, %v2673
    %v2675 = vpop.f32.mrb[0].mxu0
    %2676 = vmatprep.mubr.f32.mxu0 0.0
    %v2677 = vand.u32 %v2405, 4294901760
    %2678 = vmatmul.mubr.f32.gmra.mrb[0].mxu0 %v2677
    %v2679 = vpop.f32.mrb[0].mxu0
    %v2680 = vadd.f32 %v2539, %v2679
    %v2681 = vpop.f32.mrb[0].mxu0
    %2682 = vmatprep.mubr.f32.mxu0 0.0
    %v2683 = vand.u32 %v2408, 4294901760
    %2684 = vmatmul.mubr.f32.gmra.mrb[0].mxu0 %v2683
    %v2685 = vpop.f32.mrb[0].mxu0
    %v2686 = vadd.f32 %v2549, %v2685
    %v2687 = vpop.f32.mrb[0].mxu0
    %2688 = vmatprep.mubr.f32.mxu0 0.0
    %v2689 = vand.u32 %v2411, 4294901760
    %2690 = vmatmul.mubr.f32.gmra.mrb[0].mxu0 %v2689
    %v2691 = vpop.f32.mrb[0].mxu0
    %v2692 = vadd.f32 %v2559, %v2691
    %v2693 = vpop.f32.mrb[0].mxu0
    %2694 = vdwg.mxu0
    %2695 = vmatprep.subr.mxu0 0.0
    %v2696 = vand.u32 %v31, 4294901760
    %v2697 = vsub.f32 %v31, %v2696
    %2698 = vmatpush1.msra.mxu0 %v2697
    %2699 = vmatprep.subr.mxu0 0.0
    %v2700 = vand.u32 %v32, 4294901760
    %v2701 = vsub.f32 %v32, %v2700
    %2702 = vmatpush1.msra.mxu0 %v2701
    %2703 = vmatprep.subr.mxu0 0.0
    %v2704 = vand.u32 %v33, 4294901760
    %v2705 = vsub.f32 %v33, %v2704
    %2706 = vmatpush1.msra.mxu0 %v2705
    %2707 = vmatprep.subr.mxu0 0.0
    %v2708 = vand.u32 %v34, 4294901760
    %v2709 = vsub.f32 %v34, %v2708
    %2710 = vmatpush1.msra.mxu0 %v2709
    %2711 = vmatprep.subr.mxu0 0.0
    %2712 = vmatpush1.msra.mxu0 0.0
    %2713 = vmatprep.subr.mxu0 0.0
    %2714 = vmatpush1.msra.mxu0 0.0
    %2715 = vmatprep.subr.mxu0 0.0
    %2716 = vmatpush1.msra.mxu0 0.0
    %2717 = vmatprep.subr.mxu0 0.0
    %2718 = vmatpush1.msra.mxu0 0.0
    %2719 = vmatprep.subr.mxu0 0.0
    %2720 = vmatpush1.msra.mxu0 0.0
    %2721 = vmatprep.subr.mxu0 0.0
    %2722 = vmatpush1.msra.mxu0 0.0
    %2723 = vmatprep.subr.mxu0 0.0
    %2724 = vmatpush1.msra.mxu0 0.0
    %2725 = vmatprep.subr.mxu0 0.0
    %2726 = vmatpush1.msra.mxu0 0.0
    %2727 = vmatprep.subr.mxu0 0.0
    %2728 = vmatpush1.msra.mxu0 0.0
    %2729 = vmatprep.subr.mxu0 0.0
    %2730 = vmatpush1.msra.mxu0 0.0
    %2731 = vmatprep.subr.mxu0 0.0
    %2732 = vmatpush1.msra.mxu0 0.0
    %2733 = vmatprep.subr.mxu0 0.0
    %2734 = vmatpush1.msra.mxu0 0.0
    %2735 = vmatprep.subr.mxu0 0.0
    %2736 = vmatpush1.msra.mxu0 0.0
    %2737 = vmatprep.subr.mxu0 0.0
    %2738 = vmatpush1.msra.mxu0 0.0
    %2739 = vmatprep.subr.mxu0 0.0
    %2740 = vmatpush1.msra.mxu0 0.0
    %2741 = vmatprep.subr.mxu0 0.0
    %2742 = vmatpush1.msra.mxu0 0.0
    %2743 = vmatprep.subr.mxu0 0.0
    %2744 = vmatpush1.msra.mxu0 0.0
    %2745 = vmatprep.subr.mxu0 0.0
    %2746 = vmatpush1.msra.mxu0 0.0
    %2747 = vmatprep.subr.mxu0 0.0
    %2748 = vmatpush1.msra.mxu0 0.0
    %2749 = vmatprep.subr.mxu0 0.0
    %2750 = vmatpush1.msra.mxu0 0.0
    %2751 = vmatprep.subr.mxu0 0.0
    %2752 = vmatpush1.msra.mxu0 0.0
    %2753 = vmatprep.subr.mxu0 0.0
    %2754 = vmatpush1.msra.mxu0 0.0
    %2755 = vmatprep.subr.mxu0 0.0
    %2756 = vmatpush1.msra.mxu0 0.0
    %2757 = vmatprep.subr.mxu0 0.0
    %2758 = vmatpush1.msra.mxu0 0.0
    %2759 = vmatprep.subr.mxu0 0.0
    %2760 = vmatpush1.msra.mxu0 0.0
    %2761 = vmatprep.subr.mxu0 0.0
    %2762 = vmatpush1.msra.mxu0 0.0
    %2763 = vmatprep.subr.mxu0 0.0
    %2764 = vmatpush1.msra.mxu0 0.0
    %2765 = vmatprep.subr.mxu0 0.0
    %2766 = vmatpush1.msra.mxu0 0.0
    %2767 = vmatprep.mubr.f32.mxu0 0.0
    %v2768 = vand.u32 %v2390, 4294901760
    %v2769 = vsub.f32 %v2390, %v2768
    %2770 = vmatmul.mubr.f32.gmra.mrb[0].mxu0 %v2769
    %v2771 = vpop.f32.mrb[0].mxu0
    %v2772 = vadd.f32 %v2650, %v2771
    %v2773 = vpop.f32.mrb[0].mxu0
    %2774 = vmatprep.mubr.f32.mxu0 0.0
    %v2775 = vand.u32 %v2393, 4294901760
    %v2776 = vsub.f32 %v2393, %v2775
    %2777 = vmatmul.mubr.f32.gmra.mrb[0].mxu0 %v2776
    %v2778 = vpop.f32.mrb[0].mxu0
    %v2779 = vadd.f32 %v2656, %v2778
    %v2780 = vpop.f32.mrb[0].mxu0
    %2781 = vmatprep.mubr.f32.mxu0 0.0
    %v2782 = vand.u32 %v2396, 4294901760
    %v2783 = vsub.f32 %v2396, %v2782
    %2784 = vmatmul.mubr.f32.gmra.mrb[0].mxu0 %v2783
    %v2785 = vpop.f32.mrb[0].mxu0
    %v2786 = vadd.f32 %v2662, %v2785
    %v2787 = vpop.f32.mrb[0].mxu0
    %2788 = vmatprep.mubr.f32.mxu0 0.0
    %v2789 = vand.u32 %v2399, 4294901760
    %v2790 = vsub.f32 %v2399, %v2789
    %2791 = vmatmul.mubr.f32.gmra.mrb[0].mxu0 %v2790
    %v2792 = vpop.f32.mrb[0].mxu0
    %v2793 = vadd.f32 %v2668, %v2792
    %v2794 = vpop.f32.mrb[0].mxu0
    %2795 = vmatprep.mubr.f32.mxu0 0.0
    %v2796 = vand.u32 %v2402, 4294901760
    %v2797 = vsub.f32 %v2402, %v2796
    %2798 = vmatmul.mubr.f32.gmra.mrb[0].mxu0 %v2797
    %v2799 = vpop.f32.mrb[0].mxu0
    %v2800 = vadd.f32 %v2674, %v2799
    %v2801 = vpop.f32.mrb[0].mxu0
    %2802 = vmatprep.mubr.f32.mxu0 0.0
    %v2803 = vand.u32 %v2405, 4294901760
    %v2804 = vsub.f32 %v2405, %v2803
    %2805 = vmatmul.mubr.f32.gmra.mrb[0].mxu0 %v2804
    %v2806 = vpop.f32.mrb[0].mxu0
    %v2807 = vadd.f32 %v2680, %v2806
    %v2808 = vpop.f32.mrb[0].mxu0
    %2809 = vmatprep.mubr.f32.mxu0 0.0
    %v2810 = vand.u32 %v2408, 4294901760
    %v2811 = vsub.f32 %v2408, %v2810
    %2812 = vmatmul.mubr.f32.gmra.mrb[0].mxu0 %v2811
    %v2813 = vpop.f32.mrb[0].mxu0
    %v2814 = vadd.f32 %v2686, %v2813
    %v2815 = vpop.f32.mrb[0].mxu0
    %2816 = vmatprep.mubr.f32.mxu0 0.0
    %v2817 = vand.u32 %v2411, 4294901760
    %v2818 = vsub.f32 %v2411, %v2817
    %2819 = vmatmul.mubr.f32.gmra.mrb[0].mxu0 %v2818
    %v2820 = vpop.f32.mrb[0].mxu0
    %v2821 = vadd.f32 %v2692, %v2820
    %v2822 = vpop.f32.mrb[0].mxu0
    %2823 = vdwg.mxu0
    %2824 = vmatprep.subr.mxu0 0.0
    %v2825 = vand.u32 %v31, 4294901760
    %2826 = vmatpush1.msra.mxu0 %v2825
    %2827 = vmatprep.subr.mxu0 0.0
    %v2828 = vand.u32 %v32, 4294901760
    %2829 = vmatpush1.msra.mxu0 %v2828
    %2830 = vmatprep.subr.mxu0 0.0
    %v2831 = vand.u32 %v33, 4294901760
    %2832 = vmatpush1.msra.mxu0 %v2831
    %2833 = vmatprep.subr.mxu0 0.0
    %v2834 = vand.u32 %v34, 4294901760
    %2835 = vmatpush1.msra.mxu0 %v2834
    %2836 = vmatprep.subr.mxu0 0.0
    %2837 = vmatpush1.msra.mxu0 0.0
    %2838 = vmatprep.subr.mxu0 0.0
    %2839 = vmatpush1.msra.mxu0 0.0
    %2840 = vmatprep.subr.mxu0 0.0
    %2841 = vmatpush1.msra.mxu0 0.0
    %2842 = vmatprep.subr.mxu0 0.0
    %2843 = vmatpush1.msra.mxu0 0.0
    %2844 = vmatprep.subr.mxu0 0.0
    %2845 = vmatpush1.msra.mxu0 0.0
    %2846 = vmatprep.subr.mxu0 0.0
    %2847 = vmatpush1.msra.mxu0 0.0
    %2848 = vmatprep.subr.mxu0 0.0
    %2849 = vmatpush1.msra.mxu0 0.0
    %2850 = vmatprep.subr.mxu0 0.0
    %2851 = vmatpush1.msra.mxu0 0.0
    %2852 = vmatprep.subr.mxu0 0.0
    %2853 = vmatpush1.msra.mxu0 0.0
    %2854 = vmatprep.subr.mxu0 0.0
    %2855 = vmatpush1.msra.mxu0 0.0
    %2856 = vmatprep.subr.mxu0 0.0
    %2857 = vmatpush1.msra.mxu0 0.0
    %2858 = vmatprep.subr.mxu0 0.0
    %2859 = vmatpush1.msra.mxu0 0.0
    %2860 = vmatprep.subr.mxu0 0.0
    %2861 = vmatpush1.msra.mxu0 0.0
    %2862 = vmatprep.subr.mxu0 0.0
    %2863 = vmatpush1.msra.mxu0 0.0
    %2864 = vmatprep.subr.mxu0 0.0
    %2865 = vmatpush1.msra.mxu0 0.0
    %2866 = vmatprep.subr.mxu0 0.0
    %2867 = vmatpush1.msra.mxu0 0.0
    %2868 = vmatprep.subr.mxu0 0.0
    %2869 = vmatpush1.msra.mxu0 0.0
    %2870 = vmatprep.subr.mxu0 0.0
    %2871 = vmatpush1.msra.mxu0 0.0
    %2872 = vmatprep.subr.mxu0 0.0
    %2873 = vmatpush1.msra.mxu0 0.0
    %2874 = vmatprep.subr.mxu0 0.0
    %2875 = vmatpush1.msra.mxu0 0.0
    %2876 = vmatprep.subr.mxu0 0.0
    %2877 = vmatpush1.msra.mxu0 0.0
    %2878 = vmatprep.subr.mxu0 0.0
    %2879 = vmatpush1.msra.mxu0 0.0
    %2880 = vmatprep.subr.mxu0 0.0
    %2881 = vmatpush1.msra.mxu0 0.0
    %2882 = vmatprep.subr.mxu0 0.0
    %2883 = vmatpush1.msra.mxu0 0.0
    %2884 = vmatprep.subr.mxu0 0.0
    %2885 = vmatpush1.msra.mxu0 0.0
    %2886 = vmatprep.subr.mxu0 0.0
    %2887 = vmatpush1.msra.mxu0 0.0
    %2888 = vmatprep.subr.mxu0 0.0
    %2889 = vmatpush1.msra.mxu0 0.0
    %2890 = vmatprep.subr.mxu0 0.0
    %2891 = vmatpush1.msra.mxu0 0.0
    %2892 = vmatprep.mubr.f32.mxu0 0.0
    %v2893 = vand.u32 %v2390, 4294901760
    %v2894 = vsub.f32 %v2390, %v2893
    %v2895 = vand.u32 %v2894, 4294901760
    %2896 = vmatmul.mubr.f32.gmra.mrb[0].mxu0 %v2895
    %v2897 = vpop.f32.mrb[0].mxu0
    %v2898 = vadd.f32 %v2772, %v2897
    %v2899 = vpop.f32.mrb[0].mxu0
    %2900 = vmatprep.mubr.f32.mxu0 0.0
    %v2901 = vand.u32 %v2393, 4294901760
    %v2902 = vsub.f32 %v2393, %v2901
    %v2903 = vand.u32 %v2902, 4294901760
    %2904 = vmatmul.mubr.f32.gmra.mrb[0].mxu0 %v2903
    %v2905 = vpop.f32.mrb[0].mxu0
    %v2906 = vadd.f32 %v2779, %v2905
    %v2907 = vpop.f32.mrb[0].mxu0
    %2908 = vmatprep.mubr.f32.mxu0 0.0
    %v2909 = vand.u32 %v2396, 4294901760
    %v2910 = vsub.f32 %v2396, %v2909
    %v2911 = vand.u32 %v2910, 4294901760
    %2912 = vmatmul.mubr.f32.gmra.mrb[0].mxu0 %v2911
    %v2913 = vpop.f32.mrb[0].mxu0
    %v2914 = vadd.f32 %v2786, %v2913
    %v2915 = vpop.f32.mrb[0].mxu0
    %2916 = vmatprep.mubr.f32.mxu0 0.0
    %v2917 = vand.u32 %v2399, 4294901760
    %v2918 = vsub.f32 %v2399, %v2917
    %v2919 = vand.u32 %v2918, 4294901760
    %2920 = vmatmul.mubr.f32.gmra.mrb[0].mxu0 %v2919
    %v2921 = vpop.f32.mrb[0].mxu0
    %v2922 = vadd.f32 %v2793, %v2921
    %v2923 = vpop.f32.mrb[0].mxu0
    %2924 = vmatprep.mubr.f32.mxu0 0.0
    %v2925 = vand.u32 %v2402, 4294901760
    %v2926 = vsub.f32 %v2402, %v2925
    %v2927 = vand.u32 %v2926, 4294901760
    %2928 = vmatmul.mubr.f32.gmra.mrb[0].mxu0 %v2927
    %v2929 = vpop.f32.mrb[0].mxu0
    %v2930 = vadd.f32 %v2800, %v2929
    %v2931 = vpop.f32.mrb[0].mxu0
    %2932 = vmatprep.mubr.f32.mxu0 0.0
    %v2933 = vand.u32 %v2405, 4294901760
    %v2934 = vsub.f32 %v2405, %v2933
    %v2935 = vand.u32 %v2934, 4294901760
    %2936 = vmatmul.mubr.f32.gmra.mrb[0].mxu0 %v2935
    %v2937 = vpop.f32.mrb[0].mxu0
    %v2938 = vadd.f32 %v2807, %v2937
    %v2939 = vpop.f32.mrb[0].mxu0
    %2940 = vmatprep.mubr.f32.mxu0 0.0
    %v2941 = vand.u32 %v2408, 4294901760
    %v2942 = vsub.f32 %v2408, %v2941
    %v2943 = vand.u32 %v2942, 4294901760
    %2944 = vmatmul.mubr.f32.gmra.mrb[0].mxu0 %v2943
    %v2945 = vpop.f32.mrb[0].mxu0
    %v2946 = vadd.f32 %v2814, %v2945
    %v2947 = vpop.f32.mrb[0].mxu0
    %2948 = vmatprep.mubr.f32.mxu0 0.0
    %v2949 = vand.u32 %v2411, 4294901760
    %v2950 = vsub.f32 %v2411, %v2949
    %v2951 = vand.u32 %v2950, 4294901760
    %2952 = vmatmul.mubr.f32.gmra.mrb[0].mxu0 %v2951
    %v2953 = vpop.f32.mrb[0].mxu0
    %v2954 = vadd.f32 %v2821, %v2953
    %v2955 = vpop.f32.mrb[0].mxu0
    %2956 = vdwg.mxu0
    %2957 = vmatprep.subr.mxu0 0.0
    %v2958 = vand.u32 %v31, 4294901760
    %v2959 = vsub.f32 %v31, %v2958
    %v2960 = vand.u32 %v2959, 4294901760
    %2961 = vmatpush1.msra.mxu0 %v2960
    %2962 = vmatprep.subr.mxu0 0.0
    %v2963 = vand.u32 %v32, 4294901760
    %v2964 = vsub.f32 %v32, %v2963
    %v2965 = vand.u32 %v2964, 4294901760
    %2966 = vmatpush1.msra.mxu0 %v2965
    %2967 = vmatprep.subr.mxu0 0.0
    %v2968 = vand.u32 %v33, 4294901760
    %v2969 = vsub.f32 %v33, %v2968
    %v2970 = vand.u32 %v2969, 4294901760
    %2971 = vmatpush1.msra.mxu0 %v2970
    %2972 = vmatprep.subr.mxu0 0.0
    %v2973 = vand.u32 %v34, 4294901760
    %v2974 = vsub.f32 %v34, %v2973
    %v2975 = vand.u32 %v2974, 4294901760
    %2976 = vmatpush1.msra.mxu0 %v2975
    %2977 = vmatprep.subr.mxu0 0.0
    %2978 = vmatpush1.msra.mxu0 0.0
    %2979 = vmatprep.subr.mxu0 0.0
    %2980 = vmatpush1.msra.mxu0 0.0
    %2981 = vmatprep.subr.mxu0 0.0
    %2982 = vmatpush1.msra.mxu0 0.0
    %2983 = vmatprep.subr.mxu0 0.0
    %2984 = vmatpush1.msra.mxu0 0.0
    %2985 = vmatprep.subr.mxu0 0.0
    %2986 = vmatpush1.msra.mxu0 0.0
    %2987 = vmatprep.subr.mxu0 0.0
    %2988 = vmatpush1.msra.mxu0 0.0
    %2989 = vmatprep.subr.mxu0 0.0
    %2990 = vmatpush1.msra.mxu0 0.0
    %2991 = vmatprep.subr.mxu0 0.0
    %2992 = vmatpush1.msra.mxu0 0.0
    %2993 = vmatprep.subr.mxu0 0.0
    %2994 = vmatpush1.msra.mxu0 0.0
    %2995 = vmatprep.subr.mxu0 0.0
    %2996 = vmatpush1.msra.mxu0 0.0
    %2997 = vmatprep.subr.mxu0 0.0
    %2998 = vmatpush1.msra.mxu0 0.0
    %2999 = vmatprep.subr.mxu0 0.0
    %3000 = vmatpush1.msra.mxu0 0.0
    %3001 = vmatprep.subr.mxu0 0.0
    %3002 = vmatpush1.msra.mxu0 0.0
    %3003 = vmatprep.subr.mxu0 0.0
    %3004 = vmatpush1.msra.mxu0 0.0
    %3005 = vmatprep.subr.mxu0 0.0
    %3006 = vmatpush1.msra.mxu0 0.0
    %3007 = vmatprep.subr.mxu0 0.0
    %3008 = vmatpush1.msra.mxu0 0.0
    %3009 = vmatprep.subr.mxu0 0.0
    %3010 = vmatpush1.msra.mxu0 0.0
    %3011 = vmatprep.subr.mxu0 0.0
    %3012 = vmatpush1.msra.mxu0 0.0
    %3013 = vmatprep.subr.mxu0 0.0
    %3014 = vmatpush1.msra.mxu0 0.0
    %3015 = vmatprep.subr.mxu0 0.0
    %3016 = vmatpush1.msra.mxu0 0.0
    %3017 = vmatprep.subr.mxu0 0.0
    %3018 = vmatpush1.msra.mxu0 0.0
    %3019 = vmatprep.subr.mxu0 0.0
    %3020 = vmatpush1.msra.mxu0 0.0
    %3021 = vmatprep.subr.mxu0 0.0
    %3022 = vmatpush1.msra.mxu0 0.0
    %3023 = vmatprep.subr.mxu0 0.0
    %3024 = vmatpush1.msra.mxu0 0.0
    %3025 = vmatprep.subr.mxu0 0.0
    %3026 = vmatpush1.msra.mxu0 0.0
    %3027 = vmatprep.subr.mxu0 0.0
    %3028 = vmatpush1.msra.mxu0 0.0
    %3029 = vmatprep.subr.mxu0 0.0
    %3030 = vmatpush1.msra.mxu0 0.0
    %3031 = vmatprep.subr.mxu0 0.0
    %3032 = vmatpush1.msra.mxu0 0.0
    %3033 = vmatprep.mubr.f32.mxu0 0.0
    %v3034 = vand.u32 %v2390, 4294901760
    %3035 = vmatmul.mubr.f32.gmra.mrb[0].mxu0 %v3034
    %v3036 = vpop.f32.mrb[0].mxu0
    %v3037 = vadd.f32 %v2898, %v3036
    %v3038 = vpop.f32.mrb[0].mxu0
    %3039 = vmatprep.mubr.f32.mxu0 0.0
    %v3040 = vand.u32 %v2393, 4294901760
    %3041 = vmatmul.mubr.f32.gmra.mrb[0].mxu0 %v3040
    %v3042 = vpop.f32.mrb[0].mxu0
    %v3043 = vadd.f32 %v2906, %v3042
    %v3044 = vpop.f32.mrb[0].mxu0
    %3045 = vmatprep.mubr.f32.mxu0 0.0
    %v3046 = vand.u32 %v2396, 4294901760
    %3047 = vmatmul.mubr.f32.gmra.mrb[0].mxu0 %v3046
    %v3048 = vpop.f32.mrb[0].mxu0
    %v3049 = vadd.f32 %v2914, %v3048
    %v3050 = vpop.f32.mrb[0].mxu0
    %3051 = vmatprep.mubr.f32.mxu0 0.0
    %v3052 = vand.u32 %v2399, 4294901760
    %3053 = vmatmul.mubr.f32.gmra.mrb[0].mxu0 %v3052
    %v3054 = vpop.f32.mrb[0].mxu0
    %v3055 = vadd.f32 %v2922, %v3054
    %v3056 = vpop.f32.mrb[0].mxu0
    %3057 = vmatprep.mubr.f32.mxu0 0.0
    %v3058 = vand.u32 %v2402, 4294901760
    %3059 = vmatmul.mubr.f32.gmra.mrb[0].mxu0 %v3058
    %v3060 = vpop.f32.mrb[0].mxu0
    %v3061 = vadd.f32 %v2930, %v3060
    %v3062 = vpop.f32.mrb[0].mxu0
    %3063 = vmatprep.mubr.f32.mxu0 0.0
    %v3064 = vand.u32 %v2405, 4294901760
    %3065 = vmatmul.mubr.f32.gmra.mrb[0].mxu0 %v3064
    %v3066 = vpop.f32.mrb[0].mxu0
    %v3067 = vadd.f32 %v2938, %v3066
    %v3068 = vpop.f32.mrb[0].mxu0
    %3069 = vmatprep.mubr.f32.mxu0 0.0
    %v3070 = vand.u32 %v2408, 4294901760
    %3071 = vmatmul.mubr.f32.gmra.mrb[0].mxu0 %v3070
    %v3072 = vpop.f32.mrb[0].mxu0
    %v3073 = vadd.f32 %v2946, %v3072
    %v3074 = vpop.f32.mrb[0].mxu0
    %3075 = vmatprep.mubr.f32.mxu0 0.0
    %v3076 = vand.u32 %v2411, 4294901760
    %3077 = vmatmul.mubr.f32.gmra.mrb[0].mxu0 %v3076
    %v3078 = vpop.f32.mrb[0].mxu0
    %v3079 = vadd.f32 %v2954, %v3078
    %v3080 = vpop.f32.mrb[0].mxu0
    %3081 = vdwg.mxu0
    %3082 = vmatprep.subr.mxu0 0.0
    %v3083 = vand.u32 %v31, 4294901760
    %3084 = vmatpush1.msra.mxu0 %v3083
    %3085 = vmatprep.subr.mxu0 0.0
    %v3086 = vand.u32 %v32, 4294901760
    %3087 = vmatpush1.msra.mxu0 %v3086
    %3088 = vmatprep.subr.mxu0 0.0
    %v3089 = vand.u32 %v33, 4294901760
    %3090 = vmatpush1.msra.mxu0 %v3089
    %3091 = vmatprep.subr.mxu0 0.0
    %v3092 = vand.u32 %v34, 4294901760
    %3093 = vmatpush1.msra.mxu0 %v3092
    %3094 = vmatprep.subr.mxu0 0.0
    %3095 = vmatpush1.msra.mxu0 0.0
    %3096 = vmatprep.subr.mxu0 0.0
    %3097 = vmatpush1.msra.mxu0 0.0
    %3098 = vmatprep.subr.mxu0 0.0
    %3099 = vmatpush1.msra.mxu0 0.0
    %3100 = vmatprep.subr.mxu0 0.0
    %3101 = vmatpush1.msra.mxu0 0.0
    %3102 = vmatprep.subr.mxu0 0.0
    %3103 = vmatpush1.msra.mxu0 0.0
    %3104 = vmatprep.subr.mxu0 0.0
    %3105 = vmatpush1.msra.mxu0 0.0
    %3106 = vmatprep.subr.mxu0 0.0
    %3107 = vmatpush1.msra.mxu0 0.0
    %3108 = vmatprep.subr.mxu0 0.0
    %3109 = vmatpush1.msra.mxu0 0.0
    %3110 = vmatprep.subr.mxu0 0.0
    %3111 = vmatpush1.msra.mxu0 0.0
    %3112 = vmatprep.subr.mxu0 0.0
    %3113 = vmatpush1.msra.mxu0 0.0
    %3114 = vmatprep.subr.mxu0 0.0
    %3115 = vmatpush1.msra.mxu0 0.0
    %3116 = vmatprep.subr.mxu0 0.0
    %3117 = vmatpush1.msra.mxu0 0.0
    %3118 = vmatprep.subr.mxu0 0.0
    %3119 = vmatpush1.msra.mxu0 0.0
    %3120 = vmatprep.subr.mxu0 0.0
    %3121 = vmatpush1.msra.mxu0 0.0
    %3122 = vmatprep.subr.mxu0 0.0
    %3123 = vmatpush1.msra.mxu0 0.0
    %3124 = vmatprep.subr.mxu0 0.0
    %3125 = vmatpush1.msra.mxu0 0.0
    %3126 = vmatprep.subr.mxu0 0.0
    %3127 = vmatpush1.msra.mxu0 0.0
    %3128 = vmatprep.subr.mxu0 0.0
    %3129 = vmatpush1.msra.mxu0 0.0
    %3130 = vmatprep.subr.mxu0 0.0
    %3131 = vmatpush1.msra.mxu0 0.0
    %3132 = vmatprep.subr.mxu0 0.0
    %3133 = vmatpush1.msra.mxu0 0.0
    %3134 = vmatprep.subr.mxu0 0.0
    %3135 = vmatpush1.msra.mxu0 0.0
    %3136 = vmatprep.subr.mxu0 0.0
    %3137 = vmatpush1.msra.mxu0 0.0
    %3138 = vmatprep.subr.mxu0 0.0
    %3139 = vmatpush1.msra.mxu0 0.0
    %3140 = vmatprep.subr.mxu0 0.0
    %3141 = vmatpush1.msra.mxu0 0.0
    %3142 = vmatprep.subr.mxu0 0.0
    %3143 = vmatpush1.msra.mxu0 0.0
    %3144 = vmatprep.subr.mxu0 0.0
    %3145 = vmatpush1.msra.mxu0 0.0
    %3146 = vmatprep.subr.mxu0 0.0
    %3147 = vmatpush1.msra.mxu0 0.0
    %3148 = vmatprep.subr.mxu0 0.0
    %3149 = vmatpush1.msra.mxu0 0.0
    %3150 = vmatprep.mubr.f32.mxu0 0.0
    %v3151 = vand.u32 %v2390, 4294901760
    %3152 = vmatmul.mubr.f32.gmra.mrb[0].mxu0 %v3151
    %v3153 = vpop.f32.mrb[0].mxu0
    %v3154 = vadd.f32 %v3037, %v3153
    %v3155 = vpop.f32.mrb[0].mxu0
    %3156 = vmatprep.mubr.f32.mxu0 0.0
    %v3157 = vand.u32 %v2393, 4294901760
    %3158 = vmatmul.mubr.f32.gmra.mrb[0].mxu0 %v3157
    %v3159 = vpop.f32.mrb[0].mxu0
    %v3160 = vadd.f32 %v3043, %v3159
    %v3161 = vpop.f32.mrb[0].mxu0
    %3162 = vmatprep.mubr.f32.mxu0 0.0
    %v3163 = vand.u32 %v2396, 4294901760
    %3164 = vmatmul.mubr.f32.gmra.mrb[0].mxu0 %v3163
    %v3165 = vpop.f32.mrb[0].mxu0
    %v3166 = vadd.f32 %v3049, %v3165
    %v3167 = vpop.f32.mrb[0].mxu0
    %3168 = vmatprep.mubr.f32.mxu0 0.0
    %v3169 = vand.u32 %v2399, 4294901760
    %3170 = vmatmul.mubr.f32.gmra.mrb[0].mxu0 %v3169
    %v3171 = vpop.f32.mrb[0].mxu0
    %v3172 = vadd.f32 %v3055, %v3171
    %v3173 = vpop.f32.mrb[0].mxu0
    %3174 = vmatprep.mubr.f32.mxu0 0.0
    %v3175 = vand.u32 %v2402, 4294901760
    %3176 = vmatmul.mubr.f32.gmra.mrb[0].mxu0 %v3175
    %v3177 = vpop.f32.mrb[0].mxu0
    %v3178 = vadd.f32 %v3061, %v3177
    %v3179 = vpop.f32.mrb[0].mxu0
    %3180 = vmatprep.mubr.f32.mxu0 0.0
    %v3181 = vand.u32 %v2405, 4294901760
    %3182 = vmatmul.mubr.f32.gmra.mrb[0].mxu0 %v3181
    %v3183 = vpop.f32.mrb[0].mxu0
    %v3184 = vadd.f32 %v3067, %v3183
    %v3185 = vpop.f32.mrb[0].mxu0
    %3186 = vmatprep.mubr.f32.mxu0 0.0
    %v3187 = vand.u32 %v2408, 4294901760
    %3188 = vmatmul.mubr.f32.gmra.mrb[0].mxu0 %v3187
    %v3189 = vpop.f32.mrb[0].mxu0
    %v3190 = vadd.f32 %v3073, %v3189
    %v3191 = vpop.f32.mrb[0].mxu0
    %3192 = vmatprep.mubr.f32.mxu0 0.0
    %v3193 = vand.u32 %v2411, 4294901760
    %3194 = vmatmul.mubr.f32.gmra.mrb[0].mxu0 %v3193
    %v3195 = vpop.f32.mrb[0].mxu0
    %v3196 = vadd.f32 %v3079, %v3195
    %v3197 = vpop.f32.mrb[0].mxu0
    %3198 = vdwg.mxu0
    %v3199 = vmul.f32 %v530, %v1480
    %v3200 = vmul.f32 %v3199, %v1024
    %3201 = vadd.xlane.f32.xlu0 %v3200
    %v3202 = vpop.xlane.xlu0 %3201
    %v3203 = vmul.f32 %v2296, %v3154
    %v3204 = vmul.f32 %v2302, %v3160
    %v3205 = vmul.f32 %v2308, %v3166
    %v3206 = vmul.f32 %v2314, %v3172
    %v3207 = vmul.f32 %v2320, %v3178
    %v3208 = vmul.f32 %v2326, %v3184
    %v3209 = vmul.f32 %v2332, %v3190
    %v3210 = vmul.f32 %v2338, %v3196
    %v3212 = vcombine.high %v1480, %v1480
    %v3214 = vunpack.c.l.s4 1966171168
    %v3215 = vunpack.c.0.s8 %v3214
    %v3216 = vlaneseq
    %v3217 = vshrl.u32 %v3216, 7
    %v3218 = vsub.s32 %v3215, %v3217
    %v3219 = vrot.slane %v1480, %v3218
    %v3221 = vunpack.c.l.s4 1966171168
    %v3222 = vunpack.c.0.s8 %v3221
    %v3223 = vlaneseq
    %v3224 = vshrl.u32 %v3223, 7
    %v3225 = vsub.s32 %v3222, %v3224
    %v3226 = vrot.slane %v3212, %v3225
    %v3227 = vcombine.high %v3219, %v3219
    %v3228 = vcombine.high %v3226, %v3226
    %v3230 = vunpack.c.l.s4 1966171168
    %v3231 = vunpack.c.0.s8 %v3230
    %v3232 = vlaneseq
    %v3233 = vshrl.u32 %v3232, 7
    %v3234 = vsub.s32 %v3231, %v3233
    %v3235 = vrot.slane %v3219, %v3234
    %v3237 = vunpack.c.l.s4 1966171168
    %v3238 = vunpack.c.0.s8 %v3237
    %v3239 = vlaneseq
    %v3240 = vshrl.u32 %v3239, 7
    %v3241 = vsub.s32 %v3238, %v3240
    %v3242 = vrot.slane %v3226, %v3241
    %v3244 = vunpack.c.l.s4 1966171168
    %v3245 = vunpack.c.0.s8 %v3244
    %v3246 = vlaneseq
    %v3247 = vshrl.u32 %v3246, 7
    %v3248 = vsub.s32 %v3245, %v3247
    %v3249 = vrot.slane %v3227, %v3248
    %v3251 = vunpack.c.l.s4 1966171168
    %v3252 = vunpack.c.0.s8 %v3251
    %v3253 = vlaneseq
    %v3254 = vshrl.u32 %v3253, 7
    %v3255 = vsub.s32 %v3252, %v3254
    %v3256 = vrot.slane %v3228, %v3255
    %v3257 = vcombine.high %v3235, %v3235
    %v3258 = vcombine.high %v3242, %v3242
    %v3259 = vcombine.high %v3249, %v3249
    %v3260 = vcombine.high %v3256, %v3256
    %v3261 = vlaneseq
    %v3262 = vshrl.u32 %v3261, 7
    %v3263 = vsub.s32 0, %v3262
    %v3264 = vrot.slane %v3235, %v3263
    %v3265 = vlaneseq
    %v3266 = vshrl.u32 %v3265, 7
    %v3267 = vsub.s32 0, %v3266
    %v3268 = vrot.slane %v3249, %v3267
    %v3269 = vlaneseq
    %v3270 = vshrl.u32 %v3269, 7
    %v3271 = vsub.s32 0, %v3270
    %v3272 = vrot.slane %v3257, %v3271
    %v3273 = vlaneseq
    %v3274 = vshrl.u32 %v3273, 7
    %v3275 = vsub.s32 0, %v3274
    %v3276 = vrot.slane %v3259, %v3275
    %v3277 = vlaneseq
    %v3278 = vshrl.u32 %v3277, 7
    %v3279 = vsub.s32 0, %v3278
    %v3280 = vrot.slane %v3242, %v3279
    %v3281 = vlaneseq
    %v3282 = vshrl.u32 %v3281, 7
    %v3283 = vsub.s32 0, %v3282
    %v3284 = vrot.slane %v3256, %v3283
    %v3285 = vlaneseq
    %v3286 = vshrl.u32 %v3285, 7
    %v3287 = vsub.s32 0, %v3286
    %v3288 = vrot.slane %v3258, %v3287
    %v3289 = vlaneseq
    %v3290 = vshrl.u32 %v3289, 7
    %v3291 = vsub.s32 0, %v3290
    %v3292 = vrot.slane %v3260, %v3291
    %v3301 = vmul.f32 %v3203, %v3264
    %v3302 = vmul.f32 %v3204, %v3268
    %v3303 = vmul.f32 %v3205, %v3272
    %v3304 = vmul.f32 %v3206, %v3276
    %v3305 = vmul.f32 %v3207, %v3280
    %v3306 = vmul.f32 %v3208, %v3284
    %v3307 = vmul.f32 %v3209, %v3288
    %v3308 = vmul.f32 %v3210, %v3292
    %3309 = vadd.xlane.f32.xlu0 %v3301
    %v3310 = vpop.xlane.xlu0 %3309
    %3311 = vadd.xlane.f32.xlu0 %v3302
    %v3312 = vpop.xlane.xlu0 %3311
    %3313 = vadd.xlane.f32.xlu0 %v3303
    %v3314 = vpop.xlane.xlu0 %3313
    %3315 = vadd.xlane.f32.xlu0 %v3304
    %v3316 = vpop.xlane.xlu0 %3315
    %3317 = vadd.xlane.f32.xlu0 %v3305
    %v3318 = vpop.xlane.xlu0 %3317
    %3319 = vadd.xlane.f32.xlu0 %v3306
    %v3320 = vpop.xlane.xlu0 %3319
    %3321 = vadd.xlane.f32.xlu0 %v3307
    %v3322 = vpop.xlane.xlu0 %3321
    %3323 = vadd.xlane.f32.xlu0 %v3308
    %v3324 = vpop.xlane.xlu0 %3323
    %v3325 = vsub.f32 1.0, %v3202
    %v3334 = vlaneseq
    %v3335 = vshrl.u32 %v3334, 7
    %v3336 = vsub.s32 %v37, %v3335
    %v3337 = vrot.slane %v3310, %v3336
    %v3338 = vlaneseq
    %v3339 = vshrl.u32 %v3338, 7
    %v3340 = vsub.s32 %v37, %v3339
    %v3341 = vrot.slane %v3312, %v3340
    %v3342 = vlaneseq
    %v3343 = vshrl.u32 %v3342, 7
    %v3344 = vsub.s32 %v37, %v3343
    %v3345 = vrot.slane %v3314, %v3344
    %v3346 = vlaneseq
    %v3347 = vshrl.u32 %v3346, 7
    %v3348 = vsub.s32 %v37, %v3347
    %v3349 = vrot.slane %v3316, %v3348
    %v3350 = vlaneseq
    %v3351 = vshrl.u32 %v3350, 7
    %v3352 = vsub.s32 %v37, %v3351
    %v3353 = vrot.slane %v3318, %v3352
    %v3354 = vlaneseq
    %v3355 = vshrl.u32 %v3354, 7
    %v3356 = vsub.s32 %v37, %v3355
    %v3357 = vrot.slane %v3320, %v3356
    %v3358 = vlaneseq
    %v3359 = vshrl.u32 %v3358, 7
    %v3360 = vsub.s32 %v37, %v3359
    %v3361 = vrot.slane %v3322, %v3360
    %v3362 = vlaneseq
    %v3363 = vshrl.u32 %v3362, 7
    %v3364 = vsub.s32 %v37, %v3363
    %v3365 = vrot.slane %v3324, %v3364
    %vm3366 = vcmask 1041409
    %v3367 = vsel %vm3366, %v3341, %v3337
    %vm3368 = vcmask 1042434
    %v3369 = vsel %vm3368, %v3345, %v3367
    %vm3370 = vcmask 1043459
    %v3371 = vsel %vm3370, %v3349, %v3369
    %vm3372 = vcmask 1044484
    %v3373 = vsel %vm3372, %v3353, %v3371
    %vm3374 = vcmask 1045509
    %v3375 = vsel %vm3374, %v3357, %v3373
    %vm3376 = vcmask 1046534
    %v3377 = vsel %vm3376, %v3361, %v3375
    %vm3378 = vcmask 1047559
    %v3379 = vsel %vm3378, %v3365, %v3377
    %v3381 = vadd.f32 %v3325, %v3379
    %v3382 = vmax.f32 %v3381, 0.0
    %v3383 = vsel %vm1033, %v3382, 0.0
    %3384 = vadd.xlane.f32.xlu0 %v3383
    %v3385 = vpop.xlane.xlu0 %3384
    %v3386 = vrot.slane %v3385, 4
    %v3387 = vadd.f32 %v3385, %v3386
    %v3388 = vrot.slane %v3387, 2
    %v3389 = vadd.f32 %v3387, %v3388
    %v3390 = vrot.slane %v3389, 1
    %v3391 = vadd.f32 %v3389, %v3390
    %s3392 = vtos %v3391
    %v3393 = vmul.f32 %v530, %v530
    %3394 = vadd.xlane.f32.xlu0 %v3393
    %v3395 = vpop.xlane.xlu0 %3394
    %v3396 = vrot.slane %v3395, 4
    %v3397 = vadd.f32 %v3395, %v3396
    %v3398 = vrot.slane %v3397, 2
    %v3399 = vadd.f32 %v3397, %v3398
    %v3400 = vrot.slane %v3399, 1
    %v3401 = vadd.f32 %v3399, %v3400
    %s3402 = vtos %v3401
    %v3403 = vmul.f32 %v1024, %v1024
    %3404 = vadd.xlane.f32.xlu0 %v3403
    %v3405 = vpop.xlane.xlu0 %3404
    %v3406 = vrot.slane %v3405, 4
    %v3407 = vadd.f32 %v3405, %v3406
    %v3408 = vrot.slane %v3407, 2
    %v3409 = vadd.f32 %v3407, %v3408
    %v3410 = vrot.slane %v3409, 1
    %v3411 = vadd.f32 %v3409, %v3410
    %s3412 = vtos %v3411
    %s3413 = sadd.f32 %s3402, %s3412
    %v3414 = vmul.f32 %v1480, %v1480
    %3415 = vadd.xlane.f32.xlu0 %v3414
    %v3416 = vpop.xlane.xlu0 %3415
    %v3417 = vrot.slane %v3416, 4
    %v3418 = vadd.f32 %v3416, %v3417
    %v3419 = vrot.slane %v3418, 2
    %v3420 = vadd.f32 %v3418, %v3419
    %v3421 = vrot.slane %v3420, 1
    %v3422 = vadd.f32 %v3420, %v3421
    %s3423 = vtos %v3422
    %s3424 = sadd.f32 %s3413, %s3423
    %s3425 = smul.f32 %s3392, 0.015625
    %s3426 = smul.f32 %s3424, 3.2552084e-06
    %s3427 = sadd.f32 %s3425, %s3426
    %s3428 = scalar_lea.smem [#allocation2], 0
    %3429 = sst [smem:[%s3428]] %s3427
    // Predicated region
    $region22: #{forward.1} parent=1 // pred_check
      _
    $region23: #{forward.1} parent=1 // pred_check_branch
      %3431 = sbr.rel (0) target = $region25
    $region24: #{forward.1} parent=1 // pred_region
      %s3433 = ssub.s32 16, 16
      %3434 = vsyncadd [#allocation3], %s3433
      %3437 = dma.smem_to_hbm [#allocation2], 16, %s5, [#allocation3]
    $region25: #{forward.1} parent=1 // pred_fallthru
      _
    // Predicated region
    $region26: #{forward.1} parent=1 // pred_check
      _
    $region27: #{forward.1} parent=1 // pred_check_branch
      %3439 = sbr.rel (0) target = $region29
    $region28: #{forward.1} parent=1 // pred_region
      %3440 = dma.done [#allocation3], 16
    $region29: #{forward.1} parent=1 // pred_fallthru
      _
    %3441 = sfence
    %3442 = vsyncpa [#allocation3], 1

</llo_original>
